<compile_context>
chip_gen: v6e
topology: v6e:2x2x1
jax: 0.10.0
libtpu: 0.0.40
codegen_flags: <defaults>
</compile_context>

<pallas_src>
import functools

import jax
import jax.numpy as jnp
from jax.experimental import pallas as pl
from jax.experimental.pallas import tpu as pltpu


def _sigmoid(z):
    # numerically stable logistic; tanh runs on the EUP slot
    return 0.5 * (jnp.tanh(0.5 * z) + 1.0)


def _relu(z):
    return jnp.maximum(z, 0.0)


def _head_kernel(
    x_ref,                                   # [TB, C, THW] NCHW feature block (HW on lanes)
    ws1_ref, bs1_ref, ws2_ref, bs2_ref,      # spatial attention (1x1 convs as [in, out])
    wc1_ref, bc1_ref, wc2_ref, bc2_ref,      # channel attention (Linear as [in, out])
    w1_ref, b1_ref, w2_ref, b2_ref,          # classifier
    w3_ref, b3_ref,                          # classifier head (padded to lane-dense NCp)
    out_ref,                                 # [TB, 1, NCp]
    acc_ref,                                 # [TB, C] f32 running sum over H*W
    *, inv_hw: float,
):
    f32 = jnp.float32
    j = pl.program_id(1)

    @pl.when(j == 0)
    def _():
        acc_ref[...] = jnp.zeros_like(acc_ref)

    # The only full-tensor work: streaming f32 sum of this H*W tile (XLU lane reduce).
    acc_ref[...] += jnp.sum(x_ref[...].astype(f32), axis=-1)

    @pl.when(j == pl.num_programs(1) - 1)
    def _():
        p0 = acc_ref[...] * inv_hw                                     # mean over HW, [TB, C]

        # ---- spatial attention (pools first in torch -> per-channel scalar, commutes)
        h = _relu(jnp.dot(p0, ws1_ref[...], preferred_element_type=f32) + bs1_ref[...])
        s_att = _sigmoid(jnp.dot(h, ws2_ref[...], preferred_element_type=f32) + bs2_ref[...])
        p1 = p0 * s_att                                                # == mean(x * s_att)

        # ---- channel attention
        h = _relu(jnp.dot(p1, wc1_ref[...], preferred_element_type=f32) + bc1_ref[...])
        c_att = _sigmoid(jnp.dot(h, wc2_ref[...], preferred_element_type=f32) + bc2_ref[...])
        pooled = p1 * c_att                                            # == global_pool(x*s*c)

        # ---- classifier (Dropout layers are identity in eval mode)
        h = _relu(jnp.dot(pooled, w1_ref[...], preferred_element_type=f32) + b1_ref[...])
        h = _relu(jnp.dot(h, w2_ref[...], preferred_element_type=f32) + b2_ref[...])
        logits = jnp.dot(h, w3_ref[...], preferred_element_type=f32) + b3_ref[...]
        out_ref[...] = logits[:, None, :].astype(out_ref.dtype)


def _vmem_capacity_bytes():
    try:
        return int(pltpu.get_tpu_info().vmem_capacity_bytes)
    except Exception:
        return 64 << 20  # conservative (v7x per-TensorCore physical VMEM)


def _largest_divisor(n, cap):
    cap = max(1, min(cap, n))
    for t in range(cap, 0, -1):
        if n % t == 0:
            return t
    return 1


def _pick_hw_tile(hw, cap_elems):
    """HW tile for the lane axis: full extent if it fits, else a multiple-of-128 divisor.
    Falls back to the full extent (always legal) if no lane-aligned divisor exists."""
    if hw <= cap_elems:
        return hw
    t = (cap_elems // 128) * 128
    while t >= 128:
        if hw % t == 0:
            return t
        t -= 128
    return hw


def _run_head(x, weight_args, *, tb, thw, ncp, hw, vmem_limit, cost, single_buffer_weights):
    B, C, HW = x.shape
    wkw = {}
    if single_buffer_weights and hasattr(pl, "Buffered"):
        # grid-invariant weights: no double buffering (frees VMEM + startup DMAs)
        wkw = {"pipeline_mode": pl.Buffered(1)}

    in_specs = [pl.BlockSpec((tb, C, thw), lambda i, j: (i, 0, j))]
    in_specs += [
        pl.BlockSpec(w.shape, lambda i, j, _nd=len(w.shape): (0,) * _nd, **wkw)
        for w in weight_args
    ]
    out_spec = pl.BlockSpec((tb, 1, ncp), lambda i, j: (i, 0, 0))

    return pl.pallas_call(
        functools.partial(_head_kernel, inv_hw=1.0 / hw),
        out_shape=jax.ShapeDtypeStruct((B, 1, ncp), jnp.float32),
        grid_spec=pltpu.PrefetchScalarGridSpec(
            num_scalar_prefetch=0,
            grid=(B // tb, HW // thw),
            in_specs=in_specs,
            out_specs=out_spec,
            scratch_shapes=[pltpu.VMEM((tb, C), jnp.float32)],
        ),
        compiler_params=pltpu.CompilerParams(
            dimension_semantics=("parallel", "arbitrary"),   # batch across TCs; HW = reduction
            vmem_limit_bytes=int(vmem_limit),
        ),
        cost_estimate=cost,
    )(x, *weight_args)


def efficientnet_attention_head(x_feat, params, *, batch_tile=1024):
    """x_feat: [B, C, H, W] backbone final feature map (f32 or bf16) -> logits [B, num_classes]."""
    B, C, H, W = x_feat.shape
    HW = H * W
    nc = params["w3"].shape[1]

    # Free view of the contiguous NCHW layout — no transpose/cast HBM pre-pass.
    x = x_feat.reshape(B, C, HW)
    itemsize = x.dtype.itemsize

    # Lane-dense output: pad num_classes to a multiple of 128, slice afterwards.
    ncp = ((nc + 127) // 128) * 128
    w3 = jnp.zeros((params["w3"].shape[0], ncp), params["w3"].dtype).at[:, :nc].set(params["w3"])
    b3 = jnp.zeros((1, ncp), params["b3"].dtype).at[:, :nc].set(params["b3"])
    weight_args = (
        params["ws1"], params["bs1"], params["ws2"], params["bs2"],
        params["wc1"], params["bc1"], params["wc2"], params["bc2"],
        params["w1"], params["b1"], params["w2"], params["b2"],
        w3, b3,
    )

    # VMEM budgeting: ~16 MiB per double-buffered x block, explicit vmem_limit_bytes.
    vmem_cap = _vmem_capacity_bytes()
    vmem_limit = min(vmem_cap * 3 // 4, 96 << 20)
    x_buf_budget = max(1 << 20, min(16 << 20, (vmem_limit - (3 << 20)) // 2))

    thw = _pick_hw_tile(HW, max(128, x_buf_budget // max(1, C * itemsize)))
    tb_cap = min(batch_tile, max(1, x_buf_budget // max(1, C * thw * itemsize)))
    if B >= 2:
        tb_cap = min(tb_cap, B // 2)   # grid[0] >= 2 so both v7x TensorCores get work
    tb = _largest_divisor(B, tb_cap)

    weight_bytes = sum(int(w.size) * w.dtype.itemsize for w in weight_args)
    head_flops = 2 * (C * (C // 8) + (C // 8) * C + C * (C // 4) + (C // 4) * C
                      + C * 512 + 512 * 256 + 256 * ncp)
    cost = pl.CostEstimate(
        flops=int(B * (HW * C + head_flops)),
        transcendentals=int(B * 2 * C),
        bytes_accessed=int(B * C * HW * itemsize + weight_bytes + B * ncp * 4),
    )

    kwargs = dict(tb=tb, thw=thw, ncp=ncp, hw=HW, vmem_limit=vmem_limit, cost=cost)
    try:
        out = _run_head(x, weight_args, single_buffer_weights=True, **kwargs)
    except Exception:
        out = _run_head(x, weight_args, single_buffer_weights=False, **kwargs)
    return out[:, 0, :nc]


def make_params(key, feature_dim=32, num_classes=2):
    ks = jax.random.split(key, 14)
    fd8, fd4 = feature_dim // 8, feature_dim // 4

    def w(k, shape, scale=0.1):
        return (scale * jax.random.normal(k, shape)).astype(jnp.float32)

    return {
        # spatial attention (1x1 convs stored as [in, out] matrices)
        "ws1": w(ks[0], (feature_dim, fd8)), "bs1": w(ks[1], (1, fd8)),
        "ws2": w(ks[2], (fd8, feature_dim)), "bs2": w(ks[3], (1, feature_dim)),
        # channel attention (Linear layers as [in, out])
        "wc1": w(ks[4], (feature_dim, fd4)), "bc1": w(ks[5], (1, fd4)),
        "wc2": w(ks[6], (fd4, feature_dim)), "bc2": w(ks[7], (1, feature_dim)),
        # classifier
        "w1": w(ks[8], (feature_dim, 512)), "b1": w(ks[9], (1, 512)),
        "w2": w(ks[10], (512, 256)),        "b2": w(ks[11], (1, 256)),
        "w3": w(ks[12], (256, num_classes)), "b3": w(ks[13], (1, num_classes)),
    }


def reference_forward(x_feat, p):
    """Pure-JAX transcription of the literal (unfused) PyTorch forward, for validation."""
    x = x_feat.astype(jnp.float32)                       # [B, C, H, W]
    p0 = x.mean(axis=(2, 3))                             # AdaptiveAvgPool2d(1)
    s_att = jax.nn.sigmoid(_relu(p0 @ p["ws1"] + p["bs1"]) @ p["ws2"] + p["bs2"])
    x = x * s_att[:, :, None, None]                      # x * spatial_att
    p1 = x.mean(axis=(2, 3))
    c_att = jax.nn.sigmoid(_relu(p1 @ p["wc1"] + p["bc1"]) @ p["wc2"] + p["bc2"])
    x = x * c_att[:, :, None, None]                      # x * channel_att
    pooled = x.mean(axis=(2, 3))                         # global_pool + flatten
    h = _relu(pooled @ p["w1"] + p["b1"])
    h = _relu(h @ p["w2"] + p["b2"])
    return h @ p["w3"] + p["b3"]


if __name__ == "__main__":
    key = jax.random.PRNGKey(0)
    k_x, k_p = jax.random.split(key)

    B, C, H, W = 2, 32, 8, 8   # small synthetic backbone feature map (feature_dim = 32)
    x_feat = jax.random.normal(k_x, (B, C, H, W), dtype=jnp.float32)
    params = make_params(k_p, feature_dim=C, num_classes=2)

    ref = reference_forward(x_feat, params)

    # f32 stream
    out = jax.block_until_ready(efficientnet_attention_head(x_feat, params))
    assert out.shape == (B, 2)
    assert jnp.allclose(out, ref, atol=1e-4, rtol=1e-4), "mismatch vs pure-JAX reference (f32)"

    # bf16 stream (cast folded into the producer in real use; f32 accumulation in-kernel)
    out_bf16 = jax.block_until_ready(
        efficientnet_attention_head(x_feat.astype(jnp.bfloat16), params))
    assert out_bf16.shape == (B, 2)
    assert bool(jnp.all(jnp.isfinite(out_bf16)))
    assert jnp.allclose(out_bf16, ref, atol=1e-1, rtol=1e-1), "mismatch vs reference (bf16 stream)"

    print("KERNEL_OK")
</pallas_src>

<mosaic_0001>
module attributes {stable_mosaic.version = 11 : i64} {
  func.func @_head_kernel(%arg0: i32, %arg1: i32, %arg2: memref<1x32x64xf32, #tpu.memory_space<vmem>>, %arg3: memref<32x4xf32, #tpu.memory_space<vmem>>, %arg4: memref<1x4xf32, #tpu.memory_space<vmem>>, %arg5: memref<4x32xf32, #tpu.memory_space<vmem>>, %arg6: memref<1x32xf32, #tpu.memory_space<vmem>>, %arg7: memref<32x8xf32, #tpu.memory_space<vmem>>, %arg8: memref<1x8xf32, #tpu.memory_space<vmem>>, %arg9: memref<8x32xf32, #tpu.memory_space<vmem>>, %arg10: memref<1x32xf32, #tpu.memory_space<vmem>>, %arg11: memref<32x512xf32, #tpu.memory_space<vmem>>, %arg12: memref<1x512xf32, #tpu.memory_space<vmem>>, %arg13: memref<512x256xf32, #tpu.memory_space<vmem>>, %arg14: memref<1x256xf32, #tpu.memory_space<vmem>>, %arg15: memref<256x128xf32, #tpu.memory_space<vmem>>, %arg16: memref<1x128xf32, #tpu.memory_space<vmem>>, %arg17: memref<1x1x128xf32, #tpu.memory_space<vmem>>, %arg18: memref<1x32xf32, #tpu.memory_space<vmem>>) attributes {dimension_semantics = [#tpu.dimension_semantics<parallel>, #tpu.dimension_semantics<arbitrary>], iteration_bounds = array<i64: 2, 1>, scalar_prefetch = 0 : i64, scratch_operands = 1 : i64, tpu.core_type = #tpu.core_type<tc>, window_params = [{transform_indices = @transform_0, window_bounds = array<i64: 1, 32, 64>}, {pipeline_mode = #tpu.pipeline_mode<synchronous>, transform_indices = @transform_1, window_bounds = array<i64: 32, 4>}, {pipeline_mode = #tpu.pipeline_mode<synchronous>, transform_indices = @transform_2, window_bounds = array<i64: 1, 4>}, {pipeline_mode = #tpu.pipeline_mode<synchronous>, transform_indices = @transform_3, window_bounds = array<i64: 4, 32>}, {pipeline_mode = #tpu.pipeline_mode<synchronous>, transform_indices = @transform_4, window_bounds = array<i64: 1, 32>}, {pipeline_mode = #tpu.pipeline_mode<synchronous>, transform_indices = @transform_5, window_bounds = array<i64: 32, 8>}, {pipeline_mode = #tpu.pipeline_mode<synchronous>, transform_indices = @transform_6, window_bounds = array<i64: 1, 8>}, {pipeline_mode = #tpu.pipeline_mode<synchronous>, transform_indices = @transform_7, window_bounds = array<i64: 8, 32>}, {pipeline_mode = #tpu.pipeline_mode<synchronous>, transform_indices = @transform_8, window_bounds = array<i64: 1, 32>}, {pipeline_mode = #tpu.pipeline_mode<synchronous>, transform_indices = @transform_9, window_bounds = array<i64: 32, 512>}, {pipeline_mode = #tpu.pipeline_mode<synchronous>, transform_indices = @transform_10, window_bounds = array<i64: 1, 512>}, {pipeline_mode = #tpu.pipeline_mode<synchronous>, transform_indices = @transform_11, window_bounds = array<i64: 512, 256>}, {pipeline_mode = #tpu.pipeline_mode<synchronous>, transform_indices = @transform_12, window_bounds = array<i64: 1, 256>}, {pipeline_mode = #tpu.pipeline_mode<synchronous>, transform_indices = @transform_13, window_bounds = array<i64: 256, 128>}, {pipeline_mode = #tpu.pipeline_mode<synchronous>, transform_indices = @transform_14, window_bounds = array<i64: 1, 128>}, {transform_indices = @transform_15, window_bounds = array<i64: 1, 1, 128>}]} {
    %c0_i32 = arith.constant 0 : i32
    %0 = arith.cmpi eq, %arg1, %c0_i32 : i32
    %1 = arith.extui %0 : i1 to i32
    %c0_i32_0 = arith.constant 0 : i32
    %2 = arith.cmpi ne, %1, %c0_i32_0 : i32
    scf.if %2 {
      %cst_9 = arith.constant 0.000000e+00 : f32
      %11 = vector.broadcast %cst_9 : f32 to vector<1x32xf32>
      %c0_10 = arith.constant 0 : index
      %c0_11 = arith.constant 0 : index
      %12 = vector.load %arg18[%c0_10, %c0_11] : memref<1x32xf32, #tpu.memory_space<vmem>>, vector<1x32xf32>
      tpu.vector_store %arg18[%c0_10, %c0_11], %11 {strides = array<i32>} : memref<1x32xf32, #tpu.memory_space<vmem>>, vector<1x32xf32>,
    } else {
    }
    %c0 = arith.constant 0 : index
    %c0_1 = arith.constant 0 : index
    %3 = vector.load %arg18[%c0, %c0_1] : memref<1x32xf32, #tpu.memory_space<vmem>>, vector<1x32xf32>
    %c0_2 = arith.constant 0 : index
    %c0_3 = arith.constant 0 : index
    %c0_4 = arith.constant 0 : index
    %4 = vector.load %arg2[%c0_2, %c0_3, %c0_4] : memref<1x32x64xf32, #tpu.memory_space<vmem>>, vector<1x32x64xf32>
    %cst = arith.constant dense<0.000000e+00> : vector<1x32xf32>
    %5 = vector.multi_reduction <add>, %4, %cst [2] : vector<1x32x64xf32> to vector<1x32xf32>
    %6 = arith.addf %3, %5 : vector<1x32xf32>
    %c0_5 = arith.constant 0 : index
    %c0_6 = arith.constant 0 : index
    %7 = vector.load %arg18[%c0_5, %c0_6] : memref<1x32xf32, #tpu.memory_space<vmem>>, vector<1x32xf32>
    tpu.vector_store %arg18[%c0_5, %c0_6], %6 {strides = array<i32>} : memref<1x32xf32, #tpu.memory_space<vmem>>, vector<1x32xf32>,
    %c0_i32_7 = arith.constant 0 : i32
    %8 = arith.cmpi eq, %arg1, %c0_i32_7 : i32
    %9 = arith.extui %8 : i1 to i32
    %c0_i32_8 = arith.constant 0 : i32
    %10 = arith.cmpi ne, %9, %c0_i32_8 : i32
    scf.if %10 {
      %c0_9 = arith.constant 0 : index
      %c0_10 = arith.constant 0 : index
      %11 = vector.load %arg18[%c0_9, %c0_10] : memref<1x32xf32, #tpu.memory_space<vmem>>, vector<1x32xf32>
      %cst_11 = arith.constant 1.562500e-02 : f32
      %12 = vector.broadcast %cst_11 : f32 to vector<1x32xf32>
      %13 = arith.mulf %11, %12 : vector<1x32xf32>
      %c0_12 = arith.constant 0 : index
      %c0_13 = arith.constant 0 : index
      %14 = vector.load %arg3[%c0_12, %c0_13] : memref<32x4xf32, #tpu.memory_space<vmem>>, vector<32x4xf32>
      %cst_14 = arith.constant dense<0.000000e+00> : vector<1x4xf32>
      %15 = tpu.matmul %13, %14, %cst_14 {dimension_numbers = #tpu.dot_dimension_numbers<[1], [0], [0], [1], [0, 0, 1, 1], [], []>} : vector<1x32xf32>, vector<32x4xf32>, vector<1x4xf32> -> vector<1x4xf32>
      %c0_15 = arith.constant 0 : index
      %c0_16 = arith.constant 0 : index
      %16 = vector.load %arg4[%c0_15, %c0_16] : memref<1x4xf32, #tpu.memory_space<vmem>>, vector<1x4xf32>
      %17 = arith.addf %15, %16 : vector<1x4xf32>
      %cst_17 = arith.constant 0.000000e+00 : f32
      %18 = vector.broadcast %cst_17 : f32 to vector<1x4xf32>
      %19 = arith.maximumf %17, %18 : vector<1x4xf32>
      %c0_18 = arith.constant 0 : index
      %c0_19 = arith.constant 0 : index
      %20 = vector.load %arg5[%c0_18, %c0_19] : memref<4x32xf32, #tpu.memory_space<vmem>>, vector<4x32xf32>
      %cst_20 = arith.constant dense<0.000000e+00> : vector<1x32xf32>
      %21 = tpu.matmul %19, %20, %cst_20 {dimension_numbers = #tpu.dot_dimension_numbers<[1], [0], [0], [1], [0, 0, 1, 1], [], []>} : vector<1x4xf32>, vector<4x32xf32>, vector<1x32xf32> -> vector<1x32xf32>
      %c0_21 = arith.constant 0 : index
      %c0_22 = arith.constant 0 : index
      %22 = vector.load %arg6[%c0_21, %c0_22] : memref<1x32xf32, #tpu.memory_space<vmem>>, vector<1x32xf32>
      %23 = arith.addf %21, %22 : vector<1x32xf32>
      %cst_23 = arith.constant 5.000000e-01 : f32
      %24 = vector.broadcast %cst_23 : f32 to vector<1x32xf32>
      %25 = arith.mulf %24, %23 : vector<1x32xf32>
      %26 = math.tanh %25 : vector<1x32xf32>
      %cst_24 = arith.constant 1.000000e+00 : f32
      %27 = vector.broadcast %cst_24 : f32 to vector<1x32xf32>
      %28 = arith.addf %26, %27 : vector<1x32xf32>
      %cst_25 = arith.constant 5.000000e-01 : f32
      %29 = vector.broadcast %cst_25 : f32 to vector<1x32xf32>
      %30 = arith.mulf %29, %28 : vector<1x32xf32>
      %31 = arith.mulf %13, %30 : vector<1x32xf32>
      %c0_26 = arith.constant 0 : index
      %c0_27 = arith.constant 0 : index
      %32 = vector.load %arg7[%c0_26, %c0_27] : memref<32x8xf32, #tpu.memory_space<vmem>>, vector<32x8xf32>
      %cst_28 = arith.constant dense<0.000000e+00> : vector<1x8xf32>
      %33 = tpu.matmul %31, %32, %cst_28 {dimension_numbers = #tpu.dot_dimension_numbers<[1], [0], [0], [1], [0, 0, 1, 1], [], []>} : vector<1x32xf32>, vector<32x8xf32>, vector<1x8xf32> -> vector<1x8xf32>
      %c0_29 = arith.constant 0 : index
      %c0_30 = arith.constant 0 : index
      %34 = vector.load %arg8[%c0_29, %c0_30] : memref<1x8xf32, #tpu.memory_space<vmem>>, vector<1x8xf32>
      %35 = arith.addf %33, %34 : vector<1x8xf32>
      %cst_31 = arith.constant 0.000000e+00 : f32
      %36 = vector.broadcast %cst_31 : f32 to vector<1x8xf32>
      %37 = arith.maximumf %35, %36 : vector<1x8xf32>
      %c0_32 = arith.constant 0 : index
      %c0_33 = arith.constant 0 : index
      %38 = vector.load %arg9[%c0_32, %c0_33] : memref<8x32xf32, #tpu.memory_space<vmem>>, vector<8x32xf32>
      %cst_34 = arith.constant dense<0.000000e+00> : vector<1x32xf32>
      %39 = tpu.matmul %37, %38, %cst_34 {dimension_numbers = #tpu.dot_dimension_numbers<[1], [0], [0], [1], [0, 0, 1, 1], [], []>} : vector<1x8xf32>, vector<8x32xf32>, vector<1x32xf32> -> vector<1x32xf32>
      %c0_35 = arith.constant 0 : index
      %c0_36 = arith.constant 0 : index
      %40 = vector.load %arg10[%c0_35, %c0_36] : memref<1x32xf32, #tpu.memory_space<vmem>>, vector<1x32xf32>
      %41 = arith.addf %39, %40 : vector<1x32xf32>
      %cst_37 = arith.constant 5.000000e-01 : f32
      %42 = vector.broadcast %cst_37 : f32 to vector<1x32xf32>
      %43 = arith.mulf %42, %41 : vector<1x32xf32>
      %44 = math.tanh %43 : vector<1x32xf32>
      %cst_38 = arith.constant 1.000000e+00 : f32
      %45 = vector.broadcast %cst_38 : f32 to vector<1x32xf32>
      %46 = arith.addf %44, %45 : vector<1x32xf32>
      %cst_39 = arith.constant 5.000000e-01 : f32
      %47 = vector.broadcast %cst_39 : f32 to vector<1x32xf32>
      %48 = arith.mulf %47, %46 : vector<1x32xf32>
      %49 = arith.mulf %31, %48 : vector<1x32xf32>
      %c0_40 = arith.constant 0 : index
      %c0_41 = arith.constant 0 : index
      %50 = vector.load %arg11[%c0_40, %c0_41] : memref<32x512xf32, #tpu.memory_space<vmem>>, vector<32x512xf32>
      %cst_42 = arith.constant dense<0.000000e+00> : vector<1x512xf32>
      %51 = tpu.matmul %49, %50, %cst_42 {dimension_numbers = #tpu.dot_dimension_numbers<[1], [0], [0], [1], [0, 0, 1, 1], [], []>} : vector<1x32xf32>, vector<32x512xf32>, vector<1x512xf32> -> vector<1x512xf32>
      %c0_43 = arith.constant 0 : index
      %c0_44 = arith.constant 0 : index
      %52 = vector.load %arg12[%c0_43, %c0_44] : memref<1x512xf32, #tpu.memory_space<vmem>>, vector<1x512xf32>
      %53 = arith.addf %51, %52 : vector<1x512xf32>
      %cst_45 = arith.constant 0.000000e+00 : f32
      %54 = vector.broadcast %cst_45 : f32 to vector<1x512xf32>
      %55 = arith.maximumf %53, %54 : vector<1x512xf32>
      %c0_46 = arith.constant 0 : index
      %c0_47 = arith.constant 0 : index
      %56 = vector.load %arg13[%c0_46, %c0_47] : memref<512x256xf32, #tpu.memory_space<vmem>>, vector<512x256xf32>
      %cst_48 = arith.constant dense<0.000000e+00> : vector<1x256xf32>
      %57 = tpu.matmul %55, %56, %cst_48 {dimension_numbers = #tpu.dot_dimension_numbers<[1], [0], [0], [1], [0, 0, 1, 1], [], []>} : vector<1x512xf32>, vector<512x256xf32>, vector<1x256xf32> -> vector<1x256xf32>
      %c0_49 = arith.constant 0 : index
      %c0_50 = arith.constant 0 : index
      %58 = vector.load %arg14[%c0_49, %c0_50] : memref<1x256xf32, #tpu.memory_space<vmem>>, vector<1x256xf32>
      %59 = arith.addf %57, %58 : vector<1x256xf32>
      %cst_51 = arith.constant 0.000000e+00 : f32
      %60 = vector.broadcast %cst_51 : f32 to vector<1x256xf32>
      %61 = arith.maximumf %59, %60 : vector<1x256xf32>
      %c0_52 = arith.constant 0 : index
      %c0_53 = arith.constant 0 : index
      %62 = vector.load %arg15[%c0_52, %c0_53] : memref<256x128xf32, #tpu.memory_space<vmem>>, vector<256x128xf32>
      %cst_54 = arith.constant dense<0.000000e+00> : vector<1x128xf32>
      %63 = tpu.matmul %61, %62, %cst_54 {dimension_numbers = #tpu.dot_dimension_numbers<[1], [0], [0], [1], [0, 0, 1, 1], [], []>} : vector<1x256xf32>, vector<256x128xf32>, vector<1x128xf32> -> vector<1x128xf32>
      %c0_55 = arith.constant 0 : index
      %c0_56 = arith.constant 0 : index
      %64 = vector.load %arg16[%c0_55, %c0_56] : memref<1x128xf32, #tpu.memory_space<vmem>>, vector<1x128xf32>
      %65 = arith.addf %63, %64 : vector<1x128xf32>
      %66 = vector.shape_cast %65 : vector<1x128xf32> to vector<1x1x128xf32>
      %c0_57 = arith.constant 0 : index
      %c0_58 = arith.constant 0 : index
      %c0_59 = arith.constant 0 : index
      %67 = vector.load %arg17[%c0_57, %c0_58, %c0_59] : memref<1x1x128xf32, #tpu.memory_space<vmem>>, vector<1x1x128xf32>
      tpu.vector_store %arg17[%c0_57, %c0_58, %c0_59], %66 {strides = array<i32>} : memref<1x1x128xf32, #tpu.memory_space<vmem>>, vector<1x1x128xf32>,
    } else {
    }
    return
  }
  func.func @transform_0(%arg0: i32, %arg1: i32) -> (i32, i32, i32) {
    %c0_i32 = arith.constant 0 : i32
    %c0_i32_0 = arith.constant 0 : i32
    return %arg0, %c0_i32, %arg1 : i32, i32, i32
  }
  func.func @transform_1(%arg0: i32, %arg1: i32) -> (i32, i32) {
    %c0_i32 = arith.constant 0 : i32
    %c0_i32_0 = arith.constant 0 : i32
    %c0_i32_1 = arith.constant 0 : i32
    return %c0_i32, %c0_i32_0 : i32, i32
  }
  func.func @transform_2(%arg0: i32, %arg1: i32) -> (i32, i32) {
    %c0_i32 = arith.constant 0 : i32
    %c0_i32_0 = arith.constant 0 : i32
    %c0_i32_1 = arith.constant 0 : i32
    return %c0_i32, %c0_i32_0 : i32, i32
  }
  func.func @transform_3(%arg0: i32, %arg1: i32) -> (i32, i32) {
    %c0_i32 = arith.constant 0 : i32
    %c0_i32_0 = arith.constant 0 : i32
    %c0_i32_1 = arith.constant 0 : i32
    return %c0_i32, %c0_i32_0 : i32, i32
  }
  func.func @transform_4(%arg0: i32, %arg1: i32) -> (i32, i32) {
    %c0_i32 = arith.constant 0 : i32
    %c0_i32_0 = arith.constant 0 : i32
    %c0_i32_1 = arith.constant 0 : i32
    return %c0_i32, %c0_i32_0 : i32, i32
  }
  func.func @transform_5(%arg0: i32, %arg1: i32) -> (i32, i32) {
    %c0_i32 = arith.constant 0 : i32
    %c0_i32_0 = arith.constant 0 : i32
    %c0_i32_1 = arith.constant 0 : i32
    return %c0_i32, %c0_i32_0 : i32, i32
  }
  func.func @transform_6(%arg0: i32, %arg1: i32) -> (i32, i32) {
    %c0_i32 = arith.constant 0 : i32
    %c0_i32_0 = arith.constant 0 : i32
    %c0_i32_1 = arith.constant 0 : i32
    return %c0_i32, %c0_i32_0 : i32, i32
  }
  func.func @transform_7(%arg0: i32, %arg1: i32) -> (i32, i32) {
    %c0_i32 = arith.constant 0 : i32
    %c0_i32_0 = arith.constant 0 : i32
    %c0_i32_1 = arith.constant 0 : i32
    return %c0_i32, %c0_i32_0 : i32, i32
  }
  func.func @transform_8(%arg0: i32, %arg1: i32) -> (i32, i32) {
    %c0_i32 = arith.constant 0 : i32
    %c0_i32_0 = arith.constant 0 : i32
    %c0_i32_1 = arith.constant 0 : i32
    return %c0_i32, %c0_i32_0 : i32, i32
  }
  func.func @transform_9(%arg0: i32, %arg1: i32) -> (i32, i32) {
    %c0_i32 = arith.constant 0 : i32
    %c0_i32_0 = arith.constant 0 : i32
    %c0_i32_1 = arith.constant 0 : i32
    return %c0_i32, %c0_i32_0 : i32, i32
  }
  func.func @transform_10(%arg0: i32, %arg1: i32) -> (i32, i32) {
    %c0_i32 = arith.constant 0 : i32
    %c0_i32_0 = arith.constant 0 : i32
    %c0_i32_1 = arith.constant 0 : i32
    return %c0_i32, %c0_i32_0 : i32, i32
  }
  func.func @transform_11(%arg0: i32, %arg1: i32) -> (i32, i32) {
    %c0_i32 = arith.constant 0 : i32
    %c0_i32_0 = arith.constant 0 : i32
    %c0_i32_1 = arith.constant 0 : i32
    return %c0_i32, %c0_i32_0 : i32, i32
  }
  func.func @transform_12(%arg0: i32, %arg1: i32) -> (i32, i32) {
    %c0_i32 = arith.constant 0 : i32
    %c0_i32_0 = arith.constant 0 : i32
    %c0_i32_1 = arith.constant 0 : i32
    return %c0_i32, %c0_i32_0 : i32, i32
  }
  func.func @transform_13(%arg0: i32, %arg1: i32) -> (i32, i32) {
    %c0_i32 = arith.constant 0 : i32
    %c0_i32_0 = arith.constant 0 : i32
    %c0_i32_1 = arith.constant 0 : i32
    return %c0_i32, %c0_i32_0 : i32, i32
  }
  func.func @transform_14(%arg0: i32, %arg1: i32) -> (i32, i32) {
    %c0_i32 = arith.constant 0 : i32
    %c0_i32_0 = arith.constant 0 : i32
    %c0_i32_1 = arith.constant 0 : i32
    return %c0_i32, %c0_i32_0 : i32, i32
  }
  func.func @transform_15(%arg0: i32, %arg1: i32) -> (i32, i32, i32) {
    %c0_i32 = arith.constant 0 : i32
    %c0_i32_0 = arith.constant 0 : i32
    %c0_i32_1 = arith.constant 0 : i32
    return %arg0, %c0_i32, %c0_i32_0 : i32, i32, i32
  }
}

module attributes {stable_mosaic.version = 11 : i64} {
  func.func @_head_kernel(%arg0: i32, %arg1: i32, %arg2: memref<1x32x64xf32, #tpu.memory_space<vmem>>, %arg3: memref<32x4xf32, #tpu.memory_space<vmem>>, %arg4: memref<1x4xf32, #tpu.memory_space<vmem>>, %arg5: memref<4x32xf32, #tpu.memory_space<vmem>>, %arg6: memref<1x32xf32, #tpu.memory_space<vmem>>, %arg7: memref<32x8xf32, #tpu.memory_space<vmem>>, %arg8: memref<1x8xf32, #tpu.memory_space<vmem>>, %arg9: memref<8x32xf32, #tpu.memory_space<vmem>>, %arg10: memref<1x32xf32, #tpu.memory_space<vmem>>, %arg11: memref<32x512xf32, #tpu.memory_space<vmem>>, %arg12: memref<1x512xf32, #tpu.memory_space<vmem>>, %arg13: memref<512x256xf32, #tpu.memory_space<vmem>>, %arg14: memref<1x256xf32, #tpu.memory_space<vmem>>, %arg15: memref<256x128xf32, #tpu.memory_space<vmem>>, %arg16: memref<1x128xf32, #tpu.memory_space<vmem>>, %arg17: memref<1x1x128xf32, #tpu.memory_space<vmem>>, %arg18: memref<1x32xf32, #tpu.memory_space<vmem>>) attributes {dimension_semantics = [#tpu.dimension_semantics<parallel>, #tpu.dimension_semantics<arbitrary>], iteration_bounds = array<i64: 2, 1>, scalar_prefetch = 0 : i64, scratch_operands = 1 : i64, tpu.core_type = #tpu.core_type<tc>, window_params = [{transform_indices = @transform_0, window_bounds = array<i64: 1, 32, 64>}, {pipeline_mode = #tpu.pipeline_mode<synchronous>, transform_indices = @transform_1, window_bounds = array<i64: 32, 4>}, {pipeline_mode = #tpu.pipeline_mode<synchronous>, transform_indices = @transform_2, window_bounds = array<i64: 1, 4>}, {pipeline_mode = #tpu.pipeline_mode<synchronous>, transform_indices = @transform_3, window_bounds = array<i64: 4, 32>}, {pipeline_mode = #tpu.pipeline_mode<synchronous>, transform_indices = @transform_4, window_bounds = array<i64: 1, 32>}, {pipeline_mode = #tpu.pipeline_mode<synchronous>, transform_indices = @transform_5, window_bounds = array<i64: 32, 8>}, {pipeline_mode = #tpu.pipeline_mode<synchronous>, transform_indices = @transform_6, window_bounds = array<i64: 1, 8>}, {pipeline_mode = #tpu.pipeline_mode<synchronous>, transform_indices = @transform_7, window_bounds = array<i64: 8, 32>}, {pipeline_mode = #tpu.pipeline_mode<synchronous>, transform_indices = @transform_8, window_bounds = array<i64: 1, 32>}, {pipeline_mode = #tpu.pipeline_mode<synchronous>, transform_indices = @transform_9, window_bounds = array<i64: 32, 512>}, {pipeline_mode = #tpu.pipeline_mode<synchronous>, transform_indices = @transform_10, window_bounds = array<i64: 1, 512>}, {pipeline_mode = #tpu.pipeline_mode<synchronous>, transform_indices = @transform_11, window_bounds = array<i64: 512, 256>}, {pipeline_mode = #tpu.pipeline_mode<synchronous>, transform_indices = @transform_12, window_bounds = array<i64: 1, 256>}, {pipeline_mode = #tpu.pipeline_mode<synchronous>, transform_indices = @transform_13, window_bounds = array<i64: 256, 128>}, {pipeline_mode = #tpu.pipeline_mode<synchronous>, transform_indices = @transform_14, window_bounds = array<i64: 1, 128>}, {transform_indices = @transform_15, window_bounds = array<i64: 1, 1, 128>}]} {
    %c0_i32 = arith.constant 0 : i32
    %0 = arith.cmpi eq, %arg1, %c0_i32 : i32
    %1 = arith.extui %0 : i1 to i32
    %c0_i32_0 = arith.constant 0 : i32
    %2 = arith.cmpi ne, %1, %c0_i32_0 : i32
    scf.if %2 {
      %cst_9 = arith.constant 0.000000e+00 : f32
      %11 = vector.broadcast %cst_9 : f32 to vector<1x32xf32>
      %c0_10 = arith.constant 0 : index
      %c0_11 = arith.constant 0 : index
      %12 = vector.load %arg18[%c0_10, %c0_11] : memref<1x32xf32, #tpu.memory_space<vmem>>, vector<1x32xf32>
      tpu.vector_store %arg18[%c0_10, %c0_11], %11 {strides = array<i32>} : memref<1x32xf32, #tpu.memory_space<vmem>>, vector<1x32xf32>,
    } else {
    }
    %c0 = arith.constant 0 : index
    %c0_1 = arith.constant 0 : index
    %3 = vector.load %arg18[%c0, %c0_1] : memref<1x32xf32, #tpu.memory_space<vmem>>, vector<1x32xf32>
    %c0_2 = arith.constant 0 : index
    %c0_3 = arith.constant 0 : index
    %c0_4 = arith.constant 0 : index
    %4 = vector.load %arg2[%c0_2, %c0_3, %c0_4] : memref<1x32x64xf32, #tpu.memory_space<vmem>>, vector<1x32x64xf32>
    %cst = arith.constant dense<0.000000e+00> : vector<1x32xf32>
    %5 = vector.multi_reduction <add>, %4, %cst [2] : vector<1x32x64xf32> to vector<1x32xf32>
    %6 = arith.addf %3, %5 : vector<1x32xf32>
    %c0_5 = arith.constant 0 : index
    %c0_6 = arith.constant 0 : index
    %7 = vector.load %arg18[%c0_5, %c0_6] : memref<1x32xf32, #tpu.memory_space<vmem>>, vector<1x32xf32>
    tpu.vector_store %arg18[%c0_5, %c0_6], %6 {strides = array<i32>} : memref<1x32xf32, #tpu.memory_space<vmem>>, vector<1x32xf32>,
    %c0_i32_7 = arith.constant 0 : i32
    %8 = arith.cmpi eq, %arg1, %c0_i32_7 : i32
    %9 = arith.extui %8 : i1 to i32
    %c0_i32_8 = arith.constant 0 : i32
    %10 = arith.cmpi ne, %9, %c0_i32_8 : i32
    scf.if %10 {
      %c0_9 = arith.constant 0 : index
      %c0_10 = arith.constant 0 : index
      %11 = vector.load %arg18[%c0_9, %c0_10] : memref<1x32xf32, #tpu.memory_space<vmem>>, vector<1x32xf32>
      %cst_11 = arith.constant 1.562500e-02 : f32
      %12 = vector.broadcast %cst_11 : f32 to vector<1x32xf32>
      %13 = arith.mulf %11, %12 : vector<1x32xf32>
      %c0_12 = arith.constant 0 : index
      %c0_13 = arith.constant 0 : index
      %14 = vector.load %arg3[%c0_12, %c0_13] : memref<32x4xf32, #tpu.memory_space<vmem>>, vector<32x4xf32>
      %cst_14 = arith.constant dense<0.000000e+00> : vector<1x4xf32>
      %15 = tpu.matmul %13, %14, %cst_14 {dimension_numbers = #tpu.dot_dimension_numbers<[1], [0], [0], [1], [0, 0, 1, 1], [], []>} : vector<1x32xf32>, vector<32x4xf32>, vector<1x4xf32> -> vector<1x4xf32>
      %c0_15 = arith.constant 0 : index
      %c0_16 = arith.constant 0 : index
      %16 = vector.load %arg4[%c0_15, %c0_16] : memref<1x4xf32, #tpu.memory_space<vmem>>, vector<1x4xf32>
      %17 = arith.addf %15, %16 : vector<1x4xf32>
      %cst_17 = arith.constant 0.000000e+00 : f32
      %18 = vector.broadcast %cst_17 : f32 to vector<1x4xf32>
      %19 = arith.maximumf %17, %18 : vector<1x4xf32>
      %c0_18 = arith.constant 0 : index
      %c0_19 = arith.constant 0 : index
      %20 = vector.load %arg5[%c0_18, %c0_19] : memref<4x32xf32, #tpu.memory_space<vmem>>, vector<4x32xf32>
      %cst_20 = arith.constant dense<0.000000e+00> : vector<1x32xf32>
      %21 = tpu.matmul %19, %20, %cst_20 {dimension_numbers = #tpu.dot_dimension_numbers<[1], [0], [0], [1], [0, 0, 1, 1], [], []>} : vector<1x4xf32>, vector<4x32xf32>, vector<1x32xf32> -> vector<1x32xf32>
      %c0_21 = arith.constant 0 : index
      %c0_22 = arith.constant 0 : index
      %22 = vector.load %arg6[%c0_21, %c0_22] : memref<1x32xf32, #tpu.memory_space<vmem>>, vector<1x32xf32>
      %23 = arith.addf %21, %22 : vector<1x32xf32>
      %cst_23 = arith.constant 5.000000e-01 : f32
      %24 = vector.broadcast %cst_23 : f32 to vector<1x32xf32>
      %25 = arith.mulf %24, %23 : vector<1x32xf32>
      %26 = math.tanh %25 : vector<1x32xf32>
      %cst_24 = arith.constant 1.000000e+00 : f32
      %27 = vector.broadcast %cst_24 : f32 to vector<1x32xf32>
      %28 = arith.addf %26, %27 : vector<1x32xf32>
      %cst_25 = arith.constant 5.000000e-01 : f32
      %29 = vector.broadcast %cst_25 : f32 to vector<1x32xf32>
      %30 = arith.mulf %29, %28 : vector<1x32xf32>
      %31 = arith.mulf %13, %30 : vector<1x32xf32>
      %c0_26 = arith.constant 0 : index
      %c0_27 = arith.constant 0 : index
      %32 = vector.load %arg7[%c0_26, %c0_27] : memref<32x8xf32, #tpu.memory_space<vmem>>, vector<32x8xf32>
      %cst_28 = arith.constant dense<0.000000e+00> : vector<1x8xf32>
      %33 = tpu.matmul %31, %32, %cst_28 {dimension_numbers = #tpu.dot_dimension_numbers<[1], [0], [0], [1], [0, 0, 1, 1], [], []>} : vector<1x32xf32>, vector<32x8xf32>, vector<1x8xf32> -> vector<1x8xf32>
      %c0_29 = arith.constant 0 : index
      %c0_30 = arith.constant 0 : index
      %34 = vector.load %arg8[%c0_29, %c0_30] : memref<1x8xf32, #tpu.memory_space<vmem>>, vector<1x8xf32>
      %35 = arith.addf %33, %34 : vector<1x8xf32>
      %cst_31 = arith.constant 0.000000e+00 : f32
      %36 = vector.broadcast %cst_31 : f32 to vector<1x8xf32>
      %37 = arith.maximumf %35, %36 : vector<1x8xf32>
      %c0_32 = arith.constant 0 : index
      %c0_33 = arith.constant 0 : index
      %38 = vector.load %arg9[%c0_32, %c0_33] : memref<8x32xf32, #tpu.memory_space<vmem>>, vector<8x32xf32>
      %cst_34 = arith.constant dense<0.000000e+00> : vector<1x32xf32>
      %39 = tpu.matmul %37, %38, %cst_34 {dimension_numbers = #tpu.dot_dimension_numbers<[1], [0], [0], [1], [0, 0, 1, 1], [], []>} : vector<1x8xf32>, vector<8x32xf32>, vector<1x32xf32> -> vector<1x32xf32>
      %c0_35 = arith.constant 0 : index
      %c0_36 = arith.constant 0 : index
      %40 = vector.load %arg10[%c0_35, %c0_36] : memref<1x32xf32, #tpu.memory_space<vmem>>, vector<1x32xf32>
      %41 = arith.addf %39, %40 : vector<1x32xf32>
      %cst_37 = arith.constant 5.000000e-01 : f32
      %42 = vector.broadcast %cst_37 : f32 to vector<1x32xf32>
      %43 = arith.mulf %42, %41 : vector<1x32xf32>
      %44 = math.tanh %43 : vector<1x32xf32>
      %cst_38 = arith.constant 1.000000e+00 : f32
      %45 = vector.broadcast %cst_38 : f32 to vector<1x32xf32>
      %46 = arith.addf %44, %45 : vector<1x32xf32>
      %cst_39 = arith.constant 5.000000e-01 : f32
      %47 = vector.broadcast %cst_39 : f32 to vector<1x32xf32>
      %48 = arith.mulf %47, %46 : vector<1x32xf32>
      %49 = arith.mulf %31, %48 : vector<1x32xf32>
      %c0_40 = arith.constant 0 : index
      %c0_41 = arith.constant 0 : index
      %50 = vector.load %arg11[%c0_40, %c0_41] : memref<32x512xf32, #tpu.memory_space<vmem>>, vector<32x512xf32>
      %cst_42 = arith.constant dense<0.000000e+00> : vector<1x512xf32>
      %51 = tpu.matmul %49, %50, %cst_42 {dimension_numbers = #tpu.dot_dimension_numbers<[1], [0], [0], [1], [0, 0, 1, 1], [], []>} : vector<1x32xf32>, vector<32x512xf32>, vector<1x512xf32> -> vector<1x512xf32>
      %c0_43 = arith.constant 0 : index
      %c0_44 = arith.constant 0 : index
      %52 = vector.load %arg12[%c0_43, %c0_44] : memref<1x512xf32, #tpu.memory_space<vmem>>, vector<1x512xf32>
      %53 = arith.addf %51, %52 : vector<1x512xf32>
      %cst_45 = arith.constant 0.000000e+00 : f32
      %54 = vector.broadcast %cst_45 : f32 to vector<1x512xf32>
      %55 = arith.maximumf %53, %54 : vector<1x512xf32>
      %c0_46 = arith.constant 0 : index
      %c0_47 = arith.constant 0 : index
      %56 = vector.load %arg13[%c0_46, %c0_47] : memref<512x256xf32, #tpu.memory_space<vmem>>, vector<512x256xf32>
      %cst_48 = arith.constant dense<0.000000e+00> : vector<1x256xf32>
      %57 = tpu.matmul %55, %56, %cst_48 {dimension_numbers = #tpu.dot_dimension_numbers<[1], [0], [0], [1], [0, 0, 1, 1], [], []>} : vector<1x512xf32>, vector<512x256xf32>, vector<1x256xf32> -> vector<1x256xf32>
      %c0_49 = arith.constant 0 : index
      %c0_50 = arith.constant 0 : index
      %58 = vector.load %arg14[%c0_49, %c0_50] : memref<1x256xf32, #tpu.memory_space<vmem>>, vector<1x256xf32>
      %59 = arith.addf %57, %58 : vector<1x256xf32>
      %cst_51 = arith.constant 0.000000e+00 : f32
      %60 = vector.broadcast %cst_51 : f32 to vector<1x256xf32>
      %61 = arith.maximumf %59, %60 : vector<1x256xf32>
      %c0_52 = arith.constant 0 : index
      %c0_53 = arith.constant 0 : index
      %62 = vector.load %arg15[%c0_52, %c0_53] : memref<256x128xf32, #tpu.memory_space<vmem>>, vector<256x128xf32>
      %cst_54 = arith.constant dense<0.000000e+00> : vector<1x128xf32>
      %63 = tpu.matmul %61, %62, %cst_54 {dimension_numbers = #tpu.dot_dimension_numbers<[1], [0], [0], [1], [0, 0, 1, 1], [], []>} : vector<1x256xf32>, vector<256x128xf32>, vector<1x128xf32> -> vector<1x128xf32>
      %c0_55 = arith.constant 0 : index
      %c0_56 = arith.constant 0 : index
      %64 = vector.load %arg16[%c0_55, %c0_56] : memref<1x128xf32, #tpu.memory_space<vmem>>, vector<1x128xf32>
      %65 = arith.addf %63, %64 : vector<1x128xf32>
      %66 = vector.shape_cast %65 : vector<1x128xf32> to vector<1x1x128xf32>
      %c0_57 = arith.constant 0 : index
      %c0_58 = arith.constant 0 : index
      %c0_59 = arith.constant 0 : index
      %67 = vector.load %arg17[%c0_57, %c0_58, %c0_59] : memref<1x1x128xf32, #tpu.memory_space<vmem>>, vector<1x1x128xf32>
      tpu.vector_store %arg17[%c0_57, %c0_58, %c0_59], %66 {strides = array<i32>} : memref<1x1x128xf32, #tpu.memory_space<vmem>>, vector<1x1x128xf32>,
    } else {
    }
    return
  }
  func.func @transform_0(%arg0: i32, %arg1: i32) -> (i32, i32, i32) {
    %c0_i32 = arith.constant 0 : i32
    %c0_i32_0 = arith.constant 0 : i32
    return %arg0, %c0_i32, %arg1 : i32, i32, i32
  }
  func.func @transform_1(%arg0: i32, %arg1: i32) -> (i32, i32) {
    %c0_i32 = arith.constant 0 : i32
    %c0_i32_0 = arith.constant 0 : i32
    %c0_i32_1 = arith.constant 0 : i32
    return %c0_i32, %c0_i32_0 : i32, i32
  }
  func.func @transform_2(%arg0: i32, %arg1: i32) -> (i32, i32) {
    %c0_i32 = arith.constant 0 : i32
    %c0_i32_0 = arith.constant 0 : i32
    %c0_i32_1 = arith.constant 0 : i32
    return %c0_i32, %c0_i32_0 : i32, i32
  }
  func.func @transform_3(%arg0: i32, %arg1: i32) -> (i32, i32) {
    %c0_i32 = arith.constant 0 : i32
    %c0_i32_0 = arith.constant 0 : i32
    %c0_i32_1 = arith.constant 0 : i32
    return %c0_i32, %c0_i32_0 : i32, i32
  }
  func.func @transform_4(%arg0: i32, %arg1: i32) -> (i32, i32) {
    %c0_i32 = arith.constant 0 : i32
    %c0_i32_0 = arith.constant 0 : i32
    %c0_i32_1 = arith.constant 0 : i32
    return %c0_i32, %c0_i32_0 : i32, i32
  }
  func.func @transform_5(%arg0: i32, %arg1: i32) -> (i32, i32) {
    %c0_i32 = arith.constant 0 : i32
    %c0_i32_0 = arith.constant 0 : i32
    %c0_i32_1 = arith.constant 0 : i32
    return %c0_i32, %c0_i32_0 : i32, i32
  }
  func.func @transform_6(%arg0: i32, %arg1: i32) -> (i32, i32) {
    %c0_i32 = arith.constant 0 : i32
    %c0_i32_0 = arith.constant 0 : i32
    %c0_i32_1 = arith.constant 0 : i32
    return %c0_i32, %c0_i32_0 : i32, i32
  }
  func.func @transform_7(%arg0: i32, %arg1: i32) -> (i32, i32) {
    %c0_i32 = arith.constant 0 : i32
    %c0_i32_0 = arith.constant 0 : i32
    %c0_i32_1 = arith.constant 0 : i32
    return %c0_i32, %c0_i32_0 : i32, i32
  }
  func.func @transform_8(%arg0: i32, %arg1: i32) -> (i32, i32) {
    %c0_i32 = arith.constant 0 : i32
    %c0_i32_0 = arith.constant 0 : i32
    %c0_i32_1 = arith.constant 0 : i32
    return %c0_i32, %c0_i32_0 : i32, i32
  }
  func.func @transform_9(%arg0: i32, %arg1: i32) -> (i32, i32) {
    %c0_i32 = arith.constant 0 : i32
    %c0_i32_0 = arith.constant 0 : i32
    %c0_i32_1 = arith.constant 0 : i32
    return %c0_i32, %c0_i32_0 : i32, i32
  }
  func.func @transform_10(%arg0: i32, %arg1: i32) -> (i32, i32) {
    %c0_i32 = arith.constant 0 : i32
    %c0_i32_0 = arith.constant 0 : i32
    %c0_i32_1 = arith.constant 0 : i32
    return %c0_i32, %c0_i32_0 : i32, i32
  }
  func.func @transform_11(%arg0: i32, %arg1: i32) -> (i32, i32) {
    %c0_i32 = arith.constant 0 : i32
    %c0_i32_0 = arith.constant 0 : i32
    %c0_i32_1 = arith.constant 0 : i32
    return %c0_i32, %c0_i32_0 : i32, i32
  }
  func.func @transform_12(%arg0: i32, %arg1: i32) -> (i32, i32) {
    %c0_i32 = arith.constant 0 : i32
    %c0_i32_0 = arith.constant 0 : i32
    %c0_i32_1 = arith.constant 0 : i32
    return %c0_i32, %c0_i32_0 : i32, i32
  }
  func.func @transform_13(%arg0: i32, %arg1: i32) -> (i32, i32) {
    %c0_i32 = arith.constant 0 : i32
    %c0_i32_0 = arith.constant 0 : i32
    %c0_i32_1 = arith.constant 0 : i32
    return %c0_i32, %c0_i32_0 : i32, i32
  }
  func.func @transform_14(%arg0: i32, %arg1: i32) -> (i32, i32) {
    %c0_i32 = arith.constant 0 : i32
    %c0_i32_0 = arith.constant 0 : i32
    %c0_i32_1 = arith.constant 0 : i32
    return %c0_i32, %c0_i32_0 : i32, i32
  }
  func.func @transform_15(%arg0: i32, %arg1: i32) -> (i32, i32, i32) {
    %c0_i32 = arith.constant 0 : i32
    %c0_i32_0 = arith.constant 0 : i32
    %c0_i32_1 = arith.constant 0 : i32
    return %arg0, %c0_i32, %c0_i32_0 : i32, i32, i32
  }
}

</mosaic_0001>

<llo_original>
// kernel: tpu_custom_call.1
$region0: #{tpu_custom_call.1}
  #allocation0 [shape = 'u32[]', space=smem, size = 0x4, offset = 0x4, fixed_abs, tag = 'smem constant byte address 0x4 - core index']
  #allocation1 [shape = 'u32[144,128]{1,0:T(1,128)}', space=vmem, size = 0x12000, scoped, tag = 'internal scratch']
  #allocation2 [shape = 'f32[1,32]{1,0:T(1,128)}', space=vmem, size = 0x200, scoped, tag = 'scratch operand']
  %s0 = inlined_call_operand.vmem [shape: f32[2,32,64], index: 0, kind: input, shape index: {}]
  %s1 = inlined_call_operand.vmem [shape: f32[32,4], index: 1, kind: input, shape index: {}]
  %s2 = inlined_call_operand.hbm [shape: f32[1,4], index: 2, kind: input, shape index: {}]
  %s3 = inlined_call_operand.hbm [shape: f32[4,32], index: 3, kind: input, shape index: {}]
  %s4 = inlined_call_operand.hbm [shape: f32[1,32], index: 4, kind: input, shape index: {}]
  %s5 = inlined_call_operand.vmem [shape: f32[32,8], index: 5, kind: input, shape index: {}]
  %s6 = inlined_call_operand.hbm [shape: f32[1,8], index: 6, kind: input, shape index: {}]
  %s7 = inlined_call_operand.vmem [shape: f32[8,32], index: 7, kind: input, shape index: {}]
  %s8 = inlined_call_operand.vmem [shape: f32[1,32], index: 8, kind: input, shape index: {}]
  %s9 = inlined_call_operand.hbm [shape: f32[32,512], index: 9, kind: input, shape index: {}]
  %s10 = inlined_call_operand.vmem [shape: f32[1,512], index: 10, kind: input, shape index: {}]
  %s11 = inlined_call_operand.hbm [shape: f32[512,256], index: 11, kind: input, shape index: {}]
  %s12 = inlined_call_operand.vmem [shape: f32[1,256], index: 12, kind: input, shape index: {}]
  %s13 = inlined_call_operand.hbm [shape: f32[256,128], index: 13, kind: input, shape index: {}]
  %s14 = inlined_call_operand.vmem [shape: f32[1,128], index: 14, kind: input, shape index: {}]
  %s15 = inlined_call_operand.hbm [shape: f32[2,1,128], index: 15, kind: output, shape index: {}]
  %s16 = sld [smem:[#allocation0]]
  $region129: #{tpu_custom_call.1} parent=0
    _
  %s18 = ssub.s32 1, %s16
  %s19 = scalar_select 0, %s18, %s16
  $region1: #{tpu_custom_call.1} parent=0
    #allocation3 [shape = 'u8[512]{0}', space=vmem, size = 0x400, scoped, tag = 'input window, operand 2, single buffered']
    #allocation4 [shape = 's32[2]{0}', space=sflag, size = 0x8, scoped, tag = 'scoped memory for tpu_custom_call.1']
    #allocation5 [shape = 's32[2]{0}', space=sflag, size = 0x8, scoped, tag = 'scoped memory for tpu_custom_call.1']
    #allocation6 [shape = 'u8[2048]{0}', space=vmem, size = 0x800, scoped, tag = 'input window, operand 3, single buffered']
    #allocation7 [shape = 's32[1]{0}', space=sflag, size = 0x4, scoped, tag = 'scoped memory for tpu_custom_call.1']
    #allocation8 [shape = 'u8[512]{0}', space=vmem, size = 0x400, scoped, tag = 'input window, operand 4, single buffered']
    #allocation9 [shape = 'u8[512]{0}', space=vmem, size = 0x400, scoped, tag = 'input window, operand 6, single buffered']
    #allocation10 [shape = 's32[1]{0}', space=sflag, size = 0x4, scoped, tag = 'scoped memory for tpu_custom_call.1']
    #allocation11 [shape = 'u8[65536]{0}', space=vmem, size = 0x10000, scoped, tag = 'input window, operand 9, single buffered']
    #allocation12 [shape = 'u8[524288]{0}', space=vmem, size = 0x80000, scoped, tag = 'input window, operand 11, single buffered']
    #allocation13 [shape = 's32[1]{0}', space=sflag, size = 0x4, scoped, tag = 'scoped memory for tpu_custom_call.1']
    #allocation14 [shape = 'u8[131072]{0}', space=vmem, size = 0x20000, scoped, tag = 'input window, operand 13, single buffered']
    #allocation15 [shape = 'u8[1024]{0}', space=vmem, size = 0x400, scoped, tag = 'output window, operand 0']
    %20 = vsyncpa [#allocation4], 0
    %21 = vsyncpa [#allocation7], 0
    %22 = vsyncpa [#allocation10], 0
    %23 = vsyncpa [#allocation13], 0
    %24 = vsyncpa [#allocation5], 0
    %s25 = scalar_lea.sflag [#allocation5], 1
    %26 = vsyncpa %s25, 0
    loop: start=0, step=1, limit=4
    $region2: #{tpu_custom_call.1} parent=1 // loop_pre_header
      _
    $region3: #{tpu_custom_call.1} parent=1 // loop_header
      %s28 = sphi 0, %s32
      %p29 = scmp.ge.s32.totalorder %s28, 4
      %s35 = sphi 0, %s47
      %s36 = sphi 0, %s43
      %s37 = sphi 0, %s35
      %s38 = sphi 0, %s36
      %s39 = sphi 0, %s37
      %s40 = sphi 0, %s38
      %s52 = sphi 0, %s54
      %s55 = sphi 0, %s52
      %s56 = sphi 0, %s55
      %s72 = sphi 0, %s56
      %s76 = sphi 0, %s76
      %s78 = sphi 0, %s76
      %s79 = sphi 0, %s78
      %s93 = sphi 0, %s79
      %s97 = sphi 0, %s97
      %s99 = sphi 0, %s97
      %s100 = sphi 0, %s99
      %s114 = sphi 0, %s100
      %s118 = sphi 0, %s118
      %s120 = sphi 0, %s118
      %s121 = sphi 0, %s120
      %s135 = sphi 0, %s121
      %s139 = sphi 0, %s139
      %s141 = sphi 0, %s139
      %s142 = sphi 0, %s141
      %s156 = sphi 0, %s142
      %s160 = sphi 0, %s160
      %s162 = sphi 0, %s160
      %s163 = sphi 0, %s162
      %s177 = sphi 0, %s163
      %s181 = sphi 0, %s181
      %s183 = sphi 0, %s181
      %s184 = sphi 0, %s183
      %s198 = sphi 0, %s184
      %s202 = sphi 0, %s202
      %s204 = sphi 0, %s202
      %s205 = sphi 0, %s204
      %s219 = sphi 0, %s205
      %s223 = sphi 0, %s223
      %s225 = sphi 0, %s223
      %s226 = sphi 0, %s225
      %s240 = sphi 0, %s226
      %s244 = sphi 0, %s244
      %s246 = sphi 0, %s244
      %s247 = sphi 0, %s246
      %s261 = sphi 0, %s247
      %s265 = sphi 0, %s265
      %s267 = sphi 0, %s265
      %s268 = sphi 0, %s267
      %s282 = sphi 0, %s268
      %s286 = sphi 0, %s286
      %s288 = sphi 0, %s286
      %s289 = sphi 0, %s288
      %s303 = sphi 0, %s289
      %s307 = sphi 0, %s307
      %s309 = sphi 0, %s307
      %s310 = sphi 0, %s309
      %s324 = sphi 0, %s310
      %s328 = sphi 0, %s328
      %s330 = sphi 0, %s328
      %s331 = sphi 0, %s330
      %s345 = sphi 0, %s331
      %s349 = sphi 0, %s349
      %s351 = sphi 0, %s349
      %s352 = sphi 0, %s351
      %s366 = sphi 0, %s352
      %s372 = sphi 0, %s374
      %s375 = sphi 0, %s372
      %s376 = sphi 0, %s375
      %s392 = sphi 0, %s376
    $region4: #{tpu_custom_call.1} parent=1 // loop_header_branch
      %31 = sbr.rel (%p29) target = $region8
    $region5: #{tpu_custom_call.1} parent=1 // loop_body
      %s33 = ssub.s32 %s28, 1
      %s34 = ssub.s32 %s28, 2
      %s41 = sadd.s32 1, %s36
      %p42 = scmp.ge.s32.totalorder %s41, 1
      %s43 = scalar_select %p42, 0, %s41
      %s44 = sadd.s32 1, %s35
      %s45 = scalar_select %p42, %s44, %s35
      %p46 = scmp.ge.s32.totalorder %s45, 2
      %s47 = scalar_select %p46, 0, %s45
      %s48 = ssub.s32 %s35, %s47
      %s49 = ssub.s32 %s36, %s43
      %s50 = sor.u32 %s48, %s49
      %p51 = scmp.eq.s32.totalorder %s50, 0
      %s53 = sadd.s32 %s52, 1
      %s54 = scalar_select %p51, %s52, %s53
      %p57 = pneg %p51
      %p58 = scmp.eq.s32.totalorder %s28, 1
      %p59 = por %p57, %p58
      %p60 = scmp.ne.s32.totalorder %s52, %s55
      %p61 = scmp.eq.s32.totalorder %s28, 0
      %p62 = por %p60, %p61
      %p63 = scmp.ne.s32.totalorder %s52, %s55
      %p64 = scmp.eq.s32.totalorder %s33, 1
      %p65 = por %p63, %p64
      %p66 = scmp.ne.s32.totalorder %s55, %s56
      %p67 = scmp.eq.s32.totalorder %s33, 0
      %p68 = por %p66, %p67
      %p69 = scmp.ne.s32.totalorder %s55, %s56
      %p70 = scmp.eq.s32.totalorder %s34, 1
      %p71 = por %p69, %p70
      %p73 = scmp.ne.s32.totalorder %s56, %s72
      %p74 = scmp.eq.s32.totalorder %s34, 0
      %p75 = por %p73, %p74
      %s77 = sadd.s32 %s76, 1
      %p80 = scmp.eq.s32.totalorder %s28, 1
      %p81 = scmp.ne.s32.totalorder %s76, %s78
      %p82 = scmp.eq.s32.totalorder %s28, 0
      %p83 = por %p81, %p82
      %p84 = scmp.ne.s32.totalorder %s76, %s78
      %p85 = scmp.eq.s32.totalorder %s33, 1
      %p86 = por %p84, %p85
      %p87 = scmp.ne.s32.totalorder %s78, %s79
      %p88 = scmp.eq.s32.totalorder %s33, 0
      %p89 = por %p87, %p88
      %p90 = scmp.ne.s32.totalorder %s78, %s79
      %p91 = scmp.eq.s32.totalorder %s34, 1
      %p92 = por %p90, %p91
      %p94 = scmp.ne.s32.totalorder %s79, %s93
      %p95 = scmp.eq.s32.totalorder %s34, 0
      %p96 = por %p94, %p95
      %s98 = sadd.s32 %s97, 1
      %p101 = scmp.eq.s32.totalorder %s28, 1
      %p102 = scmp.ne.s32.totalorder %s97, %s99
      %p103 = scmp.eq.s32.totalorder %s28, 0
      %p104 = por %p102, %p103
      %p105 = scmp.ne.s32.totalorder %s97, %s99
      %p106 = scmp.eq.s32.totalorder %s33, 1
      %p107 = por %p105, %p106
      %p108 = scmp.ne.s32.totalorder %s99, %s100
      %p109 = scmp.eq.s32.totalorder %s33, 0
      %p110 = por %p108, %p109
      %p111 = scmp.ne.s32.totalorder %s99, %s100
      %p112 = scmp.eq.s32.totalorder %s34, 1
      %p113 = por %p111, %p112
      %p115 = scmp.ne.s32.totalorder %s100, %s114
      %p116 = scmp.eq.s32.totalorder %s34, 0
      %p117 = por %p115, %p116
      %s119 = sadd.s32 %s118, 1
      %p122 = scmp.eq.s32.totalorder %s28, 1
      %p123 = scmp.ne.s32.totalorder %s118, %s120
      %p124 = scmp.eq.s32.totalorder %s28, 0
      %p125 = por %p123, %p124
      %p126 = scmp.ne.s32.totalorder %s118, %s120
      %p127 = scmp.eq.s32.totalorder %s33, 1
      %p128 = por %p126, %p127
      %p129 = scmp.ne.s32.totalorder %s120, %s121
      %p130 = scmp.eq.s32.totalorder %s33, 0
      %p131 = por %p129, %p130
      %p132 = scmp.ne.s32.totalorder %s120, %s121
      %p133 = scmp.eq.s32.totalorder %s34, 1
      %p134 = por %p132, %p133
      %p136 = scmp.ne.s32.totalorder %s121, %s135
      %p137 = scmp.eq.s32.totalorder %s34, 0
      %p138 = por %p136, %p137
      %s140 = sadd.s32 %s139, 1
      %p143 = scmp.eq.s32.totalorder %s28, 1
      %p144 = scmp.ne.s32.totalorder %s139, %s141
      %p145 = scmp.eq.s32.totalorder %s28, 0
      %p146 = por %p144, %p145
      %p147 = scmp.ne.s32.totalorder %s139, %s141
      %p148 = scmp.eq.s32.totalorder %s33, 1
      %p149 = por %p147, %p148
      %p150 = scmp.ne.s32.totalorder %s141, %s142
      %p151 = scmp.eq.s32.totalorder %s33, 0
      %p152 = por %p150, %p151
      %p153 = scmp.ne.s32.totalorder %s141, %s142
      %p154 = scmp.eq.s32.totalorder %s34, 1
      %p155 = por %p153, %p154
      %p157 = scmp.ne.s32.totalorder %s142, %s156
      %p158 = scmp.eq.s32.totalorder %s34, 0
      %p159 = por %p157, %p158
      %s161 = sadd.s32 %s160, 1
      %p164 = scmp.eq.s32.totalorder %s28, 1
      %p165 = scmp.ne.s32.totalorder %s160, %s162
      %p166 = scmp.eq.s32.totalorder %s28, 0
      %p167 = por %p165, %p166
      %p168 = scmp.ne.s32.totalorder %s160, %s162
      %p169 = scmp.eq.s32.totalorder %s33, 1
      %p170 = por %p168, %p169
      %p171 = scmp.ne.s32.totalorder %s162, %s163
      %p172 = scmp.eq.s32.totalorder %s33, 0
      %p173 = por %p171, %p172
      %p174 = scmp.ne.s32.totalorder %s162, %s163
      %p175 = scmp.eq.s32.totalorder %s34, 1
      %p176 = por %p174, %p175
      %p178 = scmp.ne.s32.totalorder %s163, %s177
      %p179 = scmp.eq.s32.totalorder %s34, 0
      %p180 = por %p178, %p179
      %s182 = sadd.s32 %s181, 1
      %p185 = scmp.eq.s32.totalorder %s28, 1
      %p186 = scmp.ne.s32.totalorder %s181, %s183
      %p187 = scmp.eq.s32.totalorder %s28, 0
      %p188 = por %p186, %p187
      %p189 = scmp.ne.s32.totalorder %s181, %s183
      %p190 = scmp.eq.s32.totalorder %s33, 1
      %p191 = por %p189, %p190
      %p192 = scmp.ne.s32.totalorder %s183, %s184
      %p193 = scmp.eq.s32.totalorder %s33, 0
      %p194 = por %p192, %p193
      %p195 = scmp.ne.s32.totalorder %s183, %s184
      %p196 = scmp.eq.s32.totalorder %s34, 1
      %p197 = por %p195, %p196
      %p199 = scmp.ne.s32.totalorder %s184, %s198
      %p200 = scmp.eq.s32.totalorder %s34, 0
      %p201 = por %p199, %p200
      %s203 = sadd.s32 %s202, 1
      %p206 = scmp.eq.s32.totalorder %s28, 1
      %p207 = scmp.ne.s32.totalorder %s202, %s204
      %p208 = scmp.eq.s32.totalorder %s28, 0
      %p209 = por %p207, %p208
      %p210 = scmp.ne.s32.totalorder %s202, %s204
      %p211 = scmp.eq.s32.totalorder %s33, 1
      %p212 = por %p210, %p211
      %p213 = scmp.ne.s32.totalorder %s204, %s205
      %p214 = scmp.eq.s32.totalorder %s33, 0
      %p215 = por %p213, %p214
      %p216 = scmp.ne.s32.totalorder %s204, %s205
      %p217 = scmp.eq.s32.totalorder %s34, 1
      %p218 = por %p216, %p217
      %p220 = scmp.ne.s32.totalorder %s205, %s219
      %p221 = scmp.eq.s32.totalorder %s34, 0
      %p222 = por %p220, %p221
      %s224 = sadd.s32 %s223, 1
      %p227 = scmp.eq.s32.totalorder %s28, 1
      %p228 = scmp.ne.s32.totalorder %s223, %s225
      %p229 = scmp.eq.s32.totalorder %s28, 0
      %p230 = por %p228, %p229
      %p231 = scmp.ne.s32.totalorder %s223, %s225
      %p232 = scmp.eq.s32.totalorder %s33, 1
      %p233 = por %p231, %p232
      %p234 = scmp.ne.s32.totalorder %s225, %s226
      %p235 = scmp.eq.s32.totalorder %s33, 0
      %p236 = por %p234, %p235
      %p237 = scmp.ne.s32.totalorder %s225, %s226
      %p238 = scmp.eq.s32.totalorder %s34, 1
      %p239 = por %p237, %p238
      %p241 = scmp.ne.s32.totalorder %s226, %s240
      %p242 = scmp.eq.s32.totalorder %s34, 0
      %p243 = por %p241, %p242
      %s245 = sadd.s32 %s244, 1
      %p248 = scmp.eq.s32.totalorder %s28, 1
      %p249 = scmp.ne.s32.totalorder %s244, %s246
      %p250 = scmp.eq.s32.totalorder %s28, 0
      %p251 = por %p249, %p250
      %p252 = scmp.ne.s32.totalorder %s244, %s246
      %p253 = scmp.eq.s32.totalorder %s33, 1
      %p254 = por %p252, %p253
      %p255 = scmp.ne.s32.totalorder %s246, %s247
      %p256 = scmp.eq.s32.totalorder %s33, 0
      %p257 = por %p255, %p256
      %p258 = scmp.ne.s32.totalorder %s246, %s247
      %p259 = scmp.eq.s32.totalorder %s34, 1
      %p260 = por %p258, %p259
      %p262 = scmp.ne.s32.totalorder %s247, %s261
      %p263 = scmp.eq.s32.totalorder %s34, 0
      %p264 = por %p262, %p263
      %s266 = sadd.s32 %s265, 1
      %p269 = scmp.eq.s32.totalorder %s28, 1
      %p270 = scmp.ne.s32.totalorder %s265, %s267
      %p271 = scmp.eq.s32.totalorder %s28, 0
      %p272 = por %p270, %p271
      %p273 = scmp.ne.s32.totalorder %s265, %s267
      %p274 = scmp.eq.s32.totalorder %s33, 1
      %p275 = por %p273, %p274
      %p276 = scmp.ne.s32.totalorder %s267, %s268
      %p277 = scmp.eq.s32.totalorder %s33, 0
      %p278 = por %p276, %p277
      %p279 = scmp.ne.s32.totalorder %s267, %s268
      %p280 = scmp.eq.s32.totalorder %s34, 1
      %p281 = por %p279, %p280
      %p283 = scmp.ne.s32.totalorder %s268, %s282
      %p284 = scmp.eq.s32.totalorder %s34, 0
      %p285 = por %p283, %p284
      %s287 = sadd.s32 %s286, 1
      %p290 = scmp.eq.s32.totalorder %s28, 1
      %p291 = scmp.ne.s32.totalorder %s286, %s288
      %p292 = scmp.eq.s32.totalorder %s28, 0
      %p293 = por %p291, %p292
      %p294 = scmp.ne.s32.totalorder %s286, %s288
      %p295 = scmp.eq.s32.totalorder %s33, 1
      %p296 = por %p294, %p295
      %p297 = scmp.ne.s32.totalorder %s288, %s289
      %p298 = scmp.eq.s32.totalorder %s33, 0
      %p299 = por %p297, %p298
      %p300 = scmp.ne.s32.totalorder %s288, %s289
      %p301 = scmp.eq.s32.totalorder %s34, 1
      %p302 = por %p300, %p301
      %p304 = scmp.ne.s32.totalorder %s289, %s303
      %p305 = scmp.eq.s32.totalorder %s34, 0
      %p306 = por %p304, %p305
      %s308 = sadd.s32 %s307, 1
      %p311 = scmp.eq.s32.totalorder %s28, 1
      %p312 = scmp.ne.s32.totalorder %s307, %s309
      %p313 = scmp.eq.s32.totalorder %s28, 0
      %p314 = por %p312, %p313
      %p315 = scmp.ne.s32.totalorder %s307, %s309
      %p316 = scmp.eq.s32.totalorder %s33, 1
      %p317 = por %p315, %p316
      %p318 = scmp.ne.s32.totalorder %s309, %s310
      %p319 = scmp.eq.s32.totalorder %s33, 0
      %p320 = por %p318, %p319
      %p321 = scmp.ne.s32.totalorder %s309, %s310
      %p322 = scmp.eq.s32.totalorder %s34, 1
      %p323 = por %p321, %p322
      %p325 = scmp.ne.s32.totalorder %s310, %s324
      %p326 = scmp.eq.s32.totalorder %s34, 0
      %p327 = por %p325, %p326
      %s329 = sadd.s32 %s328, 1
      %p332 = scmp.eq.s32.totalorder %s28, 1
      %p333 = scmp.ne.s32.totalorder %s328, %s330
      %p334 = scmp.eq.s32.totalorder %s28, 0
      %p335 = por %p333, %p334
      %p336 = scmp.ne.s32.totalorder %s328, %s330
      %p337 = scmp.eq.s32.totalorder %s33, 1
      %p338 = por %p336, %p337
      %p339 = scmp.ne.s32.totalorder %s330, %s331
      %p340 = scmp.eq.s32.totalorder %s33, 0
      %p341 = por %p339, %p340
      %p342 = scmp.ne.s32.totalorder %s330, %s331
      %p343 = scmp.eq.s32.totalorder %s34, 1
      %p344 = por %p342, %p343
      %p346 = scmp.ne.s32.totalorder %s331, %s345
      %p347 = scmp.eq.s32.totalorder %s34, 0
      %p348 = por %p346, %p347
      %s350 = sadd.s32 %s349, 1
      %p353 = scmp.eq.s32.totalorder %s28, 1
      %p354 = scmp.ne.s32.totalorder %s349, %s351
      %p355 = scmp.eq.s32.totalorder %s28, 0
      %p356 = por %p354, %p355
      %p357 = scmp.ne.s32.totalorder %s349, %s351
      %p358 = scmp.eq.s32.totalorder %s33, 1
      %p359 = por %p357, %p358
      %p360 = scmp.ne.s32.totalorder %s351, %s352
      %p361 = scmp.eq.s32.totalorder %s33, 0
      %p362 = por %p360, %p361
      %p363 = scmp.ne.s32.totalorder %s351, %s352
      %p364 = scmp.eq.s32.totalorder %s34, 1
      %p365 = por %p363, %p364
      %p367 = scmp.ne.s32.totalorder %s352, %s366
      %p368 = scmp.eq.s32.totalorder %s34, 0
      %p369 = por %p367, %p368
      %s370 = ssub.s32 %s35, %s47
      %p371 = scmp.eq.s32.totalorder %s370, 0
      %s373 = sadd.s32 %s372, 1
      %s374 = scalar_select %p371, %s372, %s373
      %p377 = pneg %p371
      %p378 = scmp.eq.s32.totalorder %s28, 1
      %p379 = por %p377, %p378
      %p380 = scmp.ne.s32.totalorder %s372, %s375
      %p381 = scmp.eq.s32.totalorder %s28, 0
      %p382 = por %p380, %p381
      %p383 = scmp.ne.s32.totalorder %s372, %s375
      %p384 = scmp.eq.s32.totalorder %s33, 1
      %p385 = por %p383, %p384
      %p386 = scmp.ne.s32.totalorder %s375, %s376
      %p387 = scmp.eq.s32.totalorder %s33, 0
      %p388 = por %p386, %p387
      %p389 = scmp.ne.s32.totalorder %s375, %s376
      %p390 = scmp.eq.s32.totalorder %s34, 1
      %p391 = por %p389, %p390
      %p393 = scmp.ne.s32.totalorder %s376, %s392
      %p394 = scmp.eq.s32.totalorder %s34, 0
      %p395 = por %p393, %p394
      %p396 = scmp.le.s32.totalorder 1, %s28
      %p397 = scmp.lt.s32.totalorder %s28, 3
      %p398 = pnand %p396, %p397
      %p399 = pneg %p398
      // Predicated region
      $region9: #{tpu_custom_call.1} parent=5 // pred_check
        _
      $region10: #{tpu_custom_call.1} parent=5 // pred_check_branch
        %401 = sbr.rel (%p398) target = $region12
      $region11: #{tpu_custom_call.1} parent=5 // pred_region
        %s402 = ssub.s32 %s28, 1
        // Predicated region
        $region13: #{tpu_custom_call.1} parent=11 // pred_check
          %p403 = pneg %p89
        $region14: #{tpu_custom_call.1} parent=11 // pred_check_branch
          %405 = sbr.rel (%p403) target = $region16
        $region15: #{tpu_custom_call.1} parent=11 // pred_region
          _
        $region16: #{tpu_custom_call.1} parent=11 // pred_fallthru
          _
        // Predicated region
        $region17: #{tpu_custom_call.1} parent=11 // pred_check
          %p406 = pneg %p110
        $region18: #{tpu_custom_call.1} parent=11 // pred_check_branch
          %408 = sbr.rel (%p406) target = $region20
        $region19: #{tpu_custom_call.1} parent=11 // pred_region
          %s410 = ssub.s32 16, 16
          %411 = vsyncadd [#allocation4], %s410
          %s413 = sshll.u32 [#allocation3], 4
          %s414 = int_to_ptr.vmem [resolvable:$true] %s413
          %416 = dma.hbm_to_vmem [thread:$0]  %s2, 16, %s414, [#allocation4]
        $region20: #{tpu_custom_call.1} parent=11 // pred_fallthru
          _
        // Predicated region
        $region21: #{tpu_custom_call.1} parent=11 // pred_check
          %p417 = pneg %p131
        $region22: #{tpu_custom_call.1} parent=11 // pred_check_branch
          %419 = sbr.rel (%p417) target = $region24
        $region23: #{tpu_custom_call.1} parent=11 // pred_region
          %s421 = ssub.s32 64, 64
          %422 = vsyncadd [#allocation7], %s421
          %s424 = sshll.u32 [#allocation6], 4
          %s425 = int_to_ptr.vmem [resolvable:$true] %s424
          %427 = dma.hbm_to_vmem [thread:$0]  %s3, 64, %s425, [#allocation7]
        $region24: #{tpu_custom_call.1} parent=11 // pred_fallthru
          _
        // Predicated region
        $region25: #{tpu_custom_call.1} parent=11 // pred_check
          %p428 = pneg %p152
        $region26: #{tpu_custom_call.1} parent=11 // pred_check_branch
          %430 = sbr.rel (%p428) target = $region28
        $region27: #{tpu_custom_call.1} parent=11 // pred_region
          %s432 = ssub.s32 16, 16
          %433 = vsyncadd [#allocation7], %s432
          %s435 = sshll.u32 [#allocation8], 4
          %s436 = int_to_ptr.vmem [resolvable:$true] %s435
          %438 = dma.hbm_to_vmem [thread:$0]  %s4, 16, %s436, [#allocation7]
        $region28: #{tpu_custom_call.1} parent=11 // pred_fallthru
          _
        // Predicated region
        $region29: #{tpu_custom_call.1} parent=11 // pred_check
          %p439 = pneg %p173
        $region30: #{tpu_custom_call.1} parent=11 // pred_check_branch
          %441 = sbr.rel (%p439) target = $region32
        $region31: #{tpu_custom_call.1} parent=11 // pred_region
          _
        $region32: #{tpu_custom_call.1} parent=11 // pred_fallthru
          _
        // Predicated region
        $region33: #{tpu_custom_call.1} parent=11 // pred_check
          %p442 = pneg %p194
        $region34: #{tpu_custom_call.1} parent=11 // pred_check_branch
          %444 = sbr.rel (%p442) target = $region36
        $region35: #{tpu_custom_call.1} parent=11 // pred_region
          %s446 = ssub.s32 16, 16
          %447 = vsyncadd [#allocation10], %s446
          %s449 = sshll.u32 [#allocation9], 4
          %s450 = int_to_ptr.vmem [resolvable:$true] %s449
          %452 = dma.hbm_to_vmem [thread:$0]  %s6, 16, %s450, [#allocation10]
        $region36: #{tpu_custom_call.1} parent=11 // pred_fallthru
          _
        // Predicated region
        $region37: #{tpu_custom_call.1} parent=11 // pred_check
          %p453 = pneg %p215
        $region38: #{tpu_custom_call.1} parent=11 // pred_check_branch
          %455 = sbr.rel (%p453) target = $region40
        $region39: #{tpu_custom_call.1} parent=11 // pred_region
          _
        $region40: #{tpu_custom_call.1} parent=11 // pred_fallthru
          _
        // Predicated region
        $region41: #{tpu_custom_call.1} parent=11 // pred_check
          %p456 = pneg %p236
        $region42: #{tpu_custom_call.1} parent=11 // pred_check_branch
          %458 = sbr.rel (%p456) target = $region44
        $region43: #{tpu_custom_call.1} parent=11 // pred_region
          _
        $region44: #{tpu_custom_call.1} parent=11 // pred_fallthru
          _
        // Predicated region
        $region45: #{tpu_custom_call.1} parent=11 // pred_check
          %p459 = pneg %p257
        $region46: #{tpu_custom_call.1} parent=11 // pred_check_branch
          %461 = sbr.rel (%p459) target = $region48
        $region47: #{tpu_custom_call.1} parent=11 // pred_region
          %s463 = ssub.s32 2048, 2048
          %464 = vsyncadd [#allocation10], %s463
          %s465 = sshll.u32 [#allocation11], 4
          %s466 = int_to_ptr.vmem [resolvable:$true] %s465
          %471 = dma.hbm_to_vmem [thread:$0]  %s9, 2048, %s466, [#allocation10], 512, 512, 32
        $region48: #{tpu_custom_call.1} parent=11 // pred_fallthru
          _
        // Predicated region
        $region49: #{tpu_custom_call.1} parent=11 // pred_check
          %p472 = pneg %p278
        $region50: #{tpu_custom_call.1} parent=11 // pred_check_branch
          %474 = sbr.rel (%p472) target = $region52
        $region51: #{tpu_custom_call.1} parent=11 // pred_region
          _
        $region52: #{tpu_custom_call.1} parent=11 // pred_fallthru
          _
        // Predicated region
        $region53: #{tpu_custom_call.1} parent=11 // pred_check
          %p475 = pneg %p299
        $region54: #{tpu_custom_call.1} parent=11 // pred_check_branch
          %477 = sbr.rel (%p475) target = $region56
        $region55: #{tpu_custom_call.1} parent=11 // pred_region
          %s479 = ssub.s32 16384, 16384
          %480 = vsyncadd [#allocation13], %s479
          %s481 = sshll.u32 [#allocation12], 4
          %s482 = int_to_ptr.vmem [resolvable:$true] %s481
          %487 = dma.hbm_to_vmem [thread:$0]  %s11, 16384, %s482, [#allocation13], 256, 256, 16
        $region56: #{tpu_custom_call.1} parent=11 // pred_fallthru
          _
        // Predicated region
        $region57: #{tpu_custom_call.1} parent=11 // pred_check
          %p488 = pneg %p320
        $region58: #{tpu_custom_call.1} parent=11 // pred_check_branch
          %490 = sbr.rel (%p488) target = $region60
        $region59: #{tpu_custom_call.1} parent=11 // pred_region
          _
        $region60: #{tpu_custom_call.1} parent=11 // pred_fallthru
          _
        // Predicated region
        $region61: #{tpu_custom_call.1} parent=11 // pred_check
          %p491 = pneg %p341
        $region62: #{tpu_custom_call.1} parent=11 // pred_check_branch
          %493 = sbr.rel (%p491) target = $region64
        $region63: #{tpu_custom_call.1} parent=11 // pred_region
          %s495 = ssub.s32 4096, 4096
          %496 = vsyncadd [#allocation13], %s495
          %s497 = sshll.u32 [#allocation14], 4
          %s498 = int_to_ptr.vmem [resolvable:$true] %s497
          %503 = dma.hbm_to_vmem [thread:$0]  %s13, 4096, %s498, [#allocation13], 128, 128, 8
        $region64: #{tpu_custom_call.1} parent=11 // pred_fallthru
          _
        // Predicated region
        $region65: #{tpu_custom_call.1} parent=11 // pred_check
          %p504 = pneg %p362
        $region66: #{tpu_custom_call.1} parent=11 // pred_check_branch
          %506 = sbr.rel (%p504) target = $region68
        $region67: #{tpu_custom_call.1} parent=11 // pred_region
          _
        $region68: #{tpu_custom_call.1} parent=11 // pred_fallthru
          _
      $region12: #{tpu_custom_call.1} parent=5 // pred_fallthru
        _
      %p507 = scmp.lt.s32.totalorder %s28, 2
      // Predicated region
      $region69: #{tpu_custom_call.1} parent=5 // pred_check
        %p508 = pneg %p507
      $region70: #{tpu_custom_call.1} parent=5 // pred_check_branch
        %510 = sbr.rel (%p508) target = $region72
      $region71: #{tpu_custom_call.1} parent=5 // pred_region
        // Predicated region
        $region73: #{tpu_custom_call.1} parent=71 // pred_check
          %p511 = pneg %p62
        $region74: #{tpu_custom_call.1} parent=71 // pred_check_branch
          %513 = sbr.rel (%p511) target = $region76
        $region75: #{tpu_custom_call.1} parent=71 // pred_region
          %p514 = scmp.lt.s32.totalorder %s35, 1
          %s515 = scalar_select %p514, %s35, 1
          %p516 = scmp.lt.s32.totalorder %s36, 0
          %s517 = scalar_select %p516, %s36, 0
          %s518 = smul.addr %s515, 4
          %s519 = sadd.s32 %s517, %s518
          %s520 = smul.addr %s519, 8
          %s521 = scalar_lea.vmem %s0, %s520
        $region76: #{tpu_custom_call.1} parent=71 // pred_fallthru
          _
      $region72: #{tpu_custom_call.1} parent=5 // pred_fallthru
        _
      %p522 = scmp.le.s32.totalorder 1, %s28
      %p523 = scmp.lt.s32.totalorder %s28, 3
      %p524 = pnand %p522, %p523
      %p525 = pneg %p524
      // Predicated region
      $region77: #{tpu_custom_call.1} parent=5 // pred_check
        _
      $region78: #{tpu_custom_call.1} parent=5 // pred_check_branch
        %527 = sbr.rel (%p524) target = $region80
      $region79: #{tpu_custom_call.1} parent=5 // pred_region
        %s528 = ssub.s32 %s28, 1
        // Predicated region
        $region81: #{tpu_custom_call.1} parent=79 // pred_check
          %p529 = pneg %p110
        $region82: #{tpu_custom_call.1} parent=79 // pred_check_branch
          %531 = sbr.rel (%p529) target = $region84
        $region83: #{tpu_custom_call.1} parent=79 // pred_region
          %532 = dma.done [#allocation4], 16
        $region84: #{tpu_custom_call.1} parent=79 // pred_fallthru
          _
        // Predicated region
        $region85: #{tpu_custom_call.1} parent=79 // pred_check
          %p533 = pneg %p131
        $region86: #{tpu_custom_call.1} parent=79 // pred_check_branch
          %535 = sbr.rel (%p533) target = $region88
        $region87: #{tpu_custom_call.1} parent=79 // pred_region
          %536 = dma.done [#allocation7], 64
        $region88: #{tpu_custom_call.1} parent=79 // pred_fallthru
          _
        // Predicated region
        $region89: #{tpu_custom_call.1} parent=79 // pred_check
          %p537 = pneg %p152
        $region90: #{tpu_custom_call.1} parent=79 // pred_check_branch
          %539 = sbr.rel (%p537) target = $region92
        $region91: #{tpu_custom_call.1} parent=79 // pred_region
          %540 = dma.done [#allocation7], 16
        $region92: #{tpu_custom_call.1} parent=79 // pred_fallthru
          _
        // Predicated region
        $region93: #{tpu_custom_call.1} parent=79 // pred_check
          %p541 = pneg %p194
        $region94: #{tpu_custom_call.1} parent=79 // pred_check_branch
          %543 = sbr.rel (%p541) target = $region96
        $region95: #{tpu_custom_call.1} parent=79 // pred_region
          %544 = dma.done [#allocation10], 16
        $region96: #{tpu_custom_call.1} parent=79 // pred_fallthru
          _
        // Predicated region
        $region97: #{tpu_custom_call.1} parent=79 // pred_check
          %p545 = pneg %p257
        $region98: #{tpu_custom_call.1} parent=79 // pred_check_branch
          %547 = sbr.rel (%p545) target = $region100
        $region99: #{tpu_custom_call.1} parent=79 // pred_region
          %548 = dma.done [#allocation10], 2048
        $region100: #{tpu_custom_call.1} parent=79 // pred_fallthru
          _
        // Predicated region
        $region101: #{tpu_custom_call.1} parent=79 // pred_check
          %p549 = pneg %p299
        $region102: #{tpu_custom_call.1} parent=79 // pred_check_branch
          %551 = sbr.rel (%p549) target = $region104
        $region103: #{tpu_custom_call.1} parent=79 // pred_region
          %552 = dma.done [#allocation13], 16384
        $region104: #{tpu_custom_call.1} parent=79 // pred_fallthru
          _
        // Predicated region
        $region105: #{tpu_custom_call.1} parent=79 // pred_check
          %p553 = pneg %p341
        $region106: #{tpu_custom_call.1} parent=79 // pred_check_branch
          %555 = sbr.rel (%p553) target = $region108
        $region107: #{tpu_custom_call.1} parent=79 // pred_region
          %556 = dma.done [#allocation13], 4096
        $region108: #{tpu_custom_call.1} parent=79 // pred_fallthru
          _
        %p557 = scmp.lt.s32.totalorder %s37, 1
        %s558 = scalar_select %p557, %s37, 1
        %p559 = scmp.lt.s32.totalorder %s38, 0
        %s560 = scalar_select %p559, %s38, 0
        %s561 = smul.addr %s558, 4
        %s562 = sadd.s32 %s560, %s561
        %s563 = smul.addr %s562, 8
        %s564 = scalar_lea.vmem %s0, %s563
        %p565 = pneg %p68
        %p566 = pneg %p65
        %p567 = pneg %p89
        %p568 = pneg %p86
        %p569 = pneg %p110
        %p570 = pneg %p107
        %p571 = pneg %p131
        %p572 = pneg %p128
        %p573 = pneg %p152
        %p574 = pneg %p149
        %p575 = pneg %p173
        %p576 = pneg %p170
        %p577 = pneg %p194
        %p578 = pneg %p191
        %p579 = pneg %p215
        %p580 = pneg %p212
        %p581 = pneg %p236
        %p582 = pneg %p233
        %p583 = pneg %p257
        %p584 = pneg %p254
        %p585 = pneg %p278
        %p586 = pneg %p275
        %p587 = pneg %p299
        %p588 = pneg %p296
        %p589 = pneg %p320
        %p590 = pneg %p317
        %p591 = pneg %p341
        %p592 = pneg %p338
        %p593 = pneg %p362
        %p594 = pneg %p359
        %p595 = pneg %p388
        %p596 = pneg %p385
        %s597 = sand.u32 %s375, 1
        %s598 = scalar_lea.sflag [#allocation5], %s597
        %s599 = sand.u32 %s375, 1
        %s600 = scalar_lea.vmem [#allocation15], %s599
        %p601 = scmp.lt.s32.totalorder %s37, 1
        %s602 = scalar_select %p601, %s37, 1
        %p603 = scmp.lt.s32.totalorder %s38, 0
        %s604 = scalar_select %p603, %s38, 0
        %s605 = smul.addr %s602, 4
        %s606 = sadd.s32 %s604, %s605
        %s607 = smul.addr %s606, 8
        %s608 = scalar_lea.vmem %s0, %s607
        %p609 = scmp.eq.s32.totalorder %s38, 0
        // Predicated region
        $region109: #{tpu_custom_call.1} parent=79 // pred_check
          %p610 = pneg %p609
        $region110: #{tpu_custom_call.1} parent=79 // pred_check_branch
          %612 = sbr.rel (%p610) target = $region112
        $region111: #{tpu_custom_call.1} parent=79 // pred_region
          %vm613 = vcmask 253952
          %614 = vst.msk [vmem:[#allocation2] sm:$0x1] %vm613, 0.0
        $region112: #{tpu_custom_call.1} parent=79 // pred_fallthru
          _
        %v615 = vld [vmem:[#allocation2] sm:$0x1]
        %v616 = vld [vmem:[%s608] sm:$0xff]
        %v617 = vld [vmem:[%s608 + $0x8] sm:$0xff]
        %v618 = vld [vmem:[%s608 + $0x10] sm:$0xff]
        %v619 = vld [vmem:[%s608 + $0x18] sm:$0xff]
        %vm620 = vcmask 523264
        %v621 = vsel %vm620, %v616, 0.0
        %622 = vadd.xlane.f32.xlu0 %v621
        %v623 = vpop.xlane.xlu0 %622
        %v624 = vsel %vm620, %v617, 0.0
        %625 = vadd.xlane.f32.xlu0 %v624
        %v626 = vpop.xlane.xlu0 %625
        %v627 = vsel %vm620, %v618, 0.0
        %628 = vadd.xlane.f32.xlu0 %v627
        %v629 = vpop.xlane.xlu0 %628
        %v630 = vsel %vm620, %v619, 0.0
        %631 = vadd.xlane.f32.xlu0 %v630
        %v632 = vpop.xlane.xlu0 %631
        %v637 = vlaneseq
        %v638 = vshrl.u32 %v637, 7
        %v639 = vsub.s32 0, %v638
        %v640 = vrot.slane %v623, %v639
        %v641 = vlaneseq
        %v642 = vshrl.u32 %v641, 7
        %v643 = vsub.s32 1, %v642
        %v644 = vrot.slane %v623, %v643
        %v645 = vlaneseq
        %v646 = vshrl.u32 %v645, 7
        %v647 = vsub.s32 2, %v646
        %v648 = vrot.slane %v623, %v647
        %v649 = vlaneseq
        %v650 = vshrl.u32 %v649, 7
        %v651 = vsub.s32 3, %v650
        %v652 = vrot.slane %v623, %v651
        %v653 = vlaneseq
        %v654 = vshrl.u32 %v653, 7
        %v655 = vsub.s32 4, %v654
        %v656 = vrot.slane %v623, %v655
        %v657 = vlaneseq
        %v658 = vshrl.u32 %v657, 7
        %v659 = vsub.s32 5, %v658
        %v660 = vrot.slane %v623, %v659
        %v661 = vlaneseq
        %v662 = vshrl.u32 %v661, 7
        %v663 = vsub.s32 6, %v662
        %v664 = vrot.slane %v623, %v663
        %v665 = vlaneseq
        %v666 = vshrl.u32 %v665, 7
        %v667 = vsub.s32 7, %v666
        %v668 = vrot.slane %v623, %v667
        %v669 = vlaneseq
        %v670 = vshrl.u32 %v669, 7
        %v671 = vsub.s32 0, %v670
        %v672 = vrot.slane %v626, %v671
        %v673 = vlaneseq
        %v674 = vshrl.u32 %v673, 7
        %v675 = vsub.s32 1, %v674
        %v676 = vrot.slane %v626, %v675
        %v677 = vlaneseq
        %v678 = vshrl.u32 %v677, 7
        %v679 = vsub.s32 2, %v678
        %v680 = vrot.slane %v626, %v679
        %v681 = vlaneseq
        %v682 = vshrl.u32 %v681, 7
        %v683 = vsub.s32 3, %v682
        %v684 = vrot.slane %v626, %v683
        %v685 = vlaneseq
        %v686 = vshrl.u32 %v685, 7
        %v687 = vsub.s32 4, %v686
        %v688 = vrot.slane %v626, %v687
        %v689 = vlaneseq
        %v690 = vshrl.u32 %v689, 7
        %v691 = vsub.s32 5, %v690
        %v692 = vrot.slane %v626, %v691
        %v693 = vlaneseq
        %v694 = vshrl.u32 %v693, 7
        %v695 = vsub.s32 6, %v694
        %v696 = vrot.slane %v626, %v695
        %v697 = vlaneseq
        %v698 = vshrl.u32 %v697, 7
        %v699 = vsub.s32 7, %v698
        %v700 = vrot.slane %v626, %v699
        %v701 = vlaneseq
        %v702 = vshrl.u32 %v701, 7
        %v703 = vsub.s32 0, %v702
        %v704 = vrot.slane %v629, %v703
        %v705 = vlaneseq
        %v706 = vshrl.u32 %v705, 7
        %v707 = vsub.s32 1, %v706
        %v708 = vrot.slane %v629, %v707
        %v709 = vlaneseq
        %v710 = vshrl.u32 %v709, 7
        %v711 = vsub.s32 2, %v710
        %v712 = vrot.slane %v629, %v711
        %v713 = vlaneseq
        %v714 = vshrl.u32 %v713, 7
        %v715 = vsub.s32 3, %v714
        %v716 = vrot.slane %v629, %v715
        %v717 = vlaneseq
        %v718 = vshrl.u32 %v717, 7
        %v719 = vsub.s32 4, %v718
        %v720 = vrot.slane %v629, %v719
        %v721 = vlaneseq
        %v722 = vshrl.u32 %v721, 7
        %v723 = vsub.s32 5, %v722
        %v724 = vrot.slane %v629, %v723
        %v725 = vlaneseq
        %v726 = vshrl.u32 %v725, 7
        %v727 = vsub.s32 6, %v726
        %v728 = vrot.slane %v629, %v727
        %v729 = vlaneseq
        %v730 = vshrl.u32 %v729, 7
        %v731 = vsub.s32 7, %v730
        %v732 = vrot.slane %v629, %v731
        %v733 = vlaneseq
        %v734 = vshrl.u32 %v733, 7
        %v735 = vsub.s32 0, %v734
        %v736 = vrot.slane %v632, %v735
        %v737 = vlaneseq
        %v738 = vshrl.u32 %v737, 7
        %v739 = vsub.s32 1, %v738
        %v740 = vrot.slane %v632, %v739
        %v741 = vlaneseq
        %v742 = vshrl.u32 %v741, 7
        %v743 = vsub.s32 2, %v742
        %v744 = vrot.slane %v632, %v743
        %v745 = vlaneseq
        %v746 = vshrl.u32 %v745, 7
        %v747 = vsub.s32 3, %v746
        %v748 = vrot.slane %v632, %v747
        %v749 = vlaneseq
        %v750 = vshrl.u32 %v749, 7
        %v751 = vsub.s32 4, %v750
        %v752 = vrot.slane %v632, %v751
        %v753 = vlaneseq
        %v754 = vshrl.u32 %v753, 7
        %v755 = vsub.s32 5, %v754
        %v756 = vrot.slane %v632, %v755
        %v757 = vlaneseq
        %v758 = vshrl.u32 %v757, 7
        %v759 = vsub.s32 6, %v758
        %v760 = vrot.slane %v632, %v759
        %v761 = vlaneseq
        %v762 = vshrl.u32 %v761, 7
        %v763 = vsub.s32 7, %v762
        %v764 = vrot.slane %v632, %v763
        %v765 = vcombine.low %v640, %v644
        %v766 = vcombine.low %v648, %v652
        %v767 = vcombine.low %v656, %v660
        %v768 = vcombine.low %v664, %v668
        %v770 = vunpack.c.l.s4 1966171168
        %v771 = vunpack.c.0.s8 %v770
        %v772 = vlaneseq
        %v773 = vshrl.u32 %v772, 7
        %v774 = vsub.s32 %v771, %v773
        %v775 = vrot.slane %v765, %v774
        %v777 = vunpack.c.l.s4 1966171168
        %v778 = vunpack.c.0.s8 %v777
        %v779 = vlaneseq
        %v780 = vshrl.u32 %v779, 7
        %v781 = vsub.s32 %v778, %v780
        %v782 = vrot.slane %v766, %v781
        %v784 = vunpack.c.l.s4 1966171168
        %v785 = vunpack.c.0.s8 %v784
        %v786 = vlaneseq
        %v787 = vshrl.u32 %v786, 7
        %v788 = vsub.s32 %v785, %v787
        %v789 = vrot.slane %v767, %v788
        %v791 = vunpack.c.l.s4 1966171168
        %v792 = vunpack.c.0.s8 %v791
        %v793 = vlaneseq
        %v794 = vshrl.u32 %v793, 7
        %v795 = vsub.s32 %v792, %v794
        %v796 = vrot.slane %v768, %v795
        %v797 = vcombine.low %v775, %v782
        %v798 = vcombine.low %v789, %v796
        %v800 = vunpack.c.l.s4 1966171168
        %v801 = vunpack.c.0.s8 %v800
        %v802 = vlaneseq
        %v803 = vshrl.u32 %v802, 7
        %v804 = vsub.s32 %v801, %v803
        %v805 = vrot.slane %v797, %v804
        %v807 = vunpack.c.l.s4 1966171168
        %v808 = vunpack.c.0.s8 %v807
        %v809 = vlaneseq
        %v810 = vshrl.u32 %v809, 7
        %v811 = vsub.s32 %v808, %v810
        %v812 = vrot.slane %v798, %v811
        %v813 = vcombine.low %v805, %v812
        %v814 = vcombine.low %v672, %v676
        %v815 = vcombine.low %v680, %v684
        %v816 = vcombine.low %v688, %v692
        %v817 = vcombine.low %v696, %v700
        %v819 = vunpack.c.l.s4 1966171168
        %v820 = vunpack.c.0.s8 %v819
        %v821 = vlaneseq
        %v822 = vshrl.u32 %v821, 7
        %v823 = vsub.s32 %v820, %v822
        %v824 = vrot.slane %v814, %v823
        %v826 = vunpack.c.l.s4 1966171168
        %v827 = vunpack.c.0.s8 %v826
        %v828 = vlaneseq
        %v829 = vshrl.u32 %v828, 7
        %v830 = vsub.s32 %v827, %v829
        %v831 = vrot.slane %v815, %v830
        %v833 = vunpack.c.l.s4 1966171168
        %v834 = vunpack.c.0.s8 %v833
        %v835 = vlaneseq
        %v836 = vshrl.u32 %v835, 7
        %v837 = vsub.s32 %v834, %v836
        %v838 = vrot.slane %v816, %v837
        %v840 = vunpack.c.l.s4 1966171168
        %v841 = vunpack.c.0.s8 %v840
        %v842 = vlaneseq
        %v843 = vshrl.u32 %v842, 7
        %v844 = vsub.s32 %v841, %v843
        %v845 = vrot.slane %v817, %v844
        %v846 = vcombine.low %v824, %v831
        %v847 = vcombine.low %v838, %v845
        %v849 = vunpack.c.l.s4 1966171168
        %v850 = vunpack.c.0.s8 %v849
        %v851 = vlaneseq
        %v852 = vshrl.u32 %v851, 7
        %v853 = vsub.s32 %v850, %v852
        %v854 = vrot.slane %v846, %v853
        %v856 = vunpack.c.l.s4 1966171168
        %v857 = vunpack.c.0.s8 %v856
        %v858 = vlaneseq
        %v859 = vshrl.u32 %v858, 7
        %v860 = vsub.s32 %v857, %v859
        %v861 = vrot.slane %v847, %v860
        %v862 = vcombine.low %v854, %v861
        %v863 = vcombine.low %v704, %v708
        %v864 = vcombine.low %v712, %v716
        %v865 = vcombine.low %v720, %v724
        %v866 = vcombine.low %v728, %v732
        %v868 = vunpack.c.l.s4 1966171168
        %v869 = vunpack.c.0.s8 %v868
        %v870 = vlaneseq
        %v871 = vshrl.u32 %v870, 7
        %v872 = vsub.s32 %v869, %v871
        %v873 = vrot.slane %v863, %v872
        %v875 = vunpack.c.l.s4 1966171168
        %v876 = vunpack.c.0.s8 %v875
        %v877 = vlaneseq
        %v878 = vshrl.u32 %v877, 7
        %v879 = vsub.s32 %v876, %v878
        %v880 = vrot.slane %v864, %v879
        %v882 = vunpack.c.l.s4 1966171168
        %v883 = vunpack.c.0.s8 %v882
        %v884 = vlaneseq
        %v885 = vshrl.u32 %v884, 7
        %v886 = vsub.s32 %v883, %v885
        %v887 = vrot.slane %v865, %v886
        %v889 = vunpack.c.l.s4 1966171168
        %v890 = vunpack.c.0.s8 %v889
        %v891 = vlaneseq
        %v892 = vshrl.u32 %v891, 7
        %v893 = vsub.s32 %v890, %v892
        %v894 = vrot.slane %v866, %v893
        %v895 = vcombine.low %v873, %v880
        %v896 = vcombine.low %v887, %v894
        %v898 = vunpack.c.l.s4 1966171168
        %v899 = vunpack.c.0.s8 %v898
        %v900 = vlaneseq
        %v901 = vshrl.u32 %v900, 7
        %v902 = vsub.s32 %v899, %v901
        %v903 = vrot.slane %v895, %v902
        %v905 = vunpack.c.l.s4 1966171168
        %v906 = vunpack.c.0.s8 %v905
        %v907 = vlaneseq
        %v908 = vshrl.u32 %v907, 7
        %v909 = vsub.s32 %v906, %v908
        %v910 = vrot.slane %v896, %v909
        %v911 = vcombine.low %v903, %v910
        %v912 = vcombine.low %v736, %v740
        %v913 = vcombine.low %v744, %v748
        %v914 = vcombine.low %v752, %v756
        %v915 = vcombine.low %v760, %v764
        %v917 = vunpack.c.l.s4 1966171168
        %v918 = vunpack.c.0.s8 %v917
        %v919 = vlaneseq
        %v920 = vshrl.u32 %v919, 7
        %v921 = vsub.s32 %v918, %v920
        %v922 = vrot.slane %v912, %v921
        %v924 = vunpack.c.l.s4 1966171168
        %v925 = vunpack.c.0.s8 %v924
        %v926 = vlaneseq
        %v927 = vshrl.u32 %v926, 7
        %v928 = vsub.s32 %v925, %v927
        %v929 = vrot.slane %v913, %v928
        %v931 = vunpack.c.l.s4 1966171168
        %v932 = vunpack.c.0.s8 %v931
        %v933 = vlaneseq
        %v934 = vshrl.u32 %v933, 7
        %v935 = vsub.s32 %v932, %v934
        %v936 = vrot.slane %v914, %v935
        %v938 = vunpack.c.l.s4 1966171168
        %v939 = vunpack.c.0.s8 %v938
        %v940 = vlaneseq
        %v941 = vshrl.u32 %v940, 7
        %v942 = vsub.s32 %v939, %v941
        %v943 = vrot.slane %v915, %v942
        %v944 = vcombine.low %v922, %v929
        %v945 = vcombine.low %v936, %v943
        %v947 = vunpack.c.l.s4 1966171168
        %v948 = vunpack.c.0.s8 %v947
        %v949 = vlaneseq
        %v950 = vshrl.u32 %v949, 7
        %v951 = vsub.s32 %v948, %v950
        %v952 = vrot.slane %v944, %v951
        %v954 = vunpack.c.l.s4 1966171168
        %v955 = vunpack.c.0.s8 %v954
        %v956 = vlaneseq
        %v957 = vshrl.u32 %v956, 7
        %v958 = vsub.s32 %v955, %v957
        %v959 = vrot.slane %v945, %v958
        %v960 = vcombine.low %v952, %v959
        %961 = vset.pattern.permute.xlu0 0
        %962 = vperm.xlu0 %961, %v813
        %v963 = vpop.permute.xlu0 %962
        %964 = vset.pattern.permute.xlu0 0
        %965 = vperm.xlu0 %964, %v862
        %v966 = vpop.permute.xlu0 %965
        %967 = vset.pattern.permute.xlu0 0
        %968 = vperm.xlu0 %967, %v911
        %v969 = vpop.permute.xlu0 %968
        %970 = vset.pattern.permute.xlu0 0
        %971 = vperm.xlu0 %970, %v960
        %v972 = vpop.permute.xlu0 %971
        %v973 = vlaneseq
        %v974 = vand.u32 %v973, 127
        %v975 = vlaneseq
        %v976 = vshrl.u32 %v975, 7
        %v977 = vsub.s32 %v974, %v976
        %v978 = vrot.slane %v963, %v977
        %v979 = vadd.s32 %v974, 4294967288
        %v980 = vlaneseq
        %v981 = vshrl.u32 %v980, 7
        %v982 = vsub.s32 %v979, %v981
        %v983 = vrot.slane %v966, %v982
        %vm984 = vcmask 130112
        %v985 = vsel %vm984, %v983, %v978
        %v986 = vadd.s32 %v974, 4294967280
        %v987 = vlaneseq
        %v988 = vshrl.u32 %v987, 7
        %v989 = vsub.s32 %v986, %v988
        %v990 = vrot.slane %v969, %v989
        %vm991 = vcmask 195712
        %v992 = vsel %vm991, %v990, %v985
        %v993 = vadd.s32 %v974, 4294967272
        %v994 = vlaneseq
        %v995 = vshrl.u32 %v994, 7
        %v996 = vsub.s32 %v993, %v995
        %v997 = vrot.slane %v972, %v996
        %vm998 = vcmask 261312
        %v999 = vsel %vm998, %v997, %v992
        %v1001 = vunpack.c.l.s4 1966171168
        %v1002 = vunpack.c.0.s8 %v1001
        %v1003 = vlaneseq
        %v1004 = vshrl.u32 %v1003, 7
        %v1005 = vsub.s32 %v1002, %v1004
        %v1006 = vrot.slane %v999, %v1005
        %v1008 = vunpack.c.l.s4 1966171168
        %v1009 = vunpack.c.0.s8 %v1008
        %v1010 = vlaneseq
        %v1011 = vshrl.u32 %v1010, 7
        %v1012 = vsub.s32 %v1009, %v1011
        %v1013 = vrot.slane %v1006, %v1012
        %v1015 = vadd.f32 %v615, %v1013
        %vm1016 = vcmask 253952
        %1017 = vst.msk [vmem:[#allocation2] sm:$0x1] %vm1016, %v1015
        // Predicated region
        $region113: #{tpu_custom_call.1} parent=79 // pred_check
          %p1018 = pneg %p609
        $region114: #{tpu_custom_call.1} parent=79 // pred_check_branch
          %1020 = sbr.rel (%p1018) target = $region116
        $region115: #{tpu_custom_call.1} parent=79 // pred_region
          %v1021 = vld [vmem:[#allocation2] sm:$0x1]
          %v1022 = vmul.f32 %v1021, 0.015625
          %v1023 = vld [vmem:[%s1] sm:$0xff]
          %v1024 = vld [vmem:[%s1 + $0x8] sm:$0xff]
          %v1025 = vld [vmem:[%s1 + $0x10] sm:$0xff]
          %v1026 = vld [vmem:[%s1 + $0x18] sm:$0xff]
          %v1027 = vld [vmem:[#allocation3] sm:$0x1]
          %vm1028 = vcmask 261120
          %v1030 = vsel %vm1028, %v1022, 0
          %1032 = vmatprep.subr.mxu0 0.0
          %1033 = vmatpush1.msra.mxu0 0.0
          %1034 = vmatprep.subr.mxu0 0.0
          %1035 = vmatpush1.msra.mxu0 0.0
          %1036 = vmatprep.subr.mxu0 0.0
          %1037 = vmatpush1.msra.mxu0 0.0
          %1038 = vmatprep.subr.mxu0 0.0
          %1039 = vmatpush1.msra.mxu0 0.0
          %1040 = vmatprep.subr.mxu0 0.0
          %1041 = vmatpush1.msra.mxu0 0.0
          %1042 = vmatprep.subr.mxu0 0.0
          %1043 = vmatpush1.msra.mxu0 0.0
          %1044 = vmatprep.subr.mxu0 0.0
          %1045 = vmatpush1.msra.mxu0 0.0
          %1046 = vmatprep.subr.mxu0 0.0
          %1047 = vmatpush1.msra.mxu0 0.0
          %1048 = vmatprep.subr.mxu0 0.0
          %1049 = vmatpush1.msra.mxu0 0.0
          %1050 = vmatprep.subr.mxu0 0.0
          %1051 = vmatpush1.msra.mxu0 0.0
          %1052 = vmatprep.subr.mxu0 0.0
          %1053 = vmatpush1.msra.mxu0 0.0
          %1054 = vmatprep.subr.mxu0 0.0
          %1055 = vmatpush1.msra.mxu0 0.0
          %1056 = vmatprep.subr.mxu0 0.0
          %1057 = vmatpush1.msra.mxu0 %v1026
          %1058 = vmatprep.subr.mxu0 0.0
          %1059 = vmatpush1.msra.mxu0 %v1025
          %1060 = vmatprep.subr.mxu0 0.0
          %1061 = vmatpush1.msra.mxu0 %v1024
          %1062 = vmatprep.subr.mxu0 0.0
          %1063 = vmatpush1.msra.mxu0 %v1023
          %1064 = vmatprep.subr.mxu0 0.0
          %1065 = vmatpush2.msra.mxu0 0.0
          %1066 = vmatprep.subr.mxu0 0.0
          %1067 = vmatpush2.msra.mxu0 0.0
          %1068 = vmatprep.subr.mxu0 0.0
          %1069 = vmatpush2.msra.mxu0 0.0
          %1070 = vmatprep.subr.mxu0 0.0
          %1071 = vmatpush2.msra.mxu0 0.0
          %1072 = vmatprep.subr.mxu0 0.0
          %1073 = vmatpush2.msra.mxu0 0.0
          %1074 = vmatprep.subr.mxu0 0.0
          %1075 = vmatpush2.msra.mxu0 0.0
          %1076 = vmatprep.subr.mxu0 0.0
          %1077 = vmatpush2.msra.mxu0 0.0
          %1078 = vmatprep.subr.mxu0 0.0
          %1079 = vmatpush2.msra.mxu0 0.0
          %1080 = vmatprep.subr.mxu0 0.0
          %1081 = vmatpush2.msra.mxu0 0.0
          %1082 = vmatprep.subr.mxu0 0.0
          %1083 = vmatpush2.msra.mxu0 0.0
          %1084 = vmatprep.subr.mxu0 0.0
          %1085 = vmatpush2.msra.mxu0 0.0
          %1086 = vmatprep.subr.mxu0 0.0
          %1087 = vmatpush2.msra.mxu0 0.0
          %1088 = vmatprep.subr.mxu0 0.0
          %1089 = vmatpush2.msra.mxu0 0.0
          %1090 = vmatprep.subr.mxu0 0.0
          %1091 = vmatpush2.msra.mxu0 0.0
          %1092 = vmatprep.subr.mxu0 0.0
          %1093 = vmatpush2.msra.mxu0 0.0
          %1094 = vmatprep.subr.mxu0 0.0
          %1095 = vmatpush2.msra.mxu0 0.0
          %1096 = vmatprep.mubr.f32.mxu0 0.0
          %1097 = vmatmul.mubr.f32.gmra.mxu0 %v1030
          %v1098 = vpop.f32.mrf.mxu0
          %v1099 = vadd.f32 %v1027, %v1098
          %v1100 = vpop.f32.mrf.mxu0
          %1101 = vdwg.mxu0
          %v1102 = vmax.f32 %v1099, 0.0
          %v1103 = vld [vmem:[#allocation6] sm:$0xf]
          %v1104 = vld [vmem:[#allocation8] sm:$0x1]
          %vm1105 = vcmask 31744
          %v1107 = vsel %vm1105, %v1102, 0
          %vm1109 = vcmask 1043456
          %v1111 = vsel %vm1109, %v1103, 0
          %1113 = vmatprep.subr.mxu0 0.0
          %1114 = vmatpush1.msra.mxu0 0.0
          %1115 = vmatprep.subr.mxu0 0.0
          %1116 = vmatpush1.msra.mxu0 0.0
          %1117 = vmatprep.subr.mxu0 0.0
          %1118 = vmatpush1.msra.mxu0 0.0
          %1119 = vmatprep.subr.mxu0 0.0
          %1120 = vmatpush1.msra.mxu0 0.0
          %1121 = vmatprep.subr.mxu0 0.0
          %1122 = vmatpush1.msra.mxu0 0.0
          %1123 = vmatprep.subr.mxu0 0.0
          %1124 = vmatpush1.msra.mxu0 0.0
          %1125 = vmatprep.subr.mxu0 0.0
          %1126 = vmatpush1.msra.mxu0 0.0
          %1127 = vmatprep.subr.mxu0 0.0
          %1128 = vmatpush1.msra.mxu0 0.0
          %1129 = vmatprep.subr.mxu0 0.0
          %1130 = vmatpush1.msra.mxu0 0.0
          %1131 = vmatprep.subr.mxu0 0.0
          %1132 = vmatpush1.msra.mxu0 0.0
          %1133 = vmatprep.subr.mxu0 0.0
          %1134 = vmatpush1.msra.mxu0 0.0
          %1135 = vmatprep.subr.mxu0 0.0
          %1136 = vmatpush1.msra.mxu0 0.0
          %1137 = vmatprep.subr.mxu0 0.0
          %1138 = vmatpush1.msra.mxu0 0.0
          %1139 = vmatprep.subr.mxu0 0.0
          %1140 = vmatpush1.msra.mxu0 0.0
          %1141 = vmatprep.subr.mxu0 0.0
          %1142 = vmatpush1.msra.mxu0 0.0
          %1143 = vmatprep.subr.mxu0 0.0
          %1144 = vmatpush1.msra.mxu0 %v1111
          %1145 = vmatprep.subr.mxu0 0.0
          %1146 = vmatpush2.msra.mxu0 0.0
          %1147 = vmatprep.subr.mxu0 0.0
          %1148 = vmatpush2.msra.mxu0 0.0
          %1149 = vmatprep.subr.mxu0 0.0
          %1150 = vmatpush2.msra.mxu0 0.0
          %1151 = vmatprep.subr.mxu0 0.0
          %1152 = vmatpush2.msra.mxu0 0.0
          %1153 = vmatprep.subr.mxu0 0.0
          %1154 = vmatpush2.msra.mxu0 0.0
          %1155 = vmatprep.subr.mxu0 0.0
          %1156 = vmatpush2.msra.mxu0 0.0
          %1157 = vmatprep.subr.mxu0 0.0
          %1158 = vmatpush2.msra.mxu0 0.0
          %1159 = vmatprep.subr.mxu0 0.0
          %1160 = vmatpush2.msra.mxu0 0.0
          %1161 = vmatprep.subr.mxu0 0.0
          %1162 = vmatpush2.msra.mxu0 0.0
          %1163 = vmatprep.subr.mxu0 0.0
          %1164 = vmatpush2.msra.mxu0 0.0
          %1165 = vmatprep.subr.mxu0 0.0
          %1166 = vmatpush2.msra.mxu0 0.0
          %1167 = vmatprep.subr.mxu0 0.0
          %1168 = vmatpush2.msra.mxu0 0.0
          %1169 = vmatprep.subr.mxu0 0.0
          %1170 = vmatpush2.msra.mxu0 0.0
          %1171 = vmatprep.subr.mxu0 0.0
          %1172 = vmatpush2.msra.mxu0 0.0
          %1173 = vmatprep.subr.mxu0 0.0
          %1174 = vmatpush2.msra.mxu0 0.0
          %1175 = vmatprep.subr.mxu0 0.0
          %1176 = vmatpush2.msra.mxu0 0.0
          %1177 = vmatprep.mubr.f32.mxu0 0.0
          %1178 = vmatmul.mubr.f32.gmra.mxu0 %v1107
          %v1179 = vpop.f32.mrf.mxu0
          %v1180 = vadd.f32 %v1104, %v1179
          %v1181 = vpop.f32.mrf.mxu0
          %1182 = vdwg.mxu0
          %v1183 = vmul.f32 %v1180, 0.5
          %v1184 = vtanh.pop %v1183
          %v1185 = vadd.f32 %v1184, 1.0
          %v1186 = vmul.f32 %v1185, 0.5
          %v1187 = vmul.f32 %v1022, %v1186
          %v1188 = vld [vmem:[%s5] sm:$0xff]
          %v1189 = vld [vmem:[%s5 + $0x8] sm:$0xff]
          %v1190 = vld [vmem:[%s5 + $0x10] sm:$0xff]
          %v1191 = vld [vmem:[%s5 + $0x18] sm:$0xff]
          %v1192 = vld [vmem:[#allocation9] sm:$0x1]
          %v1194 = vsel %vm1028, %v1187, 0
          %1196 = vmatprep.subr.mxu0 0.0
          %1197 = vmatpush1.msra.mxu0 0.0
          %1198 = vmatprep.subr.mxu0 0.0
          %1199 = vmatpush1.msra.mxu0 0.0
          %1200 = vmatprep.subr.mxu0 0.0
          %1201 = vmatpush1.msra.mxu0 0.0
          %1202 = vmatprep.subr.mxu0 0.0
          %1203 = vmatpush1.msra.mxu0 0.0
          %1204 = vmatprep.subr.mxu0 0.0
          %1205 = vmatpush1.msra.mxu0 0.0
          %1206 = vmatprep.subr.mxu0 0.0
          %1207 = vmatpush1.msra.mxu0 0.0
          %1208 = vmatprep.subr.mxu0 0.0
          %1209 = vmatpush1.msra.mxu0 0.0
          %1210 = vmatprep.subr.mxu0 0.0
          %1211 = vmatpush1.msra.mxu0 0.0
          %1212 = vmatprep.subr.mxu0 0.0
          %1213 = vmatpush1.msra.mxu0 0.0
          %1214 = vmatprep.subr.mxu0 0.0
          %1215 = vmatpush1.msra.mxu0 0.0
          %1216 = vmatprep.subr.mxu0 0.0
          %1217 = vmatpush1.msra.mxu0 0.0
          %1218 = vmatprep.subr.mxu0 0.0
          %1219 = vmatpush1.msra.mxu0 0.0
          %1220 = vmatprep.subr.mxu0 0.0
          %1221 = vmatpush1.msra.mxu0 %v1191
          %1222 = vmatprep.subr.mxu0 0.0
          %1223 = vmatpush1.msra.mxu0 %v1190
          %1224 = vmatprep.subr.mxu0 0.0
          %1225 = vmatpush1.msra.mxu0 %v1189
          %1226 = vmatprep.subr.mxu0 0.0
          %1227 = vmatpush1.msra.mxu0 %v1188
          %1228 = vmatprep.subr.mxu0 0.0
          %1229 = vmatpush2.msra.mxu0 0.0
          %1230 = vmatprep.subr.mxu0 0.0
          %1231 = vmatpush2.msra.mxu0 0.0
          %1232 = vmatprep.subr.mxu0 0.0
          %1233 = vmatpush2.msra.mxu0 0.0
          %1234 = vmatprep.subr.mxu0 0.0
          %1235 = vmatpush2.msra.mxu0 0.0
          %1236 = vmatprep.subr.mxu0 0.0
          %1237 = vmatpush2.msra.mxu0 0.0
          %1238 = vmatprep.subr.mxu0 0.0
          %1239 = vmatpush2.msra.mxu0 0.0
          %1240 = vmatprep.subr.mxu0 0.0
          %1241 = vmatpush2.msra.mxu0 0.0
          %1242 = vmatprep.subr.mxu0 0.0
          %1243 = vmatpush2.msra.mxu0 0.0
          %1244 = vmatprep.subr.mxu0 0.0
          %1245 = vmatpush2.msra.mxu0 0.0
          %1246 = vmatprep.subr.mxu0 0.0
          %1247 = vmatpush2.msra.mxu0 0.0
          %1248 = vmatprep.subr.mxu0 0.0
          %1249 = vmatpush2.msra.mxu0 0.0
          %1250 = vmatprep.subr.mxu0 0.0
          %1251 = vmatpush2.msra.mxu0 0.0
          %1252 = vmatprep.subr.mxu0 0.0
          %1253 = vmatpush2.msra.mxu0 0.0
          %1254 = vmatprep.subr.mxu0 0.0
          %1255 = vmatpush2.msra.mxu0 0.0
          %1256 = vmatprep.subr.mxu0 0.0
          %1257 = vmatpush2.msra.mxu0 0.0
          %1258 = vmatprep.subr.mxu0 0.0
          %1259 = vmatpush2.msra.mxu0 0.0
          %1260 = vmatprep.mubr.f32.mxu0 0.0
          %1261 = vmatmul.mubr.f32.gmra.mxu0 %v1194
          %v1262 = vpop.f32.mrf.mxu0
          %v1263 = vadd.f32 %v1192, %v1262
          %v1264 = vpop.f32.mrf.mxu0
          %1265 = vdwg.mxu0
          %v1266 = vmax.f32 %v1263, 0.0
          %v1267 = vld [vmem:[%s7] sm:$0xff]
          %v1268 = vld [vmem:[%s8] sm:$0x1]
          %vm1269 = vcmask 64512
          %v1271 = vsel %vm1269, %v1266, 0
          %1273 = vmatprep.subr.mxu0 0.0
          %1274 = vmatpush1.msra.mxu0 0.0
          %1275 = vmatprep.subr.mxu0 0.0
          %1276 = vmatpush1.msra.mxu0 0.0
          %1277 = vmatprep.subr.mxu0 0.0
          %1278 = vmatpush1.msra.mxu0 0.0
          %1279 = vmatprep.subr.mxu0 0.0
          %1280 = vmatpush1.msra.mxu0 0.0
          %1281 = vmatprep.subr.mxu0 0.0
          %1282 = vmatpush1.msra.mxu0 0.0
          %1283 = vmatprep.subr.mxu0 0.0
          %1284 = vmatpush1.msra.mxu0 0.0
          %1285 = vmatprep.subr.mxu0 0.0
          %1286 = vmatpush1.msra.mxu0 0.0
          %1287 = vmatprep.subr.mxu0 0.0
          %1288 = vmatpush1.msra.mxu0 0.0
          %1289 = vmatprep.subr.mxu0 0.0
          %1290 = vmatpush1.msra.mxu0 0.0
          %1291 = vmatprep.subr.mxu0 0.0
          %1292 = vmatpush1.msra.mxu0 0.0
          %1293 = vmatprep.subr.mxu0 0.0
          %1294 = vmatpush1.msra.mxu0 0.0
          %1295 = vmatprep.subr.mxu0 0.0
          %1296 = vmatpush1.msra.mxu0 0.0
          %1297 = vmatprep.subr.mxu0 0.0
          %1298 = vmatpush1.msra.mxu0 0.0
          %1299 = vmatprep.subr.mxu0 0.0
          %1300 = vmatpush1.msra.mxu0 0.0
          %1301 = vmatprep.subr.mxu0 0.0
          %1302 = vmatpush1.msra.mxu0 0.0
          %1303 = vmatprep.subr.mxu0 0.0
          %1304 = vmatpush1.msra.mxu0 %v1267
          %1305 = vmatprep.subr.mxu0 0.0
          %1306 = vmatpush2.msra.mxu0 0.0
          %1307 = vmatprep.subr.mxu0 0.0
          %1308 = vmatpush2.msra.mxu0 0.0
          %1309 = vmatprep.subr.mxu0 0.0
          %1310 = vmatpush2.msra.mxu0 0.0
          %1311 = vmatprep.subr.mxu0 0.0
          %1312 = vmatpush2.msra.mxu0 0.0
          %1313 = vmatprep.subr.mxu0 0.0
          %1314 = vmatpush2.msra.mxu0 0.0
          %1315 = vmatprep.subr.mxu0 0.0
          %1316 = vmatpush2.msra.mxu0 0.0
          %1317 = vmatprep.subr.mxu0 0.0
          %1318 = vmatpush2.msra.mxu0 0.0
          %1319 = vmatprep.subr.mxu0 0.0
          %1320 = vmatpush2.msra.mxu0 0.0
          %1321 = vmatprep.subr.mxu0 0.0
          %1322 = vmatpush2.msra.mxu0 0.0
          %1323 = vmatprep.subr.mxu0 0.0
          %1324 = vmatpush2.msra.mxu0 0.0
          %1325 = vmatprep.subr.mxu0 0.0
          %1326 = vmatpush2.msra.mxu0 0.0
          %1327 = vmatprep.subr.mxu0 0.0
          %1328 = vmatpush2.msra.mxu0 0.0
          %1329 = vmatprep.subr.mxu0 0.0
          %1330 = vmatpush2.msra.mxu0 0.0
          %1331 = vmatprep.subr.mxu0 0.0
          %1332 = vmatpush2.msra.mxu0 0.0
          %1333 = vmatprep.subr.mxu0 0.0
          %1334 = vmatpush2.msra.mxu0 0.0
          %1335 = vmatprep.subr.mxu0 0.0
          %1336 = vmatpush2.msra.mxu0 0.0
          %1337 = vmatprep.mubr.f32.mxu0 0.0
          %1338 = vmatmul.mubr.f32.gmra.mxu0 %v1271
          %v1339 = vpop.f32.mrf.mxu0
          %v1340 = vadd.f32 %v1268, %v1339
          %v1341 = vpop.f32.mrf.mxu0
          %1342 = vdwg.mxu0
          %v1343 = vmul.f32 %v1340, 0.5
          %v1344 = vtanh.pop %v1343
          %v1345 = vadd.f32 %v1344, 1.0
          %v1346 = vmul.f32 %v1345, 0.5
          %v1347 = vmul.f32 %v1187, %v1346
          %v1348 = vld [vmem:[#allocation11] sm:$0xff]
          %v1349 = vld [vmem:[#allocation11 + $0x8] sm:$0xff]
          %v1350 = vld [vmem:[#allocation11 + $0x10] sm:$0xff]
          %v1351 = vld [vmem:[#allocation11 + $0x18] sm:$0xff]
          %v1352 = vld [vmem:[#allocation11 + $0x20] sm:$0xff]
          %v1353 = vld [vmem:[#allocation11 + $0x28] sm:$0xff]
          %v1354 = vld [vmem:[#allocation11 + $0x30] sm:$0xff]
          %v1355 = vld [vmem:[#allocation11 + $0x38] sm:$0xff]
          %v1356 = vld [vmem:[#allocation11 + $0x40] sm:$0xff]
          %v1357 = vld [vmem:[#allocation11 + $0x48] sm:$0xff]
          %v1358 = vld [vmem:[#allocation11 + $0x50] sm:$0xff]
          %v1359 = vld [vmem:[#allocation11 + $0x58] sm:$0xff]
          %v1360 = vld [vmem:[#allocation11 + $0x60] sm:$0xff]
          %v1361 = vld [vmem:[#allocation11 + $0x68] sm:$0xff]
          %v1362 = vld [vmem:[#allocation11 + $0x70] sm:$0xff]
          %v1363 = vld [vmem:[#allocation11 + $0x78] sm:$0xff]
          %v1364 = vld [vmem:[%s10] sm:$0xf]
          %v1366 = vlaneseq
          %v1367 = vshrl.u32 %v1366, 7
          %v1368 = vsub.s32 0, %v1367
          %v1369 = vrot.slane %v1364, %v1368
          %v1370 = vlaneseq
          %v1371 = vshrl.u32 %v1370, 7
          %v1372 = vsub.s32 1, %v1371
          %v1373 = vrot.slane %v1364, %v1372
          %v1374 = vlaneseq
          %v1375 = vshrl.u32 %v1374, 7
          %v1376 = vsub.s32 2, %v1375
          %v1377 = vrot.slane %v1364, %v1376
          %v1378 = vlaneseq
          %v1379 = vshrl.u32 %v1378, 7
          %v1380 = vsub.s32 3, %v1379
          %v1381 = vrot.slane %v1364, %v1380
          %v1387 = vsel %vm1028, %v1347, 0
          %1389 = vmatprep.subr.mxu0 0.0
          %1390 = vmatpush1.msra.mxu0 0.0
          %1391 = vmatprep.subr.mxu0 0.0
          %1392 = vmatpush1.msra.mxu0 0.0
          %1393 = vmatprep.subr.mxu0 0.0
          %1394 = vmatpush1.msra.mxu0 0.0
          %1395 = vmatprep.subr.mxu0 0.0
          %1396 = vmatpush1.msra.mxu0 0.0
          %1397 = vmatprep.subr.mxu0 0.0
          %1398 = vmatpush1.msra.mxu0 0.0
          %1399 = vmatprep.subr.mxu0 0.0
          %1400 = vmatpush1.msra.mxu0 0.0
          %1401 = vmatprep.subr.mxu0 0.0
          %1402 = vmatpush1.msra.mxu0 0.0
          %1403 = vmatprep.subr.mxu0 0.0
          %1404 = vmatpush1.msra.mxu0 0.0
          %1405 = vmatprep.subr.mxu0 0.0
          %1406 = vmatpush1.msra.mxu0 0.0
          %1407 = vmatprep.subr.mxu0 0.0
          %1408 = vmatpush1.msra.mxu0 0.0
          %1409 = vmatprep.subr.mxu0 0.0
          %1410 = vmatpush1.msra.mxu0 0.0
          %1411 = vmatprep.subr.mxu0 0.0
          %1412 = vmatpush1.msra.mxu0 0.0
          %1413 = vmatprep.subr.mxu0 %v1361
          %1414 = vmatpush1.msra.mxu0 %v1360
          %1415 = vmatprep.subr.mxu0 %v1357
          %1416 = vmatpush1.msra.mxu0 %v1356
          %1417 = vmatprep.subr.mxu0 %v1353
          %1418 = vmatpush1.msra.mxu0 %v1352
          %1419 = vmatprep.subr.mxu0 %v1349
          %1420 = vmatpush1.msra.mxu0 %v1348
          %1421 = vmatprep.subr.mxu0 0.0
          %1422 = vmatpush2.msra.mxu0 0.0
          %1423 = vmatprep.subr.mxu0 0.0
          %1424 = vmatpush2.msra.mxu0 0.0
          %1425 = vmatprep.subr.mxu0 0.0
          %1426 = vmatpush2.msra.mxu0 0.0
          %1427 = vmatprep.subr.mxu0 0.0
          %1428 = vmatpush2.msra.mxu0 0.0
          %1429 = vmatprep.subr.mxu0 0.0
          %1430 = vmatpush2.msra.mxu0 0.0
          %1431 = vmatprep.subr.mxu0 0.0
          %1432 = vmatpush2.msra.mxu0 0.0
          %1433 = vmatprep.subr.mxu0 0.0
          %1434 = vmatpush2.msra.mxu0 0.0
          %1435 = vmatprep.subr.mxu0 0.0
          %1436 = vmatpush2.msra.mxu0 0.0
          %1437 = vmatprep.subr.mxu0 0.0
          %1438 = vmatpush2.msra.mxu0 0.0
          %1439 = vmatprep.subr.mxu0 0.0
          %1440 = vmatpush2.msra.mxu0 0.0
          %1441 = vmatprep.subr.mxu0 0.0
          %1442 = vmatpush2.msra.mxu0 0.0
          %1443 = vmatprep.subr.mxu0 0.0
          %1444 = vmatpush2.msra.mxu0 0.0
          %1445 = vmatprep.subr.mxu0 0.0
          %1446 = vmatpush2.msra.mxu0 0.0
          %1447 = vmatprep.subr.mxu0 0.0
          %1448 = vmatpush2.msra.mxu0 0.0
          %1449 = vmatprep.subr.mxu0 0.0
          %1450 = vmatpush2.msra.mxu0 0.0
          %1451 = vmatprep.subr.mxu0 0.0
          %1452 = vmatpush2.msra.mxu0 0.0
          %1453 = vmatprep.mubr.f32.mxu0 0.0
          %1454 = vmatmul.mubr.f32.gmra.mxu0 %v1387
          %v1455 = vpop.f32.mrf.mxu0
          %v1456 = vadd.f32 %v1369, %v1455
          %v1457 = vpop.f32.mrf.mxu0
          %v1458 = vadd.f32 %v1373, %v1457
          %1459 = vdwg.mxu0
          %1460 = vmatprep.subr.mxu0 0.0
          %1461 = vmatpush1.msra.mxu0 0.0
          %1462 = vmatprep.subr.mxu0 0.0
          %1463 = vmatpush1.msra.mxu0 0.0
          %1464 = vmatprep.subr.mxu0 0.0
          %1465 = vmatpush1.msra.mxu0 0.0
          %1466 = vmatprep.subr.mxu0 0.0
          %1467 = vmatpush1.msra.mxu0 0.0
          %1468 = vmatprep.subr.mxu0 0.0
          %1469 = vmatpush1.msra.mxu0 0.0
          %1470 = vmatprep.subr.mxu0 0.0
          %1471 = vmatpush1.msra.mxu0 0.0
          %1472 = vmatprep.subr.mxu0 0.0
          %1473 = vmatpush1.msra.mxu0 0.0
          %1474 = vmatprep.subr.mxu0 0.0
          %1475 = vmatpush1.msra.mxu0 0.0
          %1476 = vmatprep.subr.mxu0 0.0
          %1477 = vmatpush1.msra.mxu0 0.0
          %1478 = vmatprep.subr.mxu0 0.0
          %1479 = vmatpush1.msra.mxu0 0.0
          %1480 = vmatprep.subr.mxu0 0.0
          %1481 = vmatpush1.msra.mxu0 0.0
          %1482 = vmatprep.subr.mxu0 0.0
          %1483 = vmatpush1.msra.mxu0 0.0
          %1484 = vmatprep.subr.mxu0 %v1363
          %1485 = vmatpush1.msra.mxu0 %v1362
          %1486 = vmatprep.subr.mxu0 %v1359
          %1487 = vmatpush1.msra.mxu0 %v1358
          %1488 = vmatprep.subr.mxu0 %v1355
          %1489 = vmatpush1.msra.mxu0 %v1354
          %1490 = vmatprep.subr.mxu0 %v1351
          %1491 = vmatpush1.msra.mxu0 %v1350
          %1492 = vmatprep.subr.mxu0 0.0
          %1493 = vmatpush2.msra.mxu0 0.0
          %1494 = vmatprep.subr.mxu0 0.0
          %1495 = vmatpush2.msra.mxu0 0.0
          %1496 = vmatprep.subr.mxu0 0.0
          %1497 = vmatpush2.msra.mxu0 0.0
          %1498 = vmatprep.subr.mxu0 0.0
          %1499 = vmatpush2.msra.mxu0 0.0
          %1500 = vmatprep.subr.mxu0 0.0
          %1501 = vmatpush2.msra.mxu0 0.0
          %1502 = vmatprep.subr.mxu0 0.0
          %1503 = vmatpush2.msra.mxu0 0.0
          %1504 = vmatprep.subr.mxu0 0.0
          %1505 = vmatpush2.msra.mxu0 0.0
          %1506 = vmatprep.subr.mxu0 0.0
          %1507 = vmatpush2.msra.mxu0 0.0
          %1508 = vmatprep.subr.mxu0 0.0
          %1509 = vmatpush2.msra.mxu0 0.0
          %1510 = vmatprep.subr.mxu0 0.0
          %1511 = vmatpush2.msra.mxu0 0.0
          %1512 = vmatprep.subr.mxu0 0.0
          %1513 = vmatpush2.msra.mxu0 0.0
          %1514 = vmatprep.subr.mxu0 0.0
          %1515 = vmatpush2.msra.mxu0 0.0
          %1516 = vmatprep.subr.mxu0 0.0
          %1517 = vmatpush2.msra.mxu0 0.0
          %1518 = vmatprep.subr.mxu0 0.0
          %1519 = vmatpush2.msra.mxu0 0.0
          %1520 = vmatprep.subr.mxu0 0.0
          %1521 = vmatpush2.msra.mxu0 0.0
          %1522 = vmatprep.subr.mxu0 0.0
          %1523 = vmatpush2.msra.mxu0 0.0
          %1524 = vmatprep.mubr.f32.mxu0 0.0
          %1525 = vmatmul.mubr.f32.gmra.mxu0 %v1387
          %v1526 = vpop.f32.mrf.mxu0
          %v1527 = vadd.f32 %v1377, %v1526
          %v1528 = vpop.f32.mrf.mxu0
          %v1529 = vadd.f32 %v1381, %v1528
          %1530 = vdwg.mxu0
          %v1531 = vmax.f32 %v1456, 0.0
          %v1532 = vmax.f32 %v1458, 0.0
          %v1533 = vmax.f32 %v1527, 0.0
          %v1534 = vmax.f32 %v1529, 0.0
          %v1535 = vld [vmem:[#allocation12] sm:$0xff]
          %v1536 = vld [vmem:[#allocation12 + $0x8] sm:$0xff]
          %v1537 = vld [vmem:[#allocation12 + $0x10] sm:$0xff]
          %v1538 = vld [vmem:[#allocation12 + $0x18] sm:$0xff]
          %v1539 = vld [vmem:[#allocation12 + $0x20] sm:$0xff]
          %v1540 = vld [vmem:[#allocation12 + $0x28] sm:$0xff]
          %v1541 = vld [vmem:[#allocation12 + $0x30] sm:$0xff]
          %v1542 = vld [vmem:[#allocation12 + $0x38] sm:$0xff]
          %v1543 = vld [vmem:[#allocation12 + $0x40] sm:$0xff]
          %v1544 = vld [vmem:[#allocation12 + $0x48] sm:$0xff]
          %v1545 = vld [vmem:[#allocation12 + $0x50] sm:$0xff]
          %v1546 = vld [vmem:[#allocation12 + $0x58] sm:$0xff]
          %v1547 = vld [vmem:[#allocation12 + $0x60] sm:$0xff]
          %v1548 = vld [vmem:[#allocation12 + $0x68] sm:$0xff]
          %v1549 = vld [vmem:[#allocation12 + $0x70] sm:$0xff]
          %v1550 = vld [vmem:[#allocation12 + $0x78] sm:$0xff]
          %v1551 = vld [vmem:[#allocation12 + $0x80] sm:$0xff]
          %v1552 = vld [vmem:[#allocation12 + $0x88] sm:$0xff]
          %v1553 = vld [vmem:[#allocation12 + $0x90] sm:$0xff]
          %v1554 = vld [vmem:[#allocation12 + $0x98] sm:$0xff]
          %v1555 = vld [vmem:[#allocation12 + $0xa0] sm:$0xff]
          %v1556 = vld [vmem:[#allocation12 + $0xa8] sm:$0xff]
          %v1557 = vld [vmem:[#allocation12 + $0xb0] sm:$0xff]
          %v1558 = vld [vmem:[#allocation12 + $0xb8] sm:$0xff]
          %v1559 = vld [vmem:[#allocation12 + $0xc0] sm:$0xff]
          %v1560 = vld [vmem:[#allocation12 + $0xc8] sm:$0xff]
          %v1561 = vld [vmem:[#allocation12 + $0xd0] sm:$0xff]
          %v1562 = vld [vmem:[#allocation12 + $0xd8] sm:$0xff]
          %v1563 = vld [vmem:[#allocation12 + $0xe0] sm:$0xff]
          %v1564 = vld [vmem:[#allocation12 + $0xe8] sm:$0xff]
          %v1565 = vld [vmem:[#allocation12 + $0xf0] sm:$0xff]
          %v1566 = vld [vmem:[#allocation12 + $0xf8] sm:$0xff]
          %v1567 = vld [vmem:[#allocation12 + $0x100] sm:$0xff]
          %v1568 = vld [vmem:[#allocation12 + $0x108] sm:$0xff]
          %v1569 = vld [vmem:[#allocation12 + $0x110] sm:$0xff]
          %v1570 = vld [vmem:[#allocation12 + $0x118] sm:$0xff]
          %v1571 = vld [vmem:[#allocation12 + $0x120] sm:$0xff]
          %v1572 = vld [vmem:[#allocation12 + $0x128] sm:$0xff]
          %v1573 = vld [vmem:[#allocation12 + $0x130] sm:$0xff]
          %v1574 = vld [vmem:[#allocation12 + $0x138] sm:$0xff]
          %v1575 = vld [vmem:[#allocation12 + $0x140] sm:$0xff]
          %v1576 = vld [vmem:[#allocation12 + $0x148] sm:$0xff]
          %v1577 = vld [vmem:[#allocation12 + $0x150] sm:$0xff]
          %v1578 = vld [vmem:[#allocation12 + $0x158] sm:$0xff]
          %v1579 = vld [vmem:[#allocation12 + $0x160] sm:$0xff]
          %v1580 = vld [vmem:[#allocation12 + $0x168] sm:$0xff]
          %v1581 = vld [vmem:[#allocation12 + $0x170] sm:$0xff]
          %v1582 = vld [vmem:[#allocation12 + $0x178] sm:$0xff]
          %v1583 = vld [vmem:[#allocation12 + $0x180] sm:$0xff]
          %v1584 = vld [vmem:[#allocation12 + $0x188] sm:$0xff]
          %v1585 = vld [vmem:[#allocation12 + $0x190] sm:$0xff]
          %v1586 = vld [vmem:[#allocation12 + $0x198] sm:$0xff]
          %v1587 = vld [vmem:[#allocation12 + $0x1a0] sm:$0xff]
          %v1588 = vld [vmem:[#allocation12 + $0x1a8] sm:$0xff]
          %v1589 = vld [vmem:[#allocation12 + $0x1b0] sm:$0xff]
          %v1590 = vld [vmem:[#allocation12 + $0x1b8] sm:$0xff]
          %v1591 = vld [vmem:[#allocation12 + $0x1c0] sm:$0xff]
          %v1592 = vld [vmem:[#allocation12 + $0x1c8] sm:$0xff]
          %v1593 = vld [vmem:[#allocation12 + $0x1d0] sm:$0xff]
          %v1594 = vld [vmem:[#allocation12 + $0x1d8] sm:$0xff]
          %v1595 = vld [vmem:[#allocation12 + $0x1e0] sm:$0xff]
          %v1596 = vld [vmem:[#allocation12 + $0x1e8] sm:$0xff]
          %v1597 = vld [vmem:[#allocation12 + $0x1f0] sm:$0xff]
          %v1598 = vld [vmem:[#allocation12 + $0x1f8] sm:$0xff]
          %v1599 = vld [vmem:[#allocation12 + $0x200] sm:$0xff]
          %v1600 = vld [vmem:[#allocation12 + $0x208] sm:$0xff]
          %v1601 = vld [vmem:[#allocation12 + $0x210] sm:$0xff]
          %v1602 = vld [vmem:[#allocation12 + $0x218] sm:$0xff]
          %v1603 = vld [vmem:[#allocation12 + $0x220] sm:$0xff]
          %v1604 = vld [vmem:[#allocation12 + $0x228] sm:$0xff]
          %v1605 = vld [vmem:[#allocation12 + $0x230] sm:$0xff]
          %v1606 = vld [vmem:[#allocation12 + $0x238] sm:$0xff]
          %v1607 = vld [vmem:[#allocation12 + $0x240] sm:$0xff]
          %v1608 = vld [vmem:[#allocation12 + $0x248] sm:$0xff]
          %v1609 = vld [vmem:[#allocation12 + $0x250] sm:$0xff]
          %v1610 = vld [vmem:[#allocation12 + $0x258] sm:$0xff]
          %v1611 = vld [vmem:[#allocation12 + $0x260] sm:$0xff]
          %v1612 = vld [vmem:[#allocation12 + $0x268] sm:$0xff]
          %v1613 = vld [vmem:[#allocation12 + $0x270] sm:$0xff]
          %v1614 = vld [vmem:[#allocation12 + $0x278] sm:$0xff]
          %v1615 = vld [vmem:[#allocation12 + $0x280] sm:$0xff]
          %v1616 = vld [vmem:[#allocation12 + $0x288] sm:$0xff]
          %v1617 = vld [vmem:[#allocation12 + $0x290] sm:$0xff]
          %v1618 = vld [vmem:[#allocation12 + $0x298] sm:$0xff]
          %v1619 = vld [vmem:[#allocation12 + $0x2a0] sm:$0xff]
          %v1620 = vld [vmem:[#allocation12 + $0x2a8] sm:$0xff]
          %v1621 = vld [vmem:[#allocation12 + $0x2b0] sm:$0xff]
          %v1622 = vld [vmem:[#allocation12 + $0x2b8] sm:$0xff]
          %v1623 = vld [vmem:[#allocation12 + $0x2c0] sm:$0xff]
          %v1624 = vld [vmem:[#allocation12 + $0x2c8] sm:$0xff]
          %v1625 = vld [vmem:[#allocation12 + $0x2d0] sm:$0xff]
          %v1626 = vld [vmem:[#allocation12 + $0x2d8] sm:$0xff]
          %v1627 = vld [vmem:[#allocation12 + $0x2e0] sm:$0xff]
          %v1628 = vld [vmem:[#allocation12 + $0x2e8] sm:$0xff]
          %v1629 = vld [vmem:[#allocation12 + $0x2f0] sm:$0xff]
          %v1630 = vld [vmem:[#allocation12 + $0x2f8] sm:$0xff]
          %v1631 = vld [vmem:[#allocation12 + $0x300] sm:$0xff]
          %v1632 = vld [vmem:[#allocation12 + $0x308] sm:$0xff]
          %v1633 = vld [vmem:[#allocation12 + $0x310] sm:$0xff]
          %v1634 = vld [vmem:[#allocation12 + $0x318] sm:$0xff]
          %v1635 = vld [vmem:[#allocation12 + $0x320] sm:$0xff]
          %v1636 = vld [vmem:[#allocation12 + $0x328] sm:$0xff]
          %v1637 = vld [vmem:[#allocation12 + $0x330] sm:$0xff]
          %v1638 = vld [vmem:[#allocation12 + $0x338] sm:$0xff]
          %v1639 = vld [vmem:[#allocation12 + $0x340] sm:$0xff]
          %v1640 = vld [vmem:[#allocation12 + $0x348] sm:$0xff]
          %v1641 = vld [vmem:[#allocation12 + $0x350] sm:$0xff]
          %v1642 = vld [vmem:[#allocation12 + $0x358] sm:$0xff]
          %v1643 = vld [vmem:[#allocation12 + $0x360] sm:$0xff]
          %v1644 = vld [vmem:[#allocation12 + $0x368] sm:$0xff]
          %v1645 = vld [vmem:[#allocation12 + $0x370] sm:$0xff]
          %v1646 = vld [vmem:[#allocation12 + $0x378] sm:$0xff]
          %v1647 = vld [vmem:[#allocation12 + $0x380] sm:$0xff]
          %v1648 = vld [vmem:[#allocation12 + $0x388] sm:$0xff]
          %v1649 = vld [vmem:[#allocation12 + $0x390] sm:$0xff]
          %v1650 = vld [vmem:[#allocation12 + $0x398] sm:$0xff]
          %v1651 = vld [vmem:[#allocation12 + $0x3a0] sm:$0xff]
          %v1652 = vld [vmem:[#allocation12 + $0x3a8] sm:$0xff]
          %v1653 = vld [vmem:[#allocation12 + $0x3b0] sm:$0xff]
          %v1654 = vld [vmem:[#allocation12 + $0x3b8] sm:$0xff]
          %v1655 = vld [vmem:[#allocation12 + $0x3c0] sm:$0xff]
          %v1656 = vld [vmem:[#allocation12 + $0x3c8] sm:$0xff]
          %v1657 = vld [vmem:[#allocation12 + $0x3d0] sm:$0xff]
          %v1658 = vld [vmem:[#allocation12 + $0x3d8] sm:$0xff]
          %v1659 = vld [vmem:[#allocation12 + $0x3e0] sm:$0xff]
          %v1660 = vld [vmem:[#allocation12 + $0x3e8] sm:$0xff]
          %v1661 = vld [vmem:[#allocation12 + $0x3f0] sm:$0xff]
          %v1662 = vld [vmem:[#allocation12 + $0x3f8] sm:$0xff]
          %v1663 = vld [vmem:[%s12] sm:$0x3]
          %v1665 = vlaneseq
          %v1666 = vshrl.u32 %v1665, 7
          %v1667 = vsub.s32 0, %v1666
          %v1668 = vrot.slane %v1663, %v1667
          %v1669 = vlaneseq
          %v1670 = vshrl.u32 %v1669, 7
          %v1671 = vsub.s32 1, %v1670
          %v1672 = vrot.slane %v1663, %v1671
          %1675 = vmatprep.subr.mxu0 %v1566
          %1676 = vmatpush1.msra.mxu0 %v1565
          %1677 = vmatprep.subr.mxu0 %v1564
          %1678 = vmatpush1.msra.mxu0 %v1563
          %1679 = vmatprep.subr.mxu0 %v1562
          %1680 = vmatpush1.msra.mxu0 %v1561
          %1681 = vmatprep.subr.mxu0 %v1560
          %1682 = vmatpush1.msra.mxu0 %v1559
          %1683 = vmatprep.subr.mxu0 %v1558
          %1684 = vmatpush1.msra.mxu0 %v1557
          %1685 = vmatprep.subr.mxu0 %v1556
          %1686 = vmatpush1.msra.mxu0 %v1555
          %1687 = vmatprep.subr.mxu0 %v1554
          %1688 = vmatpush1.msra.mxu0 %v1553
          %1689 = vmatprep.subr.mxu0 %v1552
          %1690 = vmatpush1.msra.mxu0 %v1551
          %1691 = vmatprep.subr.mxu0 %v1550
          %1692 = vmatpush1.msra.mxu0 %v1549
          %1693 = vmatprep.subr.mxu0 %v1548
          %1694 = vmatpush1.msra.mxu0 %v1547
          %1695 = vmatprep.subr.mxu0 %v1546
          %1696 = vmatpush1.msra.mxu0 %v1545
          %1697 = vmatprep.subr.mxu0 %v1544
          %1698 = vmatpush1.msra.mxu0 %v1543
          %1699 = vmatprep.subr.mxu0 %v1542
          %1700 = vmatpush1.msra.mxu0 %v1541
          %1701 = vmatprep.subr.mxu0 %v1540
          %1702 = vmatpush1.msra.mxu0 %v1539
          %1703 = vmatprep.subr.mxu0 %v1538
          %1704 = vmatpush1.msra.mxu0 %v1537
          %1705 = vmatprep.subr.mxu0 %v1536
          %1706 = vmatpush1.msra.mxu0 %v1535
          %1707 = vmatprep.subr.mxu0 %v1598
          %1708 = vmatpush2.msra.mxu0 %v1597
          %1709 = vmatprep.subr.mxu0 %v1596
          %1710 = vmatpush2.msra.mxu0 %v1595
          %1711 = vmatprep.subr.mxu0 %v1594
          %1712 = vmatpush2.msra.mxu0 %v1593
          %1713 = vmatprep.subr.mxu0 %v1592
          %1714 = vmatpush2.msra.mxu0 %v1591
          %1715 = vmatprep.subr.mxu0 %v1590
          %1716 = vmatpush2.msra.mxu0 %v1589
          %1717 = vmatprep.subr.mxu0 %v1588
          %1718 = vmatpush2.msra.mxu0 %v1587
          %1719 = vmatprep.subr.mxu0 %v1586
          %1720 = vmatpush2.msra.mxu0 %v1585
          %1721 = vmatprep.subr.mxu0 %v1584
          %1722 = vmatpush2.msra.mxu0 %v1583
          %1723 = vmatprep.subr.mxu0 %v1582
          %1724 = vmatpush2.msra.mxu0 %v1581
          %1725 = vmatprep.subr.mxu0 %v1580
          %1726 = vmatpush2.msra.mxu0 %v1579
          %1727 = vmatprep.subr.mxu0 %v1578
          %1728 = vmatpush2.msra.mxu0 %v1577
          %1729 = vmatprep.subr.mxu0 %v1576
          %1730 = vmatpush2.msra.mxu0 %v1575
          %1731 = vmatprep.subr.mxu0 %v1574
          %1732 = vmatpush2.msra.mxu0 %v1573
          %1733 = vmatprep.subr.mxu0 %v1572
          %1734 = vmatpush2.msra.mxu0 %v1571
          %1735 = vmatprep.subr.mxu0 %v1570
          %1736 = vmatpush2.msra.mxu0 %v1569
          %1737 = vmatprep.subr.mxu0 %v1568
          %1738 = vmatpush2.msra.mxu0 %v1567
          %1739 = vmatprep.mubr.f32.mxu0 %v1532
          %1740 = vmatmul.mubr.f32.gmra.mxu0 %v1531
          %v1741 = vpop.f32.mrf.mxu0
          %v1742 = vadd.f32 %v1668, %v1741
          %v1743 = vpop.f32.mrf.mxu0
          %v1744 = vadd.f32 %v1672, %v1743
          %1745 = vdwg.mxu0
          %1746 = vmatprep.subr.mxu0 %v1630
          %1747 = vmatpush1.msra.mxu0 %v1629
          %1748 = vmatprep.subr.mxu0 %v1628
          %1749 = vmatpush1.msra.mxu0 %v1627
          %1750 = vmatprep.subr.mxu0 %v1626
          %1751 = vmatpush1.msra.mxu0 %v1625
          %1752 = vmatprep.subr.mxu0 %v1624
          %1753 = vmatpush1.msra.mxu0 %v1623
          %1754 = vmatprep.subr.mxu0 %v1622
          %1755 = vmatpush1.msra.mxu0 %v1621
          %1756 = vmatprep.subr.mxu0 %v1620
          %1757 = vmatpush1.msra.mxu0 %v1619
          %1758 = vmatprep.subr.mxu0 %v1618
          %1759 = vmatpush1.msra.mxu0 %v1617
          %1760 = vmatprep.subr.mxu0 %v1616
          %1761 = vmatpush1.msra.mxu0 %v1615
          %1762 = vmatprep.subr.mxu0 %v1614
          %1763 = vmatpush1.msra.mxu0 %v1613
          %1764 = vmatprep.subr.mxu0 %v1612
          %1765 = vmatpush1.msra.mxu0 %v1611
          %1766 = vmatprep.subr.mxu0 %v1610
          %1767 = vmatpush1.msra.mxu0 %v1609
          %1768 = vmatprep.subr.mxu0 %v1608
          %1769 = vmatpush1.msra.mxu0 %v1607
          %1770 = vmatprep.subr.mxu0 %v1606
          %1771 = vmatpush1.msra.mxu0 %v1605
          %1772 = vmatprep.subr.mxu0 %v1604
          %1773 = vmatpush1.msra.mxu0 %v1603
          %1774 = vmatprep.subr.mxu0 %v1602
          %1775 = vmatpush1.msra.mxu0 %v1601
          %1776 = vmatprep.subr.mxu0 %v1600
          %1777 = vmatpush1.msra.mxu0 %v1599
          %1778 = vmatprep.subr.mxu0 %v1662
          %1779 = vmatpush2.msra.mxu0 %v1661
          %1780 = vmatprep.subr.mxu0 %v1660
          %1781 = vmatpush2.msra.mxu0 %v1659
          %1782 = vmatprep.subr.mxu0 %v1658
          %1783 = vmatpush2.msra.mxu0 %v1657
          %1784 = vmatprep.subr.mxu0 %v1656
          %1785 = vmatpush2.msra.mxu0 %v1655
          %1786 = vmatprep.subr.mxu0 %v1654
          %1787 = vmatpush2.msra.mxu0 %v1653
          %1788 = vmatprep.subr.mxu0 %v1652
          %1789 = vmatpush2.msra.mxu0 %v1651
          %1790 = vmatprep.subr.mxu0 %v1650
          %1791 = vmatpush2.msra.mxu0 %v1649
          %1792 = vmatprep.subr.mxu0 %v1648
          %1793 = vmatpush2.msra.mxu0 %v1647
          %1794 = vmatprep.subr.mxu0 %v1646
          %1795 = vmatpush2.msra.mxu0 %v1645
          %1796 = vmatprep.subr.mxu0 %v1644
          %1797 = vmatpush2.msra.mxu0 %v1643
          %1798 = vmatprep.subr.mxu0 %v1642
          %1799 = vmatpush2.msra.mxu0 %v1641
          %1800 = vmatprep.subr.mxu0 %v1640
          %1801 = vmatpush2.msra.mxu0 %v1639
          %1802 = vmatprep.subr.mxu0 %v1638
          %1803 = vmatpush2.msra.mxu0 %v1637
          %1804 = vmatprep.subr.mxu0 %v1636
          %1805 = vmatpush2.msra.mxu0 %v1635
          %1806 = vmatprep.subr.mxu0 %v1634
          %1807 = vmatpush2.msra.mxu0 %v1633
          %1808 = vmatprep.subr.mxu0 %v1632
          %1809 = vmatpush2.msra.mxu0 %v1631
          %1810 = vmatprep.mubr.f32.mxu0 %v1534
          %1811 = vmatmul.mubr.f32.gmra.mxu0 %v1533
          %v1812 = vpop.f32.mrf.mxu0
          %v1813 = vadd.f32 %v1742, %v1812
          %v1814 = vpop.f32.mrf.mxu0
          %v1815 = vadd.f32 %v1744, %v1814
          %1816 = vdwg.mxu0
          %v1817 = vmax.f32 %v1813, 0.0
          %v1818 = vmax.f32 %v1815, 0.0
          %v1819 = vld [vmem:[#allocation14] sm:$0xff]
          %v1820 = vld [vmem:[#allocation14 + $0x8] sm:$0xff]
          %v1821 = vld [vmem:[#allocation14 + $0x10] sm:$0xff]
          %v1822 = vld [vmem:[#allocation14 + $0x18] sm:$0xff]
          %v1823 = vld [vmem:[#allocation14 + $0x20] sm:$0xff]
          %v1824 = vld [vmem:[#allocation14 + $0x28] sm:$0xff]
          %v1825 = vld [vmem:[#allocation14 + $0x30] sm:$0xff]
          %v1826 = vld [vmem:[#allocation14 + $0x38] sm:$0xff]
          %v1827 = vld [vmem:[#allocation14 + $0x40] sm:$0xff]
          %v1828 = vld [vmem:[#allocation14 + $0x48] sm:$0xff]
          %v1829 = vld [vmem:[#allocation14 + $0x50] sm:$0xff]
          %v1830 = vld [vmem:[#allocation14 + $0x58] sm:$0xff]
          %v1831 = vld [vmem:[#allocation14 + $0x60] sm:$0xff]
          %v1832 = vld [vmem:[#allocation14 + $0x68] sm:$0xff]
          %v1833 = vld [vmem:[#allocation14 + $0x70] sm:$0xff]
          %v1834 = vld [vmem:[#allocation14 + $0x78] sm:$0xff]
          %v1835 = vld [vmem:[#allocation14 + $0x80] sm:$0xff]
          %v1836 = vld [vmem:[#allocation14 + $0x88] sm:$0xff]
          %v1837 = vld [vmem:[#allocation14 + $0x90] sm:$0xff]
          %v1838 = vld [vmem:[#allocation14 + $0x98] sm:$0xff]
          %v1839 = vld [vmem:[#allocation14 + $0xa0] sm:$0xff]
          %v1840 = vld [vmem:[#allocation14 + $0xa8] sm:$0xff]
          %v1841 = vld [vmem:[#allocation14 + $0xb0] sm:$0xff]
          %v1842 = vld [vmem:[#allocation14 + $0xb8] sm:$0xff]
          %v1843 = vld [vmem:[#allocation14 + $0xc0] sm:$0xff]
          %v1844 = vld [vmem:[#allocation14 + $0xc8] sm:$0xff]
          %v1845 = vld [vmem:[#allocation14 + $0xd0] sm:$0xff]
          %v1846 = vld [vmem:[#allocation14 + $0xd8] sm:$0xff]
          %v1847 = vld [vmem:[#allocation14 + $0xe0] sm:$0xff]
          %v1848 = vld [vmem:[#allocation14 + $0xe8] sm:$0xff]
          %v1849 = vld [vmem:[#allocation14 + $0xf0] sm:$0xff]
          %v1850 = vld [vmem:[#allocation14 + $0xf8] sm:$0xff]
          %v1851 = vld [vmem:[%s14] sm:$0x1]
          %1852 = vmatprep.subr.mxu0 0.0
          %1853 = vmatpush1.msra.mxu0 %v1834
          %1854 = vmatprep.subr.mxu0 0.0
          %1855 = vmatpush1.msra.mxu0 %v1833
          %1856 = vmatprep.subr.mxu0 0.0
          %1857 = vmatpush1.msra.mxu0 %v1832
          %1858 = vmatprep.subr.mxu0 0.0
          %1859 = vmatpush1.msra.mxu0 %v1831
          %1860 = vmatprep.subr.mxu0 0.0
          %1861 = vmatpush1.msra.mxu0 %v1830
          %1862 = vmatprep.subr.mxu0 0.0
          %1863 = vmatpush1.msra.mxu0 %v1829
          %1864 = vmatprep.subr.mxu0 0.0
          %1865 = vmatpush1.msra.mxu0 %v1828
          %1866 = vmatprep.subr.mxu0 0.0
          %1867 = vmatpush1.msra.mxu0 %v1827
          %1868 = vmatprep.subr.mxu0 0.0
          %1869 = vmatpush1.msra.mxu0 %v1826
          %1870 = vmatprep.subr.mxu0 0.0
          %1871 = vmatpush1.msra.mxu0 %v1825
          %1872 = vmatprep.subr.mxu0 0.0
          %1873 = vmatpush1.msra.mxu0 %v1824
          %1874 = vmatprep.subr.mxu0 0.0
          %1875 = vmatpush1.msra.mxu0 %v1823
          %1876 = vmatprep.subr.mxu0 0.0
          %1877 = vmatpush1.msra.mxu0 %v1822
          %1878 = vmatprep.subr.mxu0 0.0
          %1879 = vmatpush1.msra.mxu0 %v1821
          %1880 = vmatprep.subr.mxu0 0.0
          %1881 = vmatpush1.msra.mxu0 %v1820
          %1882 = vmatprep.subr.mxu0 0.0
          %1883 = vmatpush1.msra.mxu0 %v1819
          %1884 = vmatprep.subr.mxu0 0.0
          %1885 = vmatpush2.msra.mxu0 %v1850
          %1886 = vmatprep.subr.mxu0 0.0
          %1887 = vmatpush2.msra.mxu0 %v1849
          %1888 = vmatprep.subr.mxu0 0.0
          %1889 = vmatpush2.msra.mxu0 %v1848
          %1890 = vmatprep.subr.mxu0 0.0
          %1891 = vmatpush2.msra.mxu0 %v1847
          %1892 = vmatprep.subr.mxu0 0.0
          %1893 = vmatpush2.msra.mxu0 %v1846
          %1894 = vmatprep.subr.mxu0 0.0
          %1895 = vmatpush2.msra.mxu0 %v1845
          %1896 = vmatprep.subr.mxu0 0.0
          %1897 = vmatpush2.msra.mxu0 %v1844
          %1898 = vmatprep.subr.mxu0 0.0
          %1899 = vmatpush2.msra.mxu0 %v1843
          %1900 = vmatprep.subr.mxu0 0.0
          %1901 = vmatpush2.msra.mxu0 %v1842
          %1902 = vmatprep.subr.mxu0 0.0
          %1903 = vmatpush2.msra.mxu0 %v1841
          %1904 = vmatprep.subr.mxu0 0.0
          %1905 = vmatpush2.msra.mxu0 %v1840
          %1906 = vmatprep.subr.mxu0 0.0
          %1907 = vmatpush2.msra.mxu0 %v1839
          %1908 = vmatprep.subr.mxu0 0.0
          %1909 = vmatpush2.msra.mxu0 %v1838
          %1910 = vmatprep.subr.mxu0 0.0
          %1911 = vmatpush2.msra.mxu0 %v1837
          %1912 = vmatprep.subr.mxu0 0.0
          %1913 = vmatpush2.msra.mxu0 %v1836
          %1914 = vmatprep.subr.mxu0 0.0
          %1915 = vmatpush2.msra.mxu0 %v1835
          %1916 = vmatprep.mubr.f32.mxu0 %v1818
          %1917 = vmatmul.mubr.f32.gmra.mxu0 %v1817
          %v1918 = vpop.f32.mrf.mxu0
          %v1919 = vadd.f32 %v1851, %v1918
          %v1920 = vpop.f32.mrf.mxu0
          %1921 = vdwg.mxu0
          %1922 = vst [vmem:[%s600] sm:$0x1] %v1919
        $region116: #{tpu_custom_call.1} parent=79 // pred_fallthru
          _
        %s1923 = sand.u32 %s375, 1
        %s1924 = scalar_lea.sflag [#allocation5], %s1923
        %s1925 = sand.u32 %s375, 1
        %s1926 = scalar_lea.vmem [#allocation15], %s1925
        // Predicated region
        $region117: #{tpu_custom_call.1} parent=79 // pred_check
          %p1927 = pneg %p385
        $region118: #{tpu_custom_call.1} parent=79 // pred_check_branch
          %1929 = sbr.rel (%p1927) target = $region120
        $region119: #{tpu_custom_call.1} parent=79 // pred_region
          %s1931 = ssub.s32 16, 16
          %1932 = vsyncadd %s1924, %s1931
          %s1933 = smul.addr %s37, 16
          %s1934 = scalar_lea.hbm %s15, %s1933
          %s1936 = sshll.u32 %s1926, 4
          %s1937 = int_to_ptr.vmem [resolvable:$true] %s1936
          %1939 = dma.vmem_to_hbm [thread:$0]  %s1937, 16, %s1934, %s1924
        $region120: #{tpu_custom_call.1} parent=79 // pred_fallthru
          _
      $region80: #{tpu_custom_call.1} parent=5 // pred_fallthru
        _
      %p1940 = scmp.le.s32.totalorder 2, %s28
      // Predicated region
      $region121: #{tpu_custom_call.1} parent=5 // pred_check
        %p1941 = pneg %p1940
      $region122: #{tpu_custom_call.1} parent=5 // pred_check_branch
        %1943 = sbr.rel (%p1941) target = $region124
      $region123: #{tpu_custom_call.1} parent=5 // pred_region
        %s1944 = ssub.s32 %s28, 2
        // Predicated region
        $region125: #{tpu_custom_call.1} parent=123 // pred_check
          %p1945 = pneg %p391
        $region126: #{tpu_custom_call.1} parent=123 // pred_check_branch
          %1947 = sbr.rel (%p1945) target = $region128
        $region127: #{tpu_custom_call.1} parent=123 // pred_region
          %s1948 = sand.u32 %s376, 1
          %s1949 = scalar_lea.sflag [#allocation5], %s1948
          %s1950 = sand.u32 %s376, 1
          %s1951 = scalar_lea.vmem [#allocation15], %s1950
          %1952 = dma.done %s1949, 16
        $region128: #{tpu_custom_call.1} parent=123 // pred_fallthru
          _
      $region124: #{tpu_custom_call.1} parent=5 // pred_fallthru
        _
    $region6: #{tpu_custom_call.1} parent=1 // loop_footer
      %s32 = sadd.s32 1, %s28
    $region7: #{tpu_custom_call.1} parent=1 // loop_footer_branch
      %27 = sbr.rel target = $region3
    $region8: #{tpu_custom_call.1} parent=1 // loop_exit
      _
    %1953 = vsyncpa [#allocation4], 1
    %s1954 = scalar_lea.sflag [#allocation4], 1
    %1955 = vsyncpa %s1954, 1
    %1956 = vsyncpa [#allocation7], 1
    %1957 = vsyncpa [#allocation10], 1
    %1958 = vsyncpa [#allocation13], 1
    %1959 = vsyncpa [#allocation5], 1
    %s1960 = scalar_lea.sflag [#allocation5], 1
    %1961 = vsyncpa %s1960, 1

// kernel: tpu_custom_call.1
$region0: #{tpu_custom_call.1}
  #allocation0 [shape = 'u32[]', space=smem, size = 0x4, offset = 0x4, fixed_abs, tag = 'smem constant byte address 0x4 - core index']
  #allocation1 [shape = 'u32[144,128]{1,0:T(1,128)}', space=vmem, size = 0x12000, scoped, tag = 'internal scratch']
  #allocation2 [shape = 'f32[1,32]{1,0:T(1,128)}', space=vmem, size = 0x200, scoped, tag = 'scratch operand']
  %s0 = inlined_call_operand.vmem [shape: f32[2,32,64], index: 0, kind: input, shape index: {}]
  %s1 = inlined_call_operand.vmem [shape: f32[32,4], index: 1, kind: input, shape index: {}]
  %s2 = inlined_call_operand.hbm [shape: f32[1,4], index: 2, kind: input, shape index: {}]
  %s3 = inlined_call_operand.hbm [shape: f32[4,32], index: 3, kind: input, shape index: {}]
  %s4 = inlined_call_operand.hbm [shape: f32[1,32], index: 4, kind: input, shape index: {}]
  %s5 = inlined_call_operand.vmem [shape: f32[32,8], index: 5, kind: input, shape index: {}]
  %s6 = inlined_call_operand.hbm [shape: f32[1,8], index: 6, kind: input, shape index: {}]
  %s7 = inlined_call_operand.vmem [shape: f32[8,32], index: 7, kind: input, shape index: {}]
  %s8 = inlined_call_operand.vmem [shape: f32[1,32], index: 8, kind: input, shape index: {}]
  %s9 = inlined_call_operand.hbm [shape: f32[32,512], index: 9, kind: input, shape index: {}]
  %s10 = inlined_call_operand.vmem [shape: f32[1,512], index: 10, kind: input, shape index: {}]
  %s11 = inlined_call_operand.hbm [shape: f32[512,256], index: 11, kind: input, shape index: {}]
  %s12 = inlined_call_operand.vmem [shape: f32[1,256], index: 12, kind: input, shape index: {}]
  %s13 = inlined_call_operand.hbm [shape: f32[256,128], index: 13, kind: input, shape index: {}]
  %s14 = inlined_call_operand.vmem [shape: f32[1,128], index: 14, kind: input, shape index: {}]
  %s15 = inlined_call_operand.hbm [shape: f32[2,1,128], index: 15, kind: output, shape index: {}]
  %s16 = sld [smem:[#allocation0]]
  $region129: #{tpu_custom_call.1} parent=0
    _
  %s18 = ssub.s32 1, %s16
  %s19 = scalar_select 0, %s18, %s16
  $region1: #{tpu_custom_call.1} parent=0
    #allocation3 [shape = 'u8[512]{0}', space=vmem, size = 0x400, scoped, tag = 'input window, operand 2, single buffered']
    #allocation4 [shape = 's32[2]{0}', space=sflag, size = 0x8, scoped, tag = 'scoped memory for tpu_custom_call.1']
    #allocation5 [shape = 's32[2]{0}', space=sflag, size = 0x8, scoped, tag = 'scoped memory for tpu_custom_call.1']
    #allocation6 [shape = 'u8[2048]{0}', space=vmem, size = 0x800, scoped, tag = 'input window, operand 3, single buffered']
    #allocation7 [shape = 's32[1]{0}', space=sflag, size = 0x4, scoped, tag = 'scoped memory for tpu_custom_call.1']
    #allocation8 [shape = 'u8[512]{0}', space=vmem, size = 0x400, scoped, tag = 'input window, operand 4, single buffered']
    #allocation9 [shape = 'u8[512]{0}', space=vmem, size = 0x400, scoped, tag = 'input window, operand 6, single buffered']
    #allocation10 [shape = 's32[1]{0}', space=sflag, size = 0x4, scoped, tag = 'scoped memory for tpu_custom_call.1']
    #allocation11 [shape = 'u8[65536]{0}', space=vmem, size = 0x10000, scoped, tag = 'input window, operand 9, single buffered']
    #allocation12 [shape = 'u8[524288]{0}', space=vmem, size = 0x80000, scoped, tag = 'input window, operand 11, single buffered']
    #allocation13 [shape = 's32[1]{0}', space=sflag, size = 0x4, scoped, tag = 'scoped memory for tpu_custom_call.1']
    #allocation14 [shape = 'u8[131072]{0}', space=vmem, size = 0x20000, scoped, tag = 'input window, operand 13, single buffered']
    #allocation15 [shape = 'u8[1024]{0}', space=vmem, size = 0x400, scoped, tag = 'output window, operand 0']
    %20 = vsyncpa [#allocation4], 0
    %21 = vsyncpa [#allocation7], 0
    %22 = vsyncpa [#allocation10], 0
    %23 = vsyncpa [#allocation13], 0
    %24 = vsyncpa [#allocation5], 0
    %s25 = scalar_lea.sflag [#allocation5], 1
    %26 = vsyncpa %s25, 0
    loop: start=0, step=1, limit=4
    $region2: #{tpu_custom_call.1} parent=1 // loop_pre_header
      _
    $region3: #{tpu_custom_call.1} parent=1 // loop_header
      %s28 = sphi 0, %s32
      %p29 = scmp.ge.s32.totalorder %s28, 4
      %s35 = sphi 0, %s47
      %s36 = sphi 0, %s43
      %s37 = sphi 0, %s35
      %s38 = sphi 0, %s36
      %s39 = sphi 0, %s37
      %s40 = sphi 0, %s38
      %s52 = sphi 0, %s54
      %s55 = sphi 0, %s52
      %s56 = sphi 0, %s55
      %s72 = sphi 0, %s56
      %s76 = sphi 0, %s76
      %s78 = sphi 0, %s76
      %s79 = sphi 0, %s78
      %s93 = sphi 0, %s79
      %s97 = sphi 0, %s97
      %s99 = sphi 0, %s97
      %s100 = sphi 0, %s99
      %s114 = sphi 0, %s100
      %s118 = sphi 0, %s118
      %s120 = sphi 0, %s118
      %s121 = sphi 0, %s120
      %s135 = sphi 0, %s121
      %s139 = sphi 0, %s139
      %s141 = sphi 0, %s139
      %s142 = sphi 0, %s141
      %s156 = sphi 0, %s142
      %s160 = sphi 0, %s160
      %s162 = sphi 0, %s160
      %s163 = sphi 0, %s162
      %s177 = sphi 0, %s163
      %s181 = sphi 0, %s181
      %s183 = sphi 0, %s181
      %s184 = sphi 0, %s183
      %s198 = sphi 0, %s184
      %s202 = sphi 0, %s202
      %s204 = sphi 0, %s202
      %s205 = sphi 0, %s204
      %s219 = sphi 0, %s205
      %s223 = sphi 0, %s223
      %s225 = sphi 0, %s223
      %s226 = sphi 0, %s225
      %s240 = sphi 0, %s226
      %s244 = sphi 0, %s244
      %s246 = sphi 0, %s244
      %s247 = sphi 0, %s246
      %s261 = sphi 0, %s247
      %s265 = sphi 0, %s265
      %s267 = sphi 0, %s265
      %s268 = sphi 0, %s267
      %s282 = sphi 0, %s268
      %s286 = sphi 0, %s286
      %s288 = sphi 0, %s286
      %s289 = sphi 0, %s288
      %s303 = sphi 0, %s289
      %s307 = sphi 0, %s307
      %s309 = sphi 0, %s307
      %s310 = sphi 0, %s309
      %s324 = sphi 0, %s310
      %s328 = sphi 0, %s328
      %s330 = sphi 0, %s328
      %s331 = sphi 0, %s330
      %s345 = sphi 0, %s331
      %s349 = sphi 0, %s349
      %s351 = sphi 0, %s349
      %s352 = sphi 0, %s351
      %s366 = sphi 0, %s352
      %s372 = sphi 0, %s374
      %s375 = sphi 0, %s372
      %s376 = sphi 0, %s375
      %s392 = sphi 0, %s376
    $region4: #{tpu_custom_call.1} parent=1 // loop_header_branch
      %31 = sbr.rel (%p29) target = $region8
    $region5: #{tpu_custom_call.1} parent=1 // loop_body
      %s33 = ssub.s32 %s28, 1
      %s34 = ssub.s32 %s28, 2
      %s41 = sadd.s32 1, %s36
      %p42 = scmp.ge.s32.totalorder %s41, 1
      %s43 = scalar_select %p42, 0, %s41
      %s44 = sadd.s32 1, %s35
      %s45 = scalar_select %p42, %s44, %s35
      %p46 = scmp.ge.s32.totalorder %s45, 2
      %s47 = scalar_select %p46, 0, %s45
      %s48 = ssub.s32 %s35, %s47
      %s49 = ssub.s32 %s36, %s43
      %s50 = sor.u32 %s48, %s49
      %p51 = scmp.eq.s32.totalorder %s50, 0
      %s53 = sadd.s32 %s52, 1
      %s54 = scalar_select %p51, %s52, %s53
      %p57 = pneg %p51
      %p58 = scmp.eq.s32.totalorder %s28, 1
      %p59 = por %p57, %p58
      %p60 = scmp.ne.s32.totalorder %s52, %s55
      %p61 = scmp.eq.s32.totalorder %s28, 0
      %p62 = por %p60, %p61
      %p63 = scmp.ne.s32.totalorder %s52, %s55
      %p64 = scmp.eq.s32.totalorder %s33, 1
      %p65 = por %p63, %p64
      %p66 = scmp.ne.s32.totalorder %s55, %s56
      %p67 = scmp.eq.s32.totalorder %s33, 0
      %p68 = por %p66, %p67
      %p69 = scmp.ne.s32.totalorder %s55, %s56
      %p70 = scmp.eq.s32.totalorder %s34, 1
      %p71 = por %p69, %p70
      %p73 = scmp.ne.s32.totalorder %s56, %s72
      %p74 = scmp.eq.s32.totalorder %s34, 0
      %p75 = por %p73, %p74
      %s77 = sadd.s32 %s76, 1
      %p80 = scmp.eq.s32.totalorder %s28, 1
      %p81 = scmp.ne.s32.totalorder %s76, %s78
      %p82 = scmp.eq.s32.totalorder %s28, 0
      %p83 = por %p81, %p82
      %p84 = scmp.ne.s32.totalorder %s76, %s78
      %p85 = scmp.eq.s32.totalorder %s33, 1
      %p86 = por %p84, %p85
      %p87 = scmp.ne.s32.totalorder %s78, %s79
      %p88 = scmp.eq.s32.totalorder %s33, 0
      %p89 = por %p87, %p88
      %p90 = scmp.ne.s32.totalorder %s78, %s79
      %p91 = scmp.eq.s32.totalorder %s34, 1
      %p92 = por %p90, %p91
      %p94 = scmp.ne.s32.totalorder %s79, %s93
      %p95 = scmp.eq.s32.totalorder %s34, 0
      %p96 = por %p94, %p95
      %s98 = sadd.s32 %s97, 1
      %p101 = scmp.eq.s32.totalorder %s28, 1
      %p102 = scmp.ne.s32.totalorder %s97, %s99
      %p103 = scmp.eq.s32.totalorder %s28, 0
      %p104 = por %p102, %p103
      %p105 = scmp.ne.s32.totalorder %s97, %s99
      %p106 = scmp.eq.s32.totalorder %s33, 1
      %p107 = por %p105, %p106
      %p108 = scmp.ne.s32.totalorder %s99, %s100
      %p109 = scmp.eq.s32.totalorder %s33, 0
      %p110 = por %p108, %p109
      %p111 = scmp.ne.s32.totalorder %s99, %s100
      %p112 = scmp.eq.s32.totalorder %s34, 1
      %p113 = por %p111, %p112
      %p115 = scmp.ne.s32.totalorder %s100, %s114
      %p116 = scmp.eq.s32.totalorder %s34, 0
      %p117 = por %p115, %p116
      %s119 = sadd.s32 %s118, 1
      %p122 = scmp.eq.s32.totalorder %s28, 1
      %p123 = scmp.ne.s32.totalorder %s118, %s120
      %p124 = scmp.eq.s32.totalorder %s28, 0
      %p125 = por %p123, %p124
      %p126 = scmp.ne.s32.totalorder %s118, %s120
      %p127 = scmp.eq.s32.totalorder %s33, 1
      %p128 = por %p126, %p127
      %p129 = scmp.ne.s32.totalorder %s120, %s121
      %p130 = scmp.eq.s32.totalorder %s33, 0
      %p131 = por %p129, %p130
      %p132 = scmp.ne.s32.totalorder %s120, %s121
      %p133 = scmp.eq.s32.totalorder %s34, 1
      %p134 = por %p132, %p133
      %p136 = scmp.ne.s32.totalorder %s121, %s135
      %p137 = scmp.eq.s32.totalorder %s34, 0
      %p138 = por %p136, %p137
      %s140 = sadd.s32 %s139, 1
      %p143 = scmp.eq.s32.totalorder %s28, 1
      %p144 = scmp.ne.s32.totalorder %s139, %s141
      %p145 = scmp.eq.s32.totalorder %s28, 0
      %p146 = por %p144, %p145
      %p147 = scmp.ne.s32.totalorder %s139, %s141
      %p148 = scmp.eq.s32.totalorder %s33, 1
      %p149 = por %p147, %p148
      %p150 = scmp.ne.s32.totalorder %s141, %s142
      %p151 = scmp.eq.s32.totalorder %s33, 0
      %p152 = por %p150, %p151
      %p153 = scmp.ne.s32.totalorder %s141, %s142
      %p154 = scmp.eq.s32.totalorder %s34, 1
      %p155 = por %p153, %p154
      %p157 = scmp.ne.s32.totalorder %s142, %s156
      %p158 = scmp.eq.s32.totalorder %s34, 0
      %p159 = por %p157, %p158
      %s161 = sadd.s32 %s160, 1
      %p164 = scmp.eq.s32.totalorder %s28, 1
      %p165 = scmp.ne.s32.totalorder %s160, %s162
      %p166 = scmp.eq.s32.totalorder %s28, 0
      %p167 = por %p165, %p166
      %p168 = scmp.ne.s32.totalorder %s160, %s162
      %p169 = scmp.eq.s32.totalorder %s33, 1
      %p170 = por %p168, %p169
      %p171 = scmp.ne.s32.totalorder %s162, %s163
      %p172 = scmp.eq.s32.totalorder %s33, 0
      %p173 = por %p171, %p172
      %p174 = scmp.ne.s32.totalorder %s162, %s163
      %p175 = scmp.eq.s32.totalorder %s34, 1
      %p176 = por %p174, %p175
      %p178 = scmp.ne.s32.totalorder %s163, %s177
      %p179 = scmp.eq.s32.totalorder %s34, 0
      %p180 = por %p178, %p179
      %s182 = sadd.s32 %s181, 1
      %p185 = scmp.eq.s32.totalorder %s28, 1
      %p186 = scmp.ne.s32.totalorder %s181, %s183
      %p187 = scmp.eq.s32.totalorder %s28, 0
      %p188 = por %p186, %p187
      %p189 = scmp.ne.s32.totalorder %s181, %s183
      %p190 = scmp.eq.s32.totalorder %s33, 1
      %p191 = por %p189, %p190
      %p192 = scmp.ne.s32.totalorder %s183, %s184
      %p193 = scmp.eq.s32.totalorder %s33, 0
      %p194 = por %p192, %p193
      %p195 = scmp.ne.s32.totalorder %s183, %s184
      %p196 = scmp.eq.s32.totalorder %s34, 1
      %p197 = por %p195, %p196
      %p199 = scmp.ne.s32.totalorder %s184, %s198
      %p200 = scmp.eq.s32.totalorder %s34, 0
      %p201 = por %p199, %p200
      %s203 = sadd.s32 %s202, 1
      %p206 = scmp.eq.s32.totalorder %s28, 1
      %p207 = scmp.ne.s32.totalorder %s202, %s204
      %p208 = scmp.eq.s32.totalorder %s28, 0
      %p209 = por %p207, %p208
      %p210 = scmp.ne.s32.totalorder %s202, %s204
      %p211 = scmp.eq.s32.totalorder %s33, 1
      %p212 = por %p210, %p211
      %p213 = scmp.ne.s32.totalorder %s204, %s205
      %p214 = scmp.eq.s32.totalorder %s33, 0
      %p215 = por %p213, %p214
      %p216 = scmp.ne.s32.totalorder %s204, %s205
      %p217 = scmp.eq.s32.totalorder %s34, 1
      %p218 = por %p216, %p217
      %p220 = scmp.ne.s32.totalorder %s205, %s219
      %p221 = scmp.eq.s32.totalorder %s34, 0
      %p222 = por %p220, %p221
      %s224 = sadd.s32 %s223, 1
      %p227 = scmp.eq.s32.totalorder %s28, 1
      %p228 = scmp.ne.s32.totalorder %s223, %s225
      %p229 = scmp.eq.s32.totalorder %s28, 0
      %p230 = por %p228, %p229
      %p231 = scmp.ne.s32.totalorder %s223, %s225
      %p232 = scmp.eq.s32.totalorder %s33, 1
      %p233 = por %p231, %p232
      %p234 = scmp.ne.s32.totalorder %s225, %s226
      %p235 = scmp.eq.s32.totalorder %s33, 0
      %p236 = por %p234, %p235
      %p237 = scmp.ne.s32.totalorder %s225, %s226
      %p238 = scmp.eq.s32.totalorder %s34, 1
      %p239 = por %p237, %p238
      %p241 = scmp.ne.s32.totalorder %s226, %s240
      %p242 = scmp.eq.s32.totalorder %s34, 0
      %p243 = por %p241, %p242
      %s245 = sadd.s32 %s244, 1
      %p248 = scmp.eq.s32.totalorder %s28, 1
      %p249 = scmp.ne.s32.totalorder %s244, %s246
      %p250 = scmp.eq.s32.totalorder %s28, 0
      %p251 = por %p249, %p250
      %p252 = scmp.ne.s32.totalorder %s244, %s246
      %p253 = scmp.eq.s32.totalorder %s33, 1
      %p254 = por %p252, %p253
      %p255 = scmp.ne.s32.totalorder %s246, %s247
      %p256 = scmp.eq.s32.totalorder %s33, 0
      %p257 = por %p255, %p256
      %p258 = scmp.ne.s32.totalorder %s246, %s247
      %p259 = scmp.eq.s32.totalorder %s34, 1
      %p260 = por %p258, %p259
      %p262 = scmp.ne.s32.totalorder %s247, %s261
      %p263 = scmp.eq.s32.totalorder %s34, 0
      %p264 = por %p262, %p263
      %s266 = sadd.s32 %s265, 1
      %p269 = scmp.eq.s32.totalorder %s28, 1
      %p270 = scmp.ne.s32.totalorder %s265, %s267
      %p271 = scmp.eq.s32.totalorder %s28, 0
      %p272 = por %p270, %p271
      %p273 = scmp.ne.s32.totalorder %s265, %s267
      %p274 = scmp.eq.s32.totalorder %s33, 1
      %p275 = por %p273, %p274
      %p276 = scmp.ne.s32.totalorder %s267, %s268
      %p277 = scmp.eq.s32.totalorder %s33, 0
      %p278 = por %p276, %p277
      %p279 = scmp.ne.s32.totalorder %s267, %s268
      %p280 = scmp.eq.s32.totalorder %s34, 1
      %p281 = por %p279, %p280
      %p283 = scmp.ne.s32.totalorder %s268, %s282
      %p284 = scmp.eq.s32.totalorder %s34, 0
      %p285 = por %p283, %p284
      %s287 = sadd.s32 %s286, 1
      %p290 = scmp.eq.s32.totalorder %s28, 1
      %p291 = scmp.ne.s32.totalorder %s286, %s288
      %p292 = scmp.eq.s32.totalorder %s28, 0
      %p293 = por %p291, %p292
      %p294 = scmp.ne.s32.totalorder %s286, %s288
      %p295 = scmp.eq.s32.totalorder %s33, 1
      %p296 = por %p294, %p295
      %p297 = scmp.ne.s32.totalorder %s288, %s289
      %p298 = scmp.eq.s32.totalorder %s33, 0
      %p299 = por %p297, %p298
      %p300 = scmp.ne.s32.totalorder %s288, %s289
      %p301 = scmp.eq.s32.totalorder %s34, 1
      %p302 = por %p300, %p301
      %p304 = scmp.ne.s32.totalorder %s289, %s303
      %p305 = scmp.eq.s32.totalorder %s34, 0
      %p306 = por %p304, %p305
      %s308 = sadd.s32 %s307, 1
      %p311 = scmp.eq.s32.totalorder %s28, 1
      %p312 = scmp.ne.s32.totalorder %s307, %s309
      %p313 = scmp.eq.s32.totalorder %s28, 0
      %p314 = por %p312, %p313
      %p315 = scmp.ne.s32.totalorder %s307, %s309
      %p316 = scmp.eq.s32.totalorder %s33, 1
      %p317 = por %p315, %p316
      %p318 = scmp.ne.s32.totalorder %s309, %s310
      %p319 = scmp.eq.s32.totalorder %s33, 0
      %p320 = por %p318, %p319
      %p321 = scmp.ne.s32.totalorder %s309, %s310
      %p322 = scmp.eq.s32.totalorder %s34, 1
      %p323 = por %p321, %p322
      %p325 = scmp.ne.s32.totalorder %s310, %s324
      %p326 = scmp.eq.s32.totalorder %s34, 0
      %p327 = por %p325, %p326
      %s329 = sadd.s32 %s328, 1
      %p332 = scmp.eq.s32.totalorder %s28, 1
      %p333 = scmp.ne.s32.totalorder %s328, %s330
      %p334 = scmp.eq.s32.totalorder %s28, 0
      %p335 = por %p333, %p334
      %p336 = scmp.ne.s32.totalorder %s328, %s330
      %p337 = scmp.eq.s32.totalorder %s33, 1
      %p338 = por %p336, %p337
      %p339 = scmp.ne.s32.totalorder %s330, %s331
      %p340 = scmp.eq.s32.totalorder %s33, 0
      %p341 = por %p339, %p340
      %p342 = scmp.ne.s32.totalorder %s330, %s331
      %p343 = scmp.eq.s32.totalorder %s34, 1
      %p344 = por %p342, %p343
      %p346 = scmp.ne.s32.totalorder %s331, %s345
      %p347 = scmp.eq.s32.totalorder %s34, 0
      %p348 = por %p346, %p347
      %s350 = sadd.s32 %s349, 1
      %p353 = scmp.eq.s32.totalorder %s28, 1
      %p354 = scmp.ne.s32.totalorder %s349, %s351
      %p355 = scmp.eq.s32.totalorder %s28, 0
      %p356 = por %p354, %p355
      %p357 = scmp.ne.s32.totalorder %s349, %s351
      %p358 = scmp.eq.s32.totalorder %s33, 1
      %p359 = por %p357, %p358
      %p360 = scmp.ne.s32.totalorder %s351, %s352
      %p361 = scmp.eq.s32.totalorder %s33, 0
      %p362 = por %p360, %p361
      %p363 = scmp.ne.s32.totalorder %s351, %s352
      %p364 = scmp.eq.s32.totalorder %s34, 1
      %p365 = por %p363, %p364
      %p367 = scmp.ne.s32.totalorder %s352, %s366
      %p368 = scmp.eq.s32.totalorder %s34, 0
      %p369 = por %p367, %p368
      %s370 = ssub.s32 %s35, %s47
      %p371 = scmp.eq.s32.totalorder %s370, 0
      %s373 = sadd.s32 %s372, 1
      %s374 = scalar_select %p371, %s372, %s373
      %p377 = pneg %p371
      %p378 = scmp.eq.s32.totalorder %s28, 1
      %p379 = por %p377, %p378
      %p380 = scmp.ne.s32.totalorder %s372, %s375
      %p381 = scmp.eq.s32.totalorder %s28, 0
      %p382 = por %p380, %p381
      %p383 = scmp.ne.s32.totalorder %s372, %s375
      %p384 = scmp.eq.s32.totalorder %s33, 1
      %p385 = por %p383, %p384
      %p386 = scmp.ne.s32.totalorder %s375, %s376
      %p387 = scmp.eq.s32.totalorder %s33, 0
      %p388 = por %p386, %p387
      %p389 = scmp.ne.s32.totalorder %s375, %s376
      %p390 = scmp.eq.s32.totalorder %s34, 1
      %p391 = por %p389, %p390
      %p393 = scmp.ne.s32.totalorder %s376, %s392
      %p394 = scmp.eq.s32.totalorder %s34, 0
      %p395 = por %p393, %p394
      %p396 = scmp.le.s32.totalorder 1, %s28
      %p397 = scmp.lt.s32.totalorder %s28, 3
      %p398 = pnand %p396, %p397
      %p399 = pneg %p398
      // Predicated region
      $region9: #{tpu_custom_call.1} parent=5 // pred_check
        _
      $region10: #{tpu_custom_call.1} parent=5 // pred_check_branch
        %401 = sbr.rel (%p398) target = $region12
      $region11: #{tpu_custom_call.1} parent=5 // pred_region
        %s402 = ssub.s32 %s28, 1
        // Predicated region
        $region13: #{tpu_custom_call.1} parent=11 // pred_check
          %p403 = pneg %p89
        $region14: #{tpu_custom_call.1} parent=11 // pred_check_branch
          %405 = sbr.rel (%p403) target = $region16
        $region15: #{tpu_custom_call.1} parent=11 // pred_region
          _
        $region16: #{tpu_custom_call.1} parent=11 // pred_fallthru
          _
        // Predicated region
        $region17: #{tpu_custom_call.1} parent=11 // pred_check
          %p406 = pneg %p110
        $region18: #{tpu_custom_call.1} parent=11 // pred_check_branch
          %408 = sbr.rel (%p406) target = $region20
        $region19: #{tpu_custom_call.1} parent=11 // pred_region
          %s410 = ssub.s32 16, 16
          %411 = vsyncadd [#allocation4], %s410
          %s413 = sshll.u32 [#allocation3], 4
          %s414 = int_to_ptr.vmem [resolvable:$true] %s413
          %416 = dma.hbm_to_vmem [thread:$0]  %s2, 16, %s414, [#allocation4]
        $region20: #{tpu_custom_call.1} parent=11 // pred_fallthru
          _
        // Predicated region
        $region21: #{tpu_custom_call.1} parent=11 // pred_check
          %p417 = pneg %p131
        $region22: #{tpu_custom_call.1} parent=11 // pred_check_branch
          %419 = sbr.rel (%p417) target = $region24
        $region23: #{tpu_custom_call.1} parent=11 // pred_region
          %s421 = ssub.s32 64, 64
          %422 = vsyncadd [#allocation7], %s421
          %s424 = sshll.u32 [#allocation6], 4
          %s425 = int_to_ptr.vmem [resolvable:$true] %s424
          %427 = dma.hbm_to_vmem [thread:$0]  %s3, 64, %s425, [#allocation7]
        $region24: #{tpu_custom_call.1} parent=11 // pred_fallthru
          _
        // Predicated region
        $region25: #{tpu_custom_call.1} parent=11 // pred_check
          %p428 = pneg %p152
        $region26: #{tpu_custom_call.1} parent=11 // pred_check_branch
          %430 = sbr.rel (%p428) target = $region28
        $region27: #{tpu_custom_call.1} parent=11 // pred_region
          %s432 = ssub.s32 16, 16
          %433 = vsyncadd [#allocation7], %s432
          %s435 = sshll.u32 [#allocation8], 4
          %s436 = int_to_ptr.vmem [resolvable:$true] %s435
          %438 = dma.hbm_to_vmem [thread:$0]  %s4, 16, %s436, [#allocation7]
        $region28: #{tpu_custom_call.1} parent=11 // pred_fallthru
          _
        // Predicated region
        $region29: #{tpu_custom_call.1} parent=11 // pred_check
          %p439 = pneg %p173
        $region30: #{tpu_custom_call.1} parent=11 // pred_check_branch
          %441 = sbr.rel (%p439) target = $region32
        $region31: #{tpu_custom_call.1} parent=11 // pred_region
          _
        $region32: #{tpu_custom_call.1} parent=11 // pred_fallthru
          _
        // Predicated region
        $region33: #{tpu_custom_call.1} parent=11 // pred_check
          %p442 = pneg %p194
        $region34: #{tpu_custom_call.1} parent=11 // pred_check_branch
          %444 = sbr.rel (%p442) target = $region36
        $region35: #{tpu_custom_call.1} parent=11 // pred_region
          %s446 = ssub.s32 16, 16
          %447 = vsyncadd [#allocation10], %s446
          %s449 = sshll.u32 [#allocation9], 4
          %s450 = int_to_ptr.vmem [resolvable:$true] %s449
          %452 = dma.hbm_to_vmem [thread:$0]  %s6, 16, %s450, [#allocation10]
        $region36: #{tpu_custom_call.1} parent=11 // pred_fallthru
          _
        // Predicated region
        $region37: #{tpu_custom_call.1} parent=11 // pred_check
          %p453 = pneg %p215
        $region38: #{tpu_custom_call.1} parent=11 // pred_check_branch
          %455 = sbr.rel (%p453) target = $region40
        $region39: #{tpu_custom_call.1} parent=11 // pred_region
          _
        $region40: #{tpu_custom_call.1} parent=11 // pred_fallthru
          _
        // Predicated region
        $region41: #{tpu_custom_call.1} parent=11 // pred_check
          %p456 = pneg %p236
        $region42: #{tpu_custom_call.1} parent=11 // pred_check_branch
          %458 = sbr.rel (%p456) target = $region44
        $region43: #{tpu_custom_call.1} parent=11 // pred_region
          _
        $region44: #{tpu_custom_call.1} parent=11 // pred_fallthru
          _
        // Predicated region
        $region45: #{tpu_custom_call.1} parent=11 // pred_check
          %p459 = pneg %p257
        $region46: #{tpu_custom_call.1} parent=11 // pred_check_branch
          %461 = sbr.rel (%p459) target = $region48
        $region47: #{tpu_custom_call.1} parent=11 // pred_region
          %s463 = ssub.s32 2048, 2048
          %464 = vsyncadd [#allocation10], %s463
          %s465 = sshll.u32 [#allocation11], 4
          %s466 = int_to_ptr.vmem [resolvable:$true] %s465
          %471 = dma.hbm_to_vmem [thread:$0]  %s9, 2048, %s466, [#allocation10], 512, 512, 32
        $region48: #{tpu_custom_call.1} parent=11 // pred_fallthru
          _
        // Predicated region
        $region49: #{tpu_custom_call.1} parent=11 // pred_check
          %p472 = pneg %p278
        $region50: #{tpu_custom_call.1} parent=11 // pred_check_branch
          %474 = sbr.rel (%p472) target = $region52
        $region51: #{tpu_custom_call.1} parent=11 // pred_region
          _
        $region52: #{tpu_custom_call.1} parent=11 // pred_fallthru
          _
        // Predicated region
        $region53: #{tpu_custom_call.1} parent=11 // pred_check
          %p475 = pneg %p299
        $region54: #{tpu_custom_call.1} parent=11 // pred_check_branch
          %477 = sbr.rel (%p475) target = $region56
        $region55: #{tpu_custom_call.1} parent=11 // pred_region
          %s479 = ssub.s32 16384, 16384
          %480 = vsyncadd [#allocation13], %s479
          %s481 = sshll.u32 [#allocation12], 4
          %s482 = int_to_ptr.vmem [resolvable:$true] %s481
          %487 = dma.hbm_to_vmem [thread:$0]  %s11, 16384, %s482, [#allocation13], 256, 256, 16
        $region56: #{tpu_custom_call.1} parent=11 // pred_fallthru
          _
        // Predicated region
        $region57: #{tpu_custom_call.1} parent=11 // pred_check
          %p488 = pneg %p320
        $region58: #{tpu_custom_call.1} parent=11 // pred_check_branch
          %490 = sbr.rel (%p488) target = $region60
        $region59: #{tpu_custom_call.1} parent=11 // pred_region
          _
        $region60: #{tpu_custom_call.1} parent=11 // pred_fallthru
          _
        // Predicated region
        $region61: #{tpu_custom_call.1} parent=11 // pred_check
          %p491 = pneg %p341
        $region62: #{tpu_custom_call.1} parent=11 // pred_check_branch
          %493 = sbr.rel (%p491) target = $region64
        $region63: #{tpu_custom_call.1} parent=11 // pred_region
          %s495 = ssub.s32 4096, 4096
          %496 = vsyncadd [#allocation13], %s495
          %s497 = sshll.u32 [#allocation14], 4
          %s498 = int_to_ptr.vmem [resolvable:$true] %s497
          %503 = dma.hbm_to_vmem [thread:$0]  %s13, 4096, %s498, [#allocation13], 128, 128, 8
        $region64: #{tpu_custom_call.1} parent=11 // pred_fallthru
          _
        // Predicated region
        $region65: #{tpu_custom_call.1} parent=11 // pred_check
          %p504 = pneg %p362
        $region66: #{tpu_custom_call.1} parent=11 // pred_check_branch
          %506 = sbr.rel (%p504) target = $region68
        $region67: #{tpu_custom_call.1} parent=11 // pred_region
          _
        $region68: #{tpu_custom_call.1} parent=11 // pred_fallthru
          _
      $region12: #{tpu_custom_call.1} parent=5 // pred_fallthru
        _
      %p507 = scmp.lt.s32.totalorder %s28, 2
      // Predicated region
      $region69: #{tpu_custom_call.1} parent=5 // pred_check
        %p508 = pneg %p507
      $region70: #{tpu_custom_call.1} parent=5 // pred_check_branch
        %510 = sbr.rel (%p508) target = $region72
      $region71: #{tpu_custom_call.1} parent=5 // pred_region
        // Predicated region
        $region73: #{tpu_custom_call.1} parent=71 // pred_check
          %p511 = pneg %p62
        $region74: #{tpu_custom_call.1} parent=71 // pred_check_branch
          %513 = sbr.rel (%p511) target = $region76
        $region75: #{tpu_custom_call.1} parent=71 // pred_region
          %p514 = scmp.lt.s32.totalorder %s35, 1
          %s515 = scalar_select %p514, %s35, 1
          %p516 = scmp.lt.s32.totalorder %s36, 0
          %s517 = scalar_select %p516, %s36, 0
          %s518 = smul.addr %s515, 4
          %s519 = sadd.s32 %s517, %s518
          %s520 = smul.addr %s519, 8
          %s521 = scalar_lea.vmem %s0, %s520
        $region76: #{tpu_custom_call.1} parent=71 // pred_fallthru
          _
      $region72: #{tpu_custom_call.1} parent=5 // pred_fallthru
        _
      %p522 = scmp.le.s32.totalorder 1, %s28
      %p523 = scmp.lt.s32.totalorder %s28, 3
      %p524 = pnand %p522, %p523
      %p525 = pneg %p524
      // Predicated region
      $region77: #{tpu_custom_call.1} parent=5 // pred_check
        _
      $region78: #{tpu_custom_call.1} parent=5 // pred_check_branch
        %527 = sbr.rel (%p524) target = $region80
      $region79: #{tpu_custom_call.1} parent=5 // pred_region
        %s528 = ssub.s32 %s28, 1
        // Predicated region
        $region81: #{tpu_custom_call.1} parent=79 // pred_check
          %p529 = pneg %p110
        $region82: #{tpu_custom_call.1} parent=79 // pred_check_branch
          %531 = sbr.rel (%p529) target = $region84
        $region83: #{tpu_custom_call.1} parent=79 // pred_region
          %532 = dma.done [#allocation4], 16
        $region84: #{tpu_custom_call.1} parent=79 // pred_fallthru
          _
        // Predicated region
        $region85: #{tpu_custom_call.1} parent=79 // pred_check
          %p533 = pneg %p131
        $region86: #{tpu_custom_call.1} parent=79 // pred_check_branch
          %535 = sbr.rel (%p533) target = $region88
        $region87: #{tpu_custom_call.1} parent=79 // pred_region
          %536 = dma.done [#allocation7], 64
        $region88: #{tpu_custom_call.1} parent=79 // pred_fallthru
          _
        // Predicated region
        $region89: #{tpu_custom_call.1} parent=79 // pred_check
          %p537 = pneg %p152
        $region90: #{tpu_custom_call.1} parent=79 // pred_check_branch
          %539 = sbr.rel (%p537) target = $region92
        $region91: #{tpu_custom_call.1} parent=79 // pred_region
          %540 = dma.done [#allocation7], 16
        $region92: #{tpu_custom_call.1} parent=79 // pred_fallthru
          _
        // Predicated region
        $region93: #{tpu_custom_call.1} parent=79 // pred_check
          %p541 = pneg %p194
        $region94: #{tpu_custom_call.1} parent=79 // pred_check_branch
          %543 = sbr.rel (%p541) target = $region96
        $region95: #{tpu_custom_call.1} parent=79 // pred_region
          %544 = dma.done [#allocation10], 16
        $region96: #{tpu_custom_call.1} parent=79 // pred_fallthru
          _
        // Predicated region
        $region97: #{tpu_custom_call.1} parent=79 // pred_check
          %p545 = pneg %p257
        $region98: #{tpu_custom_call.1} parent=79 // pred_check_branch
          %547 = sbr.rel (%p545) target = $region100
        $region99: #{tpu_custom_call.1} parent=79 // pred_region
          %548 = dma.done [#allocation10], 2048
        $region100: #{tpu_custom_call.1} parent=79 // pred_fallthru
          _
        // Predicated region
        $region101: #{tpu_custom_call.1} parent=79 // pred_check
          %p549 = pneg %p299
        $region102: #{tpu_custom_call.1} parent=79 // pred_check_branch
          %551 = sbr.rel (%p549) target = $region104
        $region103: #{tpu_custom_call.1} parent=79 // pred_region
          %552 = dma.done [#allocation13], 16384
        $region104: #{tpu_custom_call.1} parent=79 // pred_fallthru
          _
        // Predicated region
        $region105: #{tpu_custom_call.1} parent=79 // pred_check
          %p553 = pneg %p341
        $region106: #{tpu_custom_call.1} parent=79 // pred_check_branch
          %555 = sbr.rel (%p553) target = $region108
        $region107: #{tpu_custom_call.1} parent=79 // pred_region
          %556 = dma.done [#allocation13], 4096
        $region108: #{tpu_custom_call.1} parent=79 // pred_fallthru
          _
        %p557 = scmp.lt.s32.totalorder %s37, 1
        %s558 = scalar_select %p557, %s37, 1
        %p559 = scmp.lt.s32.totalorder %s38, 0
        %s560 = scalar_select %p559, %s38, 0
        %s561 = smul.addr %s558, 4
        %s562 = sadd.s32 %s560, %s561
        %s563 = smul.addr %s562, 8
        %s564 = scalar_lea.vmem %s0, %s563
        %p565 = pneg %p68
        %p566 = pneg %p65
        %p567 = pneg %p89
        %p568 = pneg %p86
        %p569 = pneg %p110
        %p570 = pneg %p107
        %p571 = pneg %p131
        %p572 = pneg %p128
        %p573 = pneg %p152
        %p574 = pneg %p149
        %p575 = pneg %p173
        %p576 = pneg %p170
        %p577 = pneg %p194
        %p578 = pneg %p191
        %p579 = pneg %p215
        %p580 = pneg %p212
        %p581 = pneg %p236
        %p582 = pneg %p233
        %p583 = pneg %p257
        %p584 = pneg %p254
        %p585 = pneg %p278
        %p586 = pneg %p275
        %p587 = pneg %p299
        %p588 = pneg %p296
        %p589 = pneg %p320
        %p590 = pneg %p317
        %p591 = pneg %p341
        %p592 = pneg %p338
        %p593 = pneg %p362
        %p594 = pneg %p359
        %p595 = pneg %p388
        %p596 = pneg %p385
        %s597 = sand.u32 %s375, 1
        %s598 = scalar_lea.sflag [#allocation5], %s597
        %s599 = sand.u32 %s375, 1
        %s600 = scalar_lea.vmem [#allocation15], %s599
        %p601 = scmp.lt.s32.totalorder %s37, 1
        %s602 = scalar_select %p601, %s37, 1
        %p603 = scmp.lt.s32.totalorder %s38, 0
        %s604 = scalar_select %p603, %s38, 0
        %s605 = smul.addr %s602, 4
        %s606 = sadd.s32 %s604, %s605
        %s607 = smul.addr %s606, 8
        %s608 = scalar_lea.vmem %s0, %s607
        %p609 = scmp.eq.s32.totalorder %s38, 0
        // Predicated region
        $region109: #{tpu_custom_call.1} parent=79 // pred_check
          %p610 = pneg %p609
        $region110: #{tpu_custom_call.1} parent=79 // pred_check_branch
          %612 = sbr.rel (%p610) target = $region112
        $region111: #{tpu_custom_call.1} parent=79 // pred_region
          %vm613 = vcmask 253952
          %614 = vst.msk [vmem:[#allocation2] sm:$0x1] %vm613, 0.0
        $region112: #{tpu_custom_call.1} parent=79 // pred_fallthru
          _
        %v615 = vld [vmem:[#allocation2] sm:$0x1]
        %v616 = vld [vmem:[%s608] sm:$0xff]
        %v617 = vld [vmem:[%s608 + $0x8] sm:$0xff]
        %v618 = vld [vmem:[%s608 + $0x10] sm:$0xff]
        %v619 = vld [vmem:[%s608 + $0x18] sm:$0xff]
        %vm620 = vcmask 523264
        %v621 = vsel %vm620, %v616, 0.0
        %622 = vadd.xlane.f32.xlu0 %v621
        %v623 = vpop.xlane.xlu0 %622
        %v624 = vsel %vm620, %v617, 0.0
        %625 = vadd.xlane.f32.xlu0 %v624
        %v626 = vpop.xlane.xlu0 %625
        %v627 = vsel %vm620, %v618, 0.0
        %628 = vadd.xlane.f32.xlu0 %v627
        %v629 = vpop.xlane.xlu0 %628
        %v630 = vsel %vm620, %v619, 0.0
        %631 = vadd.xlane.f32.xlu0 %v630
        %v632 = vpop.xlane.xlu0 %631
        %v637 = vlaneseq
        %v638 = vshrl.u32 %v637, 7
        %v639 = vsub.s32 0, %v638
        %v640 = vrot.slane %v623, %v639
        %v641 = vlaneseq
        %v642 = vshrl.u32 %v641, 7
        %v643 = vsub.s32 1, %v642
        %v644 = vrot.slane %v623, %v643
        %v645 = vlaneseq
        %v646 = vshrl.u32 %v645, 7
        %v647 = vsub.s32 2, %v646
        %v648 = vrot.slane %v623, %v647
        %v649 = vlaneseq
        %v650 = vshrl.u32 %v649, 7
        %v651 = vsub.s32 3, %v650
        %v652 = vrot.slane %v623, %v651
        %v653 = vlaneseq
        %v654 = vshrl.u32 %v653, 7
        %v655 = vsub.s32 4, %v654
        %v656 = vrot.slane %v623, %v655
        %v657 = vlaneseq
        %v658 = vshrl.u32 %v657, 7
        %v659 = vsub.s32 5, %v658
        %v660 = vrot.slane %v623, %v659
        %v661 = vlaneseq
        %v662 = vshrl.u32 %v661, 7
        %v663 = vsub.s32 6, %v662
        %v664 = vrot.slane %v623, %v663
        %v665 = vlaneseq
        %v666 = vshrl.u32 %v665, 7
        %v667 = vsub.s32 7, %v666
        %v668 = vrot.slane %v623, %v667
        %v669 = vlaneseq
        %v670 = vshrl.u32 %v669, 7
        %v671 = vsub.s32 0, %v670
        %v672 = vrot.slane %v626, %v671
        %v673 = vlaneseq
        %v674 = vshrl.u32 %v673, 7
        %v675 = vsub.s32 1, %v674
        %v676 = vrot.slane %v626, %v675
        %v677 = vlaneseq
        %v678 = vshrl.u32 %v677, 7
        %v679 = vsub.s32 2, %v678
        %v680 = vrot.slane %v626, %v679
        %v681 = vlaneseq
        %v682 = vshrl.u32 %v681, 7
        %v683 = vsub.s32 3, %v682
        %v684 = vrot.slane %v626, %v683
        %v685 = vlaneseq
        %v686 = vshrl.u32 %v685, 7
        %v687 = vsub.s32 4, %v686
        %v688 = vrot.slane %v626, %v687
        %v689 = vlaneseq
        %v690 = vshrl.u32 %v689, 7
        %v691 = vsub.s32 5, %v690
        %v692 = vrot.slane %v626, %v691
        %v693 = vlaneseq
        %v694 = vshrl.u32 %v693, 7
        %v695 = vsub.s32 6, %v694
        %v696 = vrot.slane %v626, %v695
        %v697 = vlaneseq
        %v698 = vshrl.u32 %v697, 7
        %v699 = vsub.s32 7, %v698
        %v700 = vrot.slane %v626, %v699
        %v701 = vlaneseq
        %v702 = vshrl.u32 %v701, 7
        %v703 = vsub.s32 0, %v702
        %v704 = vrot.slane %v629, %v703
        %v705 = vlaneseq
        %v706 = vshrl.u32 %v705, 7
        %v707 = vsub.s32 1, %v706
        %v708 = vrot.slane %v629, %v707
        %v709 = vlaneseq
        %v710 = vshrl.u32 %v709, 7
        %v711 = vsub.s32 2, %v710
        %v712 = vrot.slane %v629, %v711
        %v713 = vlaneseq
        %v714 = vshrl.u32 %v713, 7
        %v715 = vsub.s32 3, %v714
        %v716 = vrot.slane %v629, %v715
        %v717 = vlaneseq
        %v718 = vshrl.u32 %v717, 7
        %v719 = vsub.s32 4, %v718
        %v720 = vrot.slane %v629, %v719
        %v721 = vlaneseq
        %v722 = vshrl.u32 %v721, 7
        %v723 = vsub.s32 5, %v722
        %v724 = vrot.slane %v629, %v723
        %v725 = vlaneseq
        %v726 = vshrl.u32 %v725, 7
        %v727 = vsub.s32 6, %v726
        %v728 = vrot.slane %v629, %v727
        %v729 = vlaneseq
        %v730 = vshrl.u32 %v729, 7
        %v731 = vsub.s32 7, %v730
        %v732 = vrot.slane %v629, %v731
        %v733 = vlaneseq
        %v734 = vshrl.u32 %v733, 7
        %v735 = vsub.s32 0, %v734
        %v736 = vrot.slane %v632, %v735
        %v737 = vlaneseq
        %v738 = vshrl.u32 %v737, 7
        %v739 = vsub.s32 1, %v738
        %v740 = vrot.slane %v632, %v739
        %v741 = vlaneseq
        %v742 = vshrl.u32 %v741, 7
        %v743 = vsub.s32 2, %v742
        %v744 = vrot.slane %v632, %v743
        %v745 = vlaneseq
        %v746 = vshrl.u32 %v745, 7
        %v747 = vsub.s32 3, %v746
        %v748 = vrot.slane %v632, %v747
        %v749 = vlaneseq
        %v750 = vshrl.u32 %v749, 7
        %v751 = vsub.s32 4, %v750
        %v752 = vrot.slane %v632, %v751
        %v753 = vlaneseq
        %v754 = vshrl.u32 %v753, 7
        %v755 = vsub.s32 5, %v754
        %v756 = vrot.slane %v632, %v755
        %v757 = vlaneseq
        %v758 = vshrl.u32 %v757, 7
        %v759 = vsub.s32 6, %v758
        %v760 = vrot.slane %v632, %v759
        %v761 = vlaneseq
        %v762 = vshrl.u32 %v761, 7
        %v763 = vsub.s32 7, %v762
        %v764 = vrot.slane %v632, %v763
        %v765 = vcombine.low %v640, %v644
        %v766 = vcombine.low %v648, %v652
        %v767 = vcombine.low %v656, %v660
        %v768 = vcombine.low %v664, %v668
        %v770 = vunpack.c.l.s4 1966171168
        %v771 = vunpack.c.0.s8 %v770
        %v772 = vlaneseq
        %v773 = vshrl.u32 %v772, 7
        %v774 = vsub.s32 %v771, %v773
        %v775 = vrot.slane %v765, %v774
        %v777 = vunpack.c.l.s4 1966171168
        %v778 = vunpack.c.0.s8 %v777
        %v779 = vlaneseq
        %v780 = vshrl.u32 %v779, 7
        %v781 = vsub.s32 %v778, %v780
        %v782 = vrot.slane %v766, %v781
        %v784 = vunpack.c.l.s4 1966171168
        %v785 = vunpack.c.0.s8 %v784
        %v786 = vlaneseq
        %v787 = vshrl.u32 %v786, 7
        %v788 = vsub.s32 %v785, %v787
        %v789 = vrot.slane %v767, %v788
        %v791 = vunpack.c.l.s4 1966171168
        %v792 = vunpack.c.0.s8 %v791
        %v793 = vlaneseq
        %v794 = vshrl.u32 %v793, 7
        %v795 = vsub.s32 %v792, %v794
        %v796 = vrot.slane %v768, %v795
        %v797 = vcombine.low %v775, %v782
        %v798 = vcombine.low %v789, %v796
        %v800 = vunpack.c.l.s4 1966171168
        %v801 = vunpack.c.0.s8 %v800
        %v802 = vlaneseq
        %v803 = vshrl.u32 %v802, 7
        %v804 = vsub.s32 %v801, %v803
        %v805 = vrot.slane %v797, %v804
        %v807 = vunpack.c.l.s4 1966171168
        %v808 = vunpack.c.0.s8 %v807
        %v809 = vlaneseq
        %v810 = vshrl.u32 %v809, 7
        %v811 = vsub.s32 %v808, %v810
        %v812 = vrot.slane %v798, %v811
        %v813 = vcombine.low %v805, %v812
        %v814 = vcombine.low %v672, %v676
        %v815 = vcombine.low %v680, %v684
        %v816 = vcombine.low %v688, %v692
        %v817 = vcombine.low %v696, %v700
        %v819 = vunpack.c.l.s4 1966171168
        %v820 = vunpack.c.0.s8 %v819
        %v821 = vlaneseq
        %v822 = vshrl.u32 %v821, 7
        %v823 = vsub.s32 %v820, %v822
        %v824 = vrot.slane %v814, %v823
        %v826 = vunpack.c.l.s4 1966171168
        %v827 = vunpack.c.0.s8 %v826
        %v828 = vlaneseq
        %v829 = vshrl.u32 %v828, 7
        %v830 = vsub.s32 %v827, %v829
        %v831 = vrot.slane %v815, %v830
        %v833 = vunpack.c.l.s4 1966171168
        %v834 = vunpack.c.0.s8 %v833
        %v835 = vlaneseq
        %v836 = vshrl.u32 %v835, 7
        %v837 = vsub.s32 %v834, %v836
        %v838 = vrot.slane %v816, %v837
        %v840 = vunpack.c.l.s4 1966171168
        %v841 = vunpack.c.0.s8 %v840
        %v842 = vlaneseq
        %v843 = vshrl.u32 %v842, 7
        %v844 = vsub.s32 %v841, %v843
        %v845 = vrot.slane %v817, %v844
        %v846 = vcombine.low %v824, %v831
        %v847 = vcombine.low %v838, %v845
        %v849 = vunpack.c.l.s4 1966171168
        %v850 = vunpack.c.0.s8 %v849
        %v851 = vlaneseq
        %v852 = vshrl.u32 %v851, 7
        %v853 = vsub.s32 %v850, %v852
        %v854 = vrot.slane %v846, %v853
        %v856 = vunpack.c.l.s4 1966171168
        %v857 = vunpack.c.0.s8 %v856
        %v858 = vlaneseq
        %v859 = vshrl.u32 %v858, 7
        %v860 = vsub.s32 %v857, %v859
        %v861 = vrot.slane %v847, %v860
        %v862 = vcombine.low %v854, %v861
        %v863 = vcombine.low %v704, %v708
        %v864 = vcombine.low %v712, %v716
        %v865 = vcombine.low %v720, %v724
        %v866 = vcombine.low %v728, %v732
        %v868 = vunpack.c.l.s4 1966171168
        %v869 = vunpack.c.0.s8 %v868
        %v870 = vlaneseq
        %v871 = vshrl.u32 %v870, 7
        %v872 = vsub.s32 %v869, %v871
        %v873 = vrot.slane %v863, %v872
        %v875 = vunpack.c.l.s4 1966171168
        %v876 = vunpack.c.0.s8 %v875
        %v877 = vlaneseq
        %v878 = vshrl.u32 %v877, 7
        %v879 = vsub.s32 %v876, %v878
        %v880 = vrot.slane %v864, %v879
        %v882 = vunpack.c.l.s4 1966171168
        %v883 = vunpack.c.0.s8 %v882
        %v884 = vlaneseq
        %v885 = vshrl.u32 %v884, 7
        %v886 = vsub.s32 %v883, %v885
        %v887 = vrot.slane %v865, %v886
        %v889 = vunpack.c.l.s4 1966171168
        %v890 = vunpack.c.0.s8 %v889
        %v891 = vlaneseq
        %v892 = vshrl.u32 %v891, 7
        %v893 = vsub.s32 %v890, %v892
        %v894 = vrot.slane %v866, %v893
        %v895 = vcombine.low %v873, %v880
        %v896 = vcombine.low %v887, %v894
        %v898 = vunpack.c.l.s4 1966171168
        %v899 = vunpack.c.0.s8 %v898
        %v900 = vlaneseq
        %v901 = vshrl.u32 %v900, 7
        %v902 = vsub.s32 %v899, %v901
        %v903 = vrot.slane %v895, %v902
        %v905 = vunpack.c.l.s4 1966171168
        %v906 = vunpack.c.0.s8 %v905
        %v907 = vlaneseq
        %v908 = vshrl.u32 %v907, 7
        %v909 = vsub.s32 %v906, %v908
        %v910 = vrot.slane %v896, %v909
        %v911 = vcombine.low %v903, %v910
        %v912 = vcombine.low %v736, %v740
        %v913 = vcombine.low %v744, %v748
        %v914 = vcombine.low %v752, %v756
        %v915 = vcombine.low %v760, %v764
        %v917 = vunpack.c.l.s4 1966171168
        %v918 = vunpack.c.0.s8 %v917
        %v919 = vlaneseq
        %v920 = vshrl.u32 %v919, 7
        %v921 = vsub.s32 %v918, %v920
        %v922 = vrot.slane %v912, %v921
        %v924 = vunpack.c.l.s4 1966171168
        %v925 = vunpack.c.0.s8 %v924
        %v926 = vlaneseq
        %v927 = vshrl.u32 %v926, 7
        %v928 = vsub.s32 %v925, %v927
        %v929 = vrot.slane %v913, %v928
        %v931 = vunpack.c.l.s4 1966171168
        %v932 = vunpack.c.0.s8 %v931
        %v933 = vlaneseq
        %v934 = vshrl.u32 %v933, 7
        %v935 = vsub.s32 %v932, %v934
        %v936 = vrot.slane %v914, %v935
        %v938 = vunpack.c.l.s4 1966171168
        %v939 = vunpack.c.0.s8 %v938
        %v940 = vlaneseq
        %v941 = vshrl.u32 %v940, 7
        %v942 = vsub.s32 %v939, %v941
        %v943 = vrot.slane %v915, %v942
        %v944 = vcombine.low %v922, %v929
        %v945 = vcombine.low %v936, %v943
        %v947 = vunpack.c.l.s4 1966171168
        %v948 = vunpack.c.0.s8 %v947
        %v949 = vlaneseq
        %v950 = vshrl.u32 %v949, 7
        %v951 = vsub.s32 %v948, %v950
        %v952 = vrot.slane %v944, %v951
        %v954 = vunpack.c.l.s4 1966171168
        %v955 = vunpack.c.0.s8 %v954
        %v956 = vlaneseq
        %v957 = vshrl.u32 %v956, 7
        %v958 = vsub.s32 %v955, %v957
        %v959 = vrot.slane %v945, %v958
        %v960 = vcombine.low %v952, %v959
        %961 = vset.pattern.permute.xlu0 0
        %962 = vperm.xlu0 %961, %v813
        %v963 = vpop.permute.xlu0 %962
        %964 = vset.pattern.permute.xlu0 0
        %965 = vperm.xlu0 %964, %v862
        %v966 = vpop.permute.xlu0 %965
        %967 = vset.pattern.permute.xlu0 0
        %968 = vperm.xlu0 %967, %v911
        %v969 = vpop.permute.xlu0 %968
        %970 = vset.pattern.permute.xlu0 0
        %971 = vperm.xlu0 %970, %v960
        %v972 = vpop.permute.xlu0 %971
        %v973 = vlaneseq
        %v974 = vand.u32 %v973, 127
        %v975 = vlaneseq
        %v976 = vshrl.u32 %v975, 7
        %v977 = vsub.s32 %v974, %v976
        %v978 = vrot.slane %v963, %v977
        %v979 = vadd.s32 %v974, 4294967288
        %v980 = vlaneseq
        %v981 = vshrl.u32 %v980, 7
        %v982 = vsub.s32 %v979, %v981
        %v983 = vrot.slane %v966, %v982
        %vm984 = vcmask 130112
        %v985 = vsel %vm984, %v983, %v978
        %v986 = vadd.s32 %v974, 4294967280
        %v987 = vlaneseq
        %v988 = vshrl.u32 %v987, 7
        %v989 = vsub.s32 %v986, %v988
        %v990 = vrot.slane %v969, %v989
        %vm991 = vcmask 195712
        %v992 = vsel %vm991, %v990, %v985
        %v993 = vadd.s32 %v974, 4294967272
        %v994 = vlaneseq
        %v995 = vshrl.u32 %v994, 7
        %v996 = vsub.s32 %v993, %v995
        %v997 = vrot.slane %v972, %v996
        %vm998 = vcmask 261312
        %v999 = vsel %vm998, %v997, %v992
        %v1001 = vunpack.c.l.s4 1966171168
        %v1002 = vunpack.c.0.s8 %v1001
        %v1003 = vlaneseq
        %v1004 = vshrl.u32 %v1003, 7
        %v1005 = vsub.s32 %v1002, %v1004
        %v1006 = vrot.slane %v999, %v1005
        %v1008 = vunpack.c.l.s4 1966171168
        %v1009 = vunpack.c.0.s8 %v1008
        %v1010 = vlaneseq
        %v1011 = vshrl.u32 %v1010, 7
        %v1012 = vsub.s32 %v1009, %v1011
        %v1013 = vrot.slane %v1006, %v1012
        %v1015 = vadd.f32 %v615, %v1013
        %vm1016 = vcmask 253952
        %1017 = vst.msk [vmem:[#allocation2] sm:$0x1] %vm1016, %v1015
        // Predicated region
        $region113: #{tpu_custom_call.1} parent=79 // pred_check
          %p1018 = pneg %p609
        $region114: #{tpu_custom_call.1} parent=79 // pred_check_branch
          %1020 = sbr.rel (%p1018) target = $region116
        $region115: #{tpu_custom_call.1} parent=79 // pred_region
          %v1021 = vld [vmem:[#allocation2] sm:$0x1]
          %v1022 = vmul.f32 %v1021, 0.015625
          %v1023 = vld [vmem:[%s1] sm:$0xff]
          %v1024 = vld [vmem:[%s1 + $0x8] sm:$0xff]
          %v1025 = vld [vmem:[%s1 + $0x10] sm:$0xff]
          %v1026 = vld [vmem:[%s1 + $0x18] sm:$0xff]
          %v1027 = vld [vmem:[#allocation3] sm:$0x1]
          %vm1028 = vcmask 261120
          %v1030 = vsel %vm1028, %v1022, 0
          %1032 = vmatprep.subr.mxu0 0.0
          %1033 = vmatpush1.msra.mxu0 0.0
          %1034 = vmatprep.subr.mxu0 0.0
          %1035 = vmatpush1.msra.mxu0 0.0
          %1036 = vmatprep.subr.mxu0 0.0
          %1037 = vmatpush1.msra.mxu0 0.0
          %1038 = vmatprep.subr.mxu0 0.0
          %1039 = vmatpush1.msra.mxu0 0.0
          %1040 = vmatprep.subr.mxu0 0.0
          %1041 = vmatpush1.msra.mxu0 0.0
          %1042 = vmatprep.subr.mxu0 0.0
          %1043 = vmatpush1.msra.mxu0 0.0
          %1044 = vmatprep.subr.mxu0 0.0
          %1045 = vmatpush1.msra.mxu0 0.0
          %1046 = vmatprep.subr.mxu0 0.0
          %1047 = vmatpush1.msra.mxu0 0.0
          %1048 = vmatprep.subr.mxu0 0.0
          %1049 = vmatpush1.msra.mxu0 0.0
          %1050 = vmatprep.subr.mxu0 0.0
          %1051 = vmatpush1.msra.mxu0 0.0
          %1052 = vmatprep.subr.mxu0 0.0
          %1053 = vmatpush1.msra.mxu0 0.0
          %1054 = vmatprep.subr.mxu0 0.0
          %1055 = vmatpush1.msra.mxu0 0.0
          %1056 = vmatprep.subr.mxu0 0.0
          %1057 = vmatpush1.msra.mxu0 %v1026
          %1058 = vmatprep.subr.mxu0 0.0
          %1059 = vmatpush1.msra.mxu0 %v1025
          %1060 = vmatprep.subr.mxu0 0.0
          %1061 = vmatpush1.msra.mxu0 %v1024
          %1062 = vmatprep.subr.mxu0 0.0
          %1063 = vmatpush1.msra.mxu0 %v1023
          %1064 = vmatprep.subr.mxu0 0.0
          %1065 = vmatpush2.msra.mxu0 0.0
          %1066 = vmatprep.subr.mxu0 0.0
          %1067 = vmatpush2.msra.mxu0 0.0
          %1068 = vmatprep.subr.mxu0 0.0
          %1069 = vmatpush2.msra.mxu0 0.0
          %1070 = vmatprep.subr.mxu0 0.0
          %1071 = vmatpush2.msra.mxu0 0.0
          %1072 = vmatprep.subr.mxu0 0.0
          %1073 = vmatpush2.msra.mxu0 0.0
          %1074 = vmatprep.subr.mxu0 0.0
          %1075 = vmatpush2.msra.mxu0 0.0
          %1076 = vmatprep.subr.mxu0 0.0
          %1077 = vmatpush2.msra.mxu0 0.0
          %1078 = vmatprep.subr.mxu0 0.0
          %1079 = vmatpush2.msra.mxu0 0.0
          %1080 = vmatprep.subr.mxu0 0.0
          %1081 = vmatpush2.msra.mxu0 0.0
          %1082 = vmatprep.subr.mxu0 0.0
          %1083 = vmatpush2.msra.mxu0 0.0
          %1084 = vmatprep.subr.mxu0 0.0
          %1085 = vmatpush2.msra.mxu0 0.0
          %1086 = vmatprep.subr.mxu0 0.0
          %1087 = vmatpush2.msra.mxu0 0.0
          %1088 = vmatprep.subr.mxu0 0.0
          %1089 = vmatpush2.msra.mxu0 0.0
          %1090 = vmatprep.subr.mxu0 0.0
          %1091 = vmatpush2.msra.mxu0 0.0
          %1092 = vmatprep.subr.mxu0 0.0
          %1093 = vmatpush2.msra.mxu0 0.0
          %1094 = vmatprep.subr.mxu0 0.0
          %1095 = vmatpush2.msra.mxu0 0.0
          %1096 = vmatprep.mubr.f32.mxu0 0.0
          %1097 = vmatmul.mubr.f32.gmra.mxu0 %v1030
          %v1098 = vpop.f32.mrf.mxu0
          %v1099 = vadd.f32 %v1027, %v1098
          %v1100 = vpop.f32.mrf.mxu0
          %1101 = vdwg.mxu0
          %v1102 = vmax.f32 %v1099, 0.0
          %v1103 = vld [vmem:[#allocation6] sm:$0xf]
          %v1104 = vld [vmem:[#allocation8] sm:$0x1]
          %vm1105 = vcmask 31744
          %v1107 = vsel %vm1105, %v1102, 0
          %vm1109 = vcmask 1043456
          %v1111 = vsel %vm1109, %v1103, 0
          %1113 = vmatprep.subr.mxu0 0.0
          %1114 = vmatpush1.msra.mxu0 0.0
          %1115 = vmatprep.subr.mxu0 0.0
          %1116 = vmatpush1.msra.mxu0 0.0
          %1117 = vmatprep.subr.mxu0 0.0
          %1118 = vmatpush1.msra.mxu0 0.0
          %1119 = vmatprep.subr.mxu0 0.0
          %1120 = vmatpush1.msra.mxu0 0.0
          %1121 = vmatprep.subr.mxu0 0.0
          %1122 = vmatpush1.msra.mxu0 0.0
          %1123 = vmatprep.subr.mxu0 0.0
          %1124 = vmatpush1.msra.mxu0 0.0
          %1125 = vmatprep.subr.mxu0 0.0
          %1126 = vmatpush1.msra.mxu0 0.0
          %1127 = vmatprep.subr.mxu0 0.0
          %1128 = vmatpush1.msra.mxu0 0.0
          %1129 = vmatprep.subr.mxu0 0.0
          %1130 = vmatpush1.msra.mxu0 0.0
          %1131 = vmatprep.subr.mxu0 0.0
          %1132 = vmatpush1.msra.mxu0 0.0
          %1133 = vmatprep.subr.mxu0 0.0
          %1134 = vmatpush1.msra.mxu0 0.0
          %1135 = vmatprep.subr.mxu0 0.0
          %1136 = vmatpush1.msra.mxu0 0.0
          %1137 = vmatprep.subr.mxu0 0.0
          %1138 = vmatpush1.msra.mxu0 0.0
          %1139 = vmatprep.subr.mxu0 0.0
          %1140 = vmatpush1.msra.mxu0 0.0
          %1141 = vmatprep.subr.mxu0 0.0
          %1142 = vmatpush1.msra.mxu0 0.0
          %1143 = vmatprep.subr.mxu0 0.0
          %1144 = vmatpush1.msra.mxu0 %v1111
          %1145 = vmatprep.subr.mxu0 0.0
          %1146 = vmatpush2.msra.mxu0 0.0
          %1147 = vmatprep.subr.mxu0 0.0
          %1148 = vmatpush2.msra.mxu0 0.0
          %1149 = vmatprep.subr.mxu0 0.0
          %1150 = vmatpush2.msra.mxu0 0.0
          %1151 = vmatprep.subr.mxu0 0.0
          %1152 = vmatpush2.msra.mxu0 0.0
          %1153 = vmatprep.subr.mxu0 0.0
          %1154 = vmatpush2.msra.mxu0 0.0
          %1155 = vmatprep.subr.mxu0 0.0
          %1156 = vmatpush2.msra.mxu0 0.0
          %1157 = vmatprep.subr.mxu0 0.0
          %1158 = vmatpush2.msra.mxu0 0.0
          %1159 = vmatprep.subr.mxu0 0.0
          %1160 = vmatpush2.msra.mxu0 0.0
          %1161 = vmatprep.subr.mxu0 0.0
          %1162 = vmatpush2.msra.mxu0 0.0
          %1163 = vmatprep.subr.mxu0 0.0
          %1164 = vmatpush2.msra.mxu0 0.0
          %1165 = vmatprep.subr.mxu0 0.0
          %1166 = vmatpush2.msra.mxu0 0.0
          %1167 = vmatprep.subr.mxu0 0.0
          %1168 = vmatpush2.msra.mxu0 0.0
          %1169 = vmatprep.subr.mxu0 0.0
          %1170 = vmatpush2.msra.mxu0 0.0
          %1171 = vmatprep.subr.mxu0 0.0
          %1172 = vmatpush2.msra.mxu0 0.0
          %1173 = vmatprep.subr.mxu0 0.0
          %1174 = vmatpush2.msra.mxu0 0.0
          %1175 = vmatprep.subr.mxu0 0.0
          %1176 = vmatpush2.msra.mxu0 0.0
          %1177 = vmatprep.mubr.f32.mxu0 0.0
          %1178 = vmatmul.mubr.f32.gmra.mxu0 %v1107
          %v1179 = vpop.f32.mrf.mxu0
          %v1180 = vadd.f32 %v1104, %v1179
          %v1181 = vpop.f32.mrf.mxu0
          %1182 = vdwg.mxu0
          %v1183 = vmul.f32 %v1180, 0.5
          %v1184 = vtanh.pop %v1183
          %v1185 = vadd.f32 %v1184, 1.0
          %v1186 = vmul.f32 %v1185, 0.5
          %v1187 = vmul.f32 %v1022, %v1186
          %v1188 = vld [vmem:[%s5] sm:$0xff]
          %v1189 = vld [vmem:[%s5 + $0x8] sm:$0xff]
          %v1190 = vld [vmem:[%s5 + $0x10] sm:$0xff]
          %v1191 = vld [vmem:[%s5 + $0x18] sm:$0xff]
          %v1192 = vld [vmem:[#allocation9] sm:$0x1]
          %v1194 = vsel %vm1028, %v1187, 0
          %1196 = vmatprep.subr.mxu0 0.0
          %1197 = vmatpush1.msra.mxu0 0.0
          %1198 = vmatprep.subr.mxu0 0.0
          %1199 = vmatpush1.msra.mxu0 0.0
          %1200 = vmatprep.subr.mxu0 0.0
          %1201 = vmatpush1.msra.mxu0 0.0
          %1202 = vmatprep.subr.mxu0 0.0
          %1203 = vmatpush1.msra.mxu0 0.0
          %1204 = vmatprep.subr.mxu0 0.0
          %1205 = vmatpush1.msra.mxu0 0.0
          %1206 = vmatprep.subr.mxu0 0.0
          %1207 = vmatpush1.msra.mxu0 0.0
          %1208 = vmatprep.subr.mxu0 0.0
          %1209 = vmatpush1.msra.mxu0 0.0
          %1210 = vmatprep.subr.mxu0 0.0
          %1211 = vmatpush1.msra.mxu0 0.0
          %1212 = vmatprep.subr.mxu0 0.0
          %1213 = vmatpush1.msra.mxu0 0.0
          %1214 = vmatprep.subr.mxu0 0.0
          %1215 = vmatpush1.msra.mxu0 0.0
          %1216 = vmatprep.subr.mxu0 0.0
          %1217 = vmatpush1.msra.mxu0 0.0
          %1218 = vmatprep.subr.mxu0 0.0
          %1219 = vmatpush1.msra.mxu0 0.0
          %1220 = vmatprep.subr.mxu0 0.0
          %1221 = vmatpush1.msra.mxu0 %v1191
          %1222 = vmatprep.subr.mxu0 0.0
          %1223 = vmatpush1.msra.mxu0 %v1190
          %1224 = vmatprep.subr.mxu0 0.0
          %1225 = vmatpush1.msra.mxu0 %v1189
          %1226 = vmatprep.subr.mxu0 0.0
          %1227 = vmatpush1.msra.mxu0 %v1188
          %1228 = vmatprep.subr.mxu0 0.0
          %1229 = vmatpush2.msra.mxu0 0.0
          %1230 = vmatprep.subr.mxu0 0.0
          %1231 = vmatpush2.msra.mxu0 0.0
          %1232 = vmatprep.subr.mxu0 0.0
          %1233 = vmatpush2.msra.mxu0 0.0
          %1234 = vmatprep.subr.mxu0 0.0
          %1235 = vmatpush2.msra.mxu0 0.0
          %1236 = vmatprep.subr.mxu0 0.0
          %1237 = vmatpush2.msra.mxu0 0.0
          %1238 = vmatprep.subr.mxu0 0.0
          %1239 = vmatpush2.msra.mxu0 0.0
          %1240 = vmatprep.subr.mxu0 0.0
          %1241 = vmatpush2.msra.mxu0 0.0
          %1242 = vmatprep.subr.mxu0 0.0
          %1243 = vmatpush2.msra.mxu0 0.0
          %1244 = vmatprep.subr.mxu0 0.0
          %1245 = vmatpush2.msra.mxu0 0.0
          %1246 = vmatprep.subr.mxu0 0.0
          %1247 = vmatpush2.msra.mxu0 0.0
          %1248 = vmatprep.subr.mxu0 0.0
          %1249 = vmatpush2.msra.mxu0 0.0
          %1250 = vmatprep.subr.mxu0 0.0
          %1251 = vmatpush2.msra.mxu0 0.0
          %1252 = vmatprep.subr.mxu0 0.0
          %1253 = vmatpush2.msra.mxu0 0.0
          %1254 = vmatprep.subr.mxu0 0.0
          %1255 = vmatpush2.msra.mxu0 0.0
          %1256 = vmatprep.subr.mxu0 0.0
          %1257 = vmatpush2.msra.mxu0 0.0
          %1258 = vmatprep.subr.mxu0 0.0
          %1259 = vmatpush2.msra.mxu0 0.0
          %1260 = vmatprep.mubr.f32.mxu0 0.0
          %1261 = vmatmul.mubr.f32.gmra.mxu0 %v1194
          %v1262 = vpop.f32.mrf.mxu0
          %v1263 = vadd.f32 %v1192, %v1262
          %v1264 = vpop.f32.mrf.mxu0
          %1265 = vdwg.mxu0
          %v1266 = vmax.f32 %v1263, 0.0
          %v1267 = vld [vmem:[%s7] sm:$0xff]
          %v1268 = vld [vmem:[%s8] sm:$0x1]
          %vm1269 = vcmask 64512
          %v1271 = vsel %vm1269, %v1266, 0
          %1273 = vmatprep.subr.mxu0 0.0
          %1274 = vmatpush1.msra.mxu0 0.0
          %1275 = vmatprep.subr.mxu0 0.0
          %1276 = vmatpush1.msra.mxu0 0.0
          %1277 = vmatprep.subr.mxu0 0.0
          %1278 = vmatpush1.msra.mxu0 0.0
          %1279 = vmatprep.subr.mxu0 0.0
          %1280 = vmatpush1.msra.mxu0 0.0
          %1281 = vmatprep.subr.mxu0 0.0
          %1282 = vmatpush1.msra.mxu0 0.0
          %1283 = vmatprep.subr.mxu0 0.0
          %1284 = vmatpush1.msra.mxu0 0.0
          %1285 = vmatprep.subr.mxu0 0.0
          %1286 = vmatpush1.msra.mxu0 0.0
          %1287 = vmatprep.subr.mxu0 0.0
          %1288 = vmatpush1.msra.mxu0 0.0
          %1289 = vmatprep.subr.mxu0 0.0
          %1290 = vmatpush1.msra.mxu0 0.0
          %1291 = vmatprep.subr.mxu0 0.0
          %1292 = vmatpush1.msra.mxu0 0.0
          %1293 = vmatprep.subr.mxu0 0.0
          %1294 = vmatpush1.msra.mxu0 0.0
          %1295 = vmatprep.subr.mxu0 0.0
          %1296 = vmatpush1.msra.mxu0 0.0
          %1297 = vmatprep.subr.mxu0 0.0
          %1298 = vmatpush1.msra.mxu0 0.0
          %1299 = vmatprep.subr.mxu0 0.0
          %1300 = vmatpush1.msra.mxu0 0.0
          %1301 = vmatprep.subr.mxu0 0.0
          %1302 = vmatpush1.msra.mxu0 0.0
          %1303 = vmatprep.subr.mxu0 0.0
          %1304 = vmatpush1.msra.mxu0 %v1267
          %1305 = vmatprep.subr.mxu0 0.0
          %1306 = vmatpush2.msra.mxu0 0.0
          %1307 = vmatprep.subr.mxu0 0.0
          %1308 = vmatpush2.msra.mxu0 0.0
          %1309 = vmatprep.subr.mxu0 0.0
          %1310 = vmatpush2.msra.mxu0 0.0
          %1311 = vmatprep.subr.mxu0 0.0
          %1312 = vmatpush2.msra.mxu0 0.0
          %1313 = vmatprep.subr.mxu0 0.0
          %1314 = vmatpush2.msra.mxu0 0.0
          %1315 = vmatprep.subr.mxu0 0.0
          %1316 = vmatpush2.msra.mxu0 0.0
          %1317 = vmatprep.subr.mxu0 0.0
          %1318 = vmatpush2.msra.mxu0 0.0
          %1319 = vmatprep.subr.mxu0 0.0
          %1320 = vmatpush2.msra.mxu0 0.0
          %1321 = vmatprep.subr.mxu0 0.0
          %1322 = vmatpush2.msra.mxu0 0.0
          %1323 = vmatprep.subr.mxu0 0.0
          %1324 = vmatpush2.msra.mxu0 0.0
          %1325 = vmatprep.subr.mxu0 0.0
          %1326 = vmatpush2.msra.mxu0 0.0
          %1327 = vmatprep.subr.mxu0 0.0
          %1328 = vmatpush2.msra.mxu0 0.0
          %1329 = vmatprep.subr.mxu0 0.0
          %1330 = vmatpush2.msra.mxu0 0.0
          %1331 = vmatprep.subr.mxu0 0.0
          %1332 = vmatpush2.msra.mxu0 0.0
          %1333 = vmatprep.subr.mxu0 0.0
          %1334 = vmatpush2.msra.mxu0 0.0
          %1335 = vmatprep.subr.mxu0 0.0
          %1336 = vmatpush2.msra.mxu0 0.0
          %1337 = vmatprep.mubr.f32.mxu0 0.0
          %1338 = vmatmul.mubr.f32.gmra.mxu0 %v1271
          %v1339 = vpop.f32.mrf.mxu0
          %v1340 = vadd.f32 %v1268, %v1339
          %v1341 = vpop.f32.mrf.mxu0
          %1342 = vdwg.mxu0
          %v1343 = vmul.f32 %v1340, 0.5
          %v1344 = vtanh.pop %v1343
          %v1345 = vadd.f32 %v1344, 1.0
          %v1346 = vmul.f32 %v1345, 0.5
          %v1347 = vmul.f32 %v1187, %v1346
          %v1348 = vld [vmem:[#allocation11] sm:$0xff]
          %v1349 = vld [vmem:[#allocation11 + $0x8] sm:$0xff]
          %v1350 = vld [vmem:[#allocation11 + $0x10] sm:$0xff]
          %v1351 = vld [vmem:[#allocation11 + $0x18] sm:$0xff]
          %v1352 = vld [vmem:[#allocation11 + $0x20] sm:$0xff]
          %v1353 = vld [vmem:[#allocation11 + $0x28] sm:$0xff]
          %v1354 = vld [vmem:[#allocation11 + $0x30] sm:$0xff]
          %v1355 = vld [vmem:[#allocation11 + $0x38] sm:$0xff]
          %v1356 = vld [vmem:[#allocation11 + $0x40] sm:$0xff]
          %v1357 = vld [vmem:[#allocation11 + $0x48] sm:$0xff]
          %v1358 = vld [vmem:[#allocation11 + $0x50] sm:$0xff]
          %v1359 = vld [vmem:[#allocation11 + $0x58] sm:$0xff]
          %v1360 = vld [vmem:[#allocation11 + $0x60] sm:$0xff]
          %v1361 = vld [vmem:[#allocation11 + $0x68] sm:$0xff]
          %v1362 = vld [vmem:[#allocation11 + $0x70] sm:$0xff]
          %v1363 = vld [vmem:[#allocation11 + $0x78] sm:$0xff]
          %v1364 = vld [vmem:[%s10] sm:$0xf]
          %v1366 = vlaneseq
          %v1367 = vshrl.u32 %v1366, 7
          %v1368 = vsub.s32 0, %v1367
          %v1369 = vrot.slane %v1364, %v1368
          %v1370 = vlaneseq
          %v1371 = vshrl.u32 %v1370, 7
          %v1372 = vsub.s32 1, %v1371
          %v1373 = vrot.slane %v1364, %v1372
          %v1374 = vlaneseq
          %v1375 = vshrl.u32 %v1374, 7
          %v1376 = vsub.s32 2, %v1375
          %v1377 = vrot.slane %v1364, %v1376
          %v1378 = vlaneseq
          %v1379 = vshrl.u32 %v1378, 7
          %v1380 = vsub.s32 3, %v1379
          %v1381 = vrot.slane %v1364, %v1380
          %v1387 = vsel %vm1028, %v1347, 0
          %1389 = vmatprep.subr.mxu0 0.0
          %1390 = vmatpush1.msra.mxu0 0.0
          %1391 = vmatprep.subr.mxu0 0.0
          %1392 = vmatpush1.msra.mxu0 0.0
          %1393 = vmatprep.subr.mxu0 0.0
          %1394 = vmatpush1.msra.mxu0 0.0
          %1395 = vmatprep.subr.mxu0 0.0
          %1396 = vmatpush1.msra.mxu0 0.0
          %1397 = vmatprep.subr.mxu0 0.0
          %1398 = vmatpush1.msra.mxu0 0.0
          %1399 = vmatprep.subr.mxu0 0.0
          %1400 = vmatpush1.msra.mxu0 0.0
          %1401 = vmatprep.subr.mxu0 0.0
          %1402 = vmatpush1.msra.mxu0 0.0
          %1403 = vmatprep.subr.mxu0 0.0
          %1404 = vmatpush1.msra.mxu0 0.0
          %1405 = vmatprep.subr.mxu0 0.0
          %1406 = vmatpush1.msra.mxu0 0.0
          %1407 = vmatprep.subr.mxu0 0.0
          %1408 = vmatpush1.msra.mxu0 0.0
          %1409 = vmatprep.subr.mxu0 0.0
          %1410 = vmatpush1.msra.mxu0 0.0
          %1411 = vmatprep.subr.mxu0 0.0
          %1412 = vmatpush1.msra.mxu0 0.0
          %1413 = vmatprep.subr.mxu0 %v1361
          %1414 = vmatpush1.msra.mxu0 %v1360
          %1415 = vmatprep.subr.mxu0 %v1357
          %1416 = vmatpush1.msra.mxu0 %v1356
          %1417 = vmatprep.subr.mxu0 %v1353
          %1418 = vmatpush1.msra.mxu0 %v1352
          %1419 = vmatprep.subr.mxu0 %v1349
          %1420 = vmatpush1.msra.mxu0 %v1348
          %1421 = vmatprep.subr.mxu0 0.0
          %1422 = vmatpush2.msra.mxu0 0.0
          %1423 = vmatprep.subr.mxu0 0.0
          %1424 = vmatpush2.msra.mxu0 0.0
          %1425 = vmatprep.subr.mxu0 0.0
          %1426 = vmatpush2.msra.mxu0 0.0
          %1427 = vmatprep.subr.mxu0 0.0
          %1428 = vmatpush2.msra.mxu0 0.0
          %1429 = vmatprep.subr.mxu0 0.0
          %1430 = vmatpush2.msra.mxu0 0.0
          %1431 = vmatprep.subr.mxu0 0.0
          %1432 = vmatpush2.msra.mxu0 0.0
          %1433 = vmatprep.subr.mxu0 0.0
          %1434 = vmatpush2.msra.mxu0 0.0
          %1435 = vmatprep.subr.mxu0 0.0
          %1436 = vmatpush2.msra.mxu0 0.0
          %1437 = vmatprep.subr.mxu0 0.0
          %1438 = vmatpush2.msra.mxu0 0.0
          %1439 = vmatprep.subr.mxu0 0.0
          %1440 = vmatpush2.msra.mxu0 0.0
          %1441 = vmatprep.subr.mxu0 0.0
          %1442 = vmatpush2.msra.mxu0 0.0
          %1443 = vmatprep.subr.mxu0 0.0
          %1444 = vmatpush2.msra.mxu0 0.0
          %1445 = vmatprep.subr.mxu0 0.0
          %1446 = vmatpush2.msra.mxu0 0.0
          %1447 = vmatprep.subr.mxu0 0.0
          %1448 = vmatpush2.msra.mxu0 0.0
          %1449 = vmatprep.subr.mxu0 0.0
          %1450 = vmatpush2.msra.mxu0 0.0
          %1451 = vmatprep.subr.mxu0 0.0
          %1452 = vmatpush2.msra.mxu0 0.0
          %1453 = vmatprep.mubr.f32.mxu0 0.0
          %1454 = vmatmul.mubr.f32.gmra.mxu0 %v1387
          %v1455 = vpop.f32.mrf.mxu0
          %v1456 = vadd.f32 %v1369, %v1455
          %v1457 = vpop.f32.mrf.mxu0
          %v1458 = vadd.f32 %v1373, %v1457
          %1459 = vdwg.mxu0
          %1460 = vmatprep.subr.mxu0 0.0
          %1461 = vmatpush1.msra.mxu0 0.0
          %1462 = vmatprep.subr.mxu0 0.0
          %1463 = vmatpush1.msra.mxu0 0.0
          %1464 = vmatprep.subr.mxu0 0.0
          %1465 = vmatpush1.msra.mxu0 0.0
          %1466 = vmatprep.subr.mxu0 0.0
          %1467 = vmatpush1.msra.mxu0 0.0
          %1468 = vmatprep.subr.mxu0 0.0
          %1469 = vmatpush1.msra.mxu0 0.0
          %1470 = vmatprep.subr.mxu0 0.0
          %1471 = vmatpush1.msra.mxu0 0.0
          %1472 = vmatprep.subr.mxu0 0.0
          %1473 = vmatpush1.msra.mxu0 0.0
          %1474 = vmatprep.subr.mxu0 0.0
          %1475 = vmatpush1.msra.mxu0 0.0
          %1476 = vmatprep.subr.mxu0 0.0
          %1477 = vmatpush1.msra.mxu0 0.0
          %1478 = vmatprep.subr.mxu0 0.0
          %1479 = vmatpush1.msra.mxu0 0.0
          %1480 = vmatprep.subr.mxu0 0.0
          %1481 = vmatpush1.msra.mxu0 0.0
          %1482 = vmatprep.subr.mxu0 0.0
          %1483 = vmatpush1.msra.mxu0 0.0
          %1484 = vmatprep.subr.mxu0 %v1363
          %1485 = vmatpush1.msra.mxu0 %v1362
          %1486 = vmatprep.subr.mxu0 %v1359
          %1487 = vmatpush1.msra.mxu0 %v1358
          %1488 = vmatprep.subr.mxu0 %v1355
          %1489 = vmatpush1.msra.mxu0 %v1354
          %1490 = vmatprep.subr.mxu0 %v1351
          %1491 = vmatpush1.msra.mxu0 %v1350
          %1492 = vmatprep.subr.mxu0 0.0
          %1493 = vmatpush2.msra.mxu0 0.0
          %1494 = vmatprep.subr.mxu0 0.0
          %1495 = vmatpush2.msra.mxu0 0.0
          %1496 = vmatprep.subr.mxu0 0.0
          %1497 = vmatpush2.msra.mxu0 0.0
          %1498 = vmatprep.subr.mxu0 0.0
          %1499 = vmatpush2.msra.mxu0 0.0
          %1500 = vmatprep.subr.mxu0 0.0
          %1501 = vmatpush2.msra.mxu0 0.0
          %1502 = vmatprep.subr.mxu0 0.0
          %1503 = vmatpush2.msra.mxu0 0.0
          %1504 = vmatprep.subr.mxu0 0.0
          %1505 = vmatpush2.msra.mxu0 0.0
          %1506 = vmatprep.subr.mxu0 0.0
          %1507 = vmatpush2.msra.mxu0 0.0
          %1508 = vmatprep.subr.mxu0 0.0
          %1509 = vmatpush2.msra.mxu0 0.0
          %1510 = vmatprep.subr.mxu0 0.0
          %1511 = vmatpush2.msra.mxu0 0.0
          %1512 = vmatprep.subr.mxu0 0.0
          %1513 = vmatpush2.msra.mxu0 0.0
          %1514 = vmatprep.subr.mxu0 0.0
          %1515 = vmatpush2.msra.mxu0 0.0
          %1516 = vmatprep.subr.mxu0 0.0
          %1517 = vmatpush2.msra.mxu0 0.0
          %1518 = vmatprep.subr.mxu0 0.0
          %1519 = vmatpush2.msra.mxu0 0.0
          %1520 = vmatprep.subr.mxu0 0.0
          %1521 = vmatpush2.msra.mxu0 0.0
          %1522 = vmatprep.subr.mxu0 0.0
          %1523 = vmatpush2.msra.mxu0 0.0
          %1524 = vmatprep.mubr.f32.mxu0 0.0
          %1525 = vmatmul.mubr.f32.gmra.mxu0 %v1387
          %v1526 = vpop.f32.mrf.mxu0
          %v1527 = vadd.f32 %v1377, %v1526
          %v1528 = vpop.f32.mrf.mxu0
          %v1529 = vadd.f32 %v1381, %v1528
          %1530 = vdwg.mxu0
          %v1531 = vmax.f32 %v1456, 0.0
          %v1532 = vmax.f32 %v1458, 0.0
          %v1533 = vmax.f32 %v1527, 0.0
          %v1534 = vmax.f32 %v1529, 0.0
          %v1535 = vld [vmem:[#allocation12] sm:$0xff]
          %v1536 = vld [vmem:[#allocation12 + $0x8] sm:$0xff]
          %v1537 = vld [vmem:[#allocation12 + $0x10] sm:$0xff]
          %v1538 = vld [vmem:[#allocation12 + $0x18] sm:$0xff]
          %v1539 = vld [vmem:[#allocation12 + $0x20] sm:$0xff]
          %v1540 = vld [vmem:[#allocation12 + $0x28] sm:$0xff]
          %v1541 = vld [vmem:[#allocation12 + $0x30] sm:$0xff]
          %v1542 = vld [vmem:[#allocation12 + $0x38] sm:$0xff]
          %v1543 = vld [vmem:[#allocation12 + $0x40] sm:$0xff]
          %v1544 = vld [vmem:[#allocation12 + $0x48] sm:$0xff]
          %v1545 = vld [vmem:[#allocation12 + $0x50] sm:$0xff]
          %v1546 = vld [vmem:[#allocation12 + $0x58] sm:$0xff]
          %v1547 = vld [vmem:[#allocation12 + $0x60] sm:$0xff]
          %v1548 = vld [vmem:[#allocation12 + $0x68] sm:$0xff]
          %v1549 = vld [vmem:[#allocation12 + $0x70] sm:$0xff]
          %v1550 = vld [vmem:[#allocation12 + $0x78] sm:$0xff]
          %v1551 = vld [vmem:[#allocation12 + $0x80] sm:$0xff]
          %v1552 = vld [vmem:[#allocation12 + $0x88] sm:$0xff]
          %v1553 = vld [vmem:[#allocation12 + $0x90] sm:$0xff]
          %v1554 = vld [vmem:[#allocation12 + $0x98] sm:$0xff]
          %v1555 = vld [vmem:[#allocation12 + $0xa0] sm:$0xff]
          %v1556 = vld [vmem:[#allocation12 + $0xa8] sm:$0xff]
          %v1557 = vld [vmem:[#allocation12 + $0xb0] sm:$0xff]
          %v1558 = vld [vmem:[#allocation12 + $0xb8] sm:$0xff]
          %v1559 = vld [vmem:[#allocation12 + $0xc0] sm:$0xff]
          %v1560 = vld [vmem:[#allocation12 + $0xc8] sm:$0xff]
          %v1561 = vld [vmem:[#allocation12 + $0xd0] sm:$0xff]
          %v1562 = vld [vmem:[#allocation12 + $0xd8] sm:$0xff]
          %v1563 = vld [vmem:[#allocation12 + $0xe0] sm:$0xff]
          %v1564 = vld [vmem:[#allocation12 + $0xe8] sm:$0xff]
          %v1565 = vld [vmem:[#allocation12 + $0xf0] sm:$0xff]
          %v1566 = vld [vmem:[#allocation12 + $0xf8] sm:$0xff]
          %v1567 = vld [vmem:[#allocation12 + $0x100] sm:$0xff]
          %v1568 = vld [vmem:[#allocation12 + $0x108] sm:$0xff]
          %v1569 = vld [vmem:[#allocation12 + $0x110] sm:$0xff]
          %v1570 = vld [vmem:[#allocation12 + $0x118] sm:$0xff]
          %v1571 = vld [vmem:[#allocation12 + $0x120] sm:$0xff]
          %v1572 = vld [vmem:[#allocation12 + $0x128] sm:$0xff]
          %v1573 = vld [vmem:[#allocation12 + $0x130] sm:$0xff]
          %v1574 = vld [vmem:[#allocation12 + $0x138] sm:$0xff]
          %v1575 = vld [vmem:[#allocation12 + $0x140] sm:$0xff]
          %v1576 = vld [vmem:[#allocation12 + $0x148] sm:$0xff]
          %v1577 = vld [vmem:[#allocation12 + $0x150] sm:$0xff]
          %v1578 = vld [vmem:[#allocation12 + $0x158] sm:$0xff]
          %v1579 = vld [vmem:[#allocation12 + $0x160] sm:$0xff]
          %v1580 = vld [vmem:[#allocation12 + $0x168] sm:$0xff]
          %v1581 = vld [vmem:[#allocation12 + $0x170] sm:$0xff]
          %v1582 = vld [vmem:[#allocation12 + $0x178] sm:$0xff]
          %v1583 = vld [vmem:[#allocation12 + $0x180] sm:$0xff]
          %v1584 = vld [vmem:[#allocation12 + $0x188] sm:$0xff]
          %v1585 = vld [vmem:[#allocation12 + $0x190] sm:$0xff]
          %v1586 = vld [vmem:[#allocation12 + $0x198] sm:$0xff]
          %v1587 = vld [vmem:[#allocation12 + $0x1a0] sm:$0xff]
          %v1588 = vld [vmem:[#allocation12 + $0x1a8] sm:$0xff]
          %v1589 = vld [vmem:[#allocation12 + $0x1b0] sm:$0xff]
          %v1590 = vld [vmem:[#allocation12 + $0x1b8] sm:$0xff]
          %v1591 = vld [vmem:[#allocation12 + $0x1c0] sm:$0xff]
          %v1592 = vld [vmem:[#allocation12 + $0x1c8] sm:$0xff]
          %v1593 = vld [vmem:[#allocation12 + $0x1d0] sm:$0xff]
          %v1594 = vld [vmem:[#allocation12 + $0x1d8] sm:$0xff]
          %v1595 = vld [vmem:[#allocation12 + $0x1e0] sm:$0xff]
          %v1596 = vld [vmem:[#allocation12 + $0x1e8] sm:$0xff]
          %v1597 = vld [vmem:[#allocation12 + $0x1f0] sm:$0xff]
          %v1598 = vld [vmem:[#allocation12 + $0x1f8] sm:$0xff]
          %v1599 = vld [vmem:[#allocation12 + $0x200] sm:$0xff]
          %v1600 = vld [vmem:[#allocation12 + $0x208] sm:$0xff]
          %v1601 = vld [vmem:[#allocation12 + $0x210] sm:$0xff]
          %v1602 = vld [vmem:[#allocation12 + $0x218] sm:$0xff]
          %v1603 = vld [vmem:[#allocation12 + $0x220] sm:$0xff]
          %v1604 = vld [vmem:[#allocation12 + $0x228] sm:$0xff]
          %v1605 = vld [vmem:[#allocation12 + $0x230] sm:$0xff]
          %v1606 = vld [vmem:[#allocation12 + $0x238] sm:$0xff]
          %v1607 = vld [vmem:[#allocation12 + $0x240] sm:$0xff]
          %v1608 = vld [vmem:[#allocation12 + $0x248] sm:$0xff]
          %v1609 = vld [vmem:[#allocation12 + $0x250] sm:$0xff]
          %v1610 = vld [vmem:[#allocation12 + $0x258] sm:$0xff]
          %v1611 = vld [vmem:[#allocation12 + $0x260] sm:$0xff]
          %v1612 = vld [vmem:[#allocation12 + $0x268] sm:$0xff]
          %v1613 = vld [vmem:[#allocation12 + $0x270] sm:$0xff]
          %v1614 = vld [vmem:[#allocation12 + $0x278] sm:$0xff]
          %v1615 = vld [vmem:[#allocation12 + $0x280] sm:$0xff]
          %v1616 = vld [vmem:[#allocation12 + $0x288] sm:$0xff]
          %v1617 = vld [vmem:[#allocation12 + $0x290] sm:$0xff]
          %v1618 = vld [vmem:[#allocation12 + $0x298] sm:$0xff]
          %v1619 = vld [vmem:[#allocation12 + $0x2a0] sm:$0xff]
          %v1620 = vld [vmem:[#allocation12 + $0x2a8] sm:$0xff]
          %v1621 = vld [vmem:[#allocation12 + $0x2b0] sm:$0xff]
          %v1622 = vld [vmem:[#allocation12 + $0x2b8] sm:$0xff]
          %v1623 = vld [vmem:[#allocation12 + $0x2c0] sm:$0xff]
          %v1624 = vld [vmem:[#allocation12 + $0x2c8] sm:$0xff]
          %v1625 = vld [vmem:[#allocation12 + $0x2d0] sm:$0xff]
          %v1626 = vld [vmem:[#allocation12 + $0x2d8] sm:$0xff]
          %v1627 = vld [vmem:[#allocation12 + $0x2e0] sm:$0xff]
          %v1628 = vld [vmem:[#allocation12 + $0x2e8] sm:$0xff]
          %v1629 = vld [vmem:[#allocation12 + $0x2f0] sm:$0xff]
          %v1630 = vld [vmem:[#allocation12 + $0x2f8] sm:$0xff]
          %v1631 = vld [vmem:[#allocation12 + $0x300] sm:$0xff]
          %v1632 = vld [vmem:[#allocation12 + $0x308] sm:$0xff]
          %v1633 = vld [vmem:[#allocation12 + $0x310] sm:$0xff]
          %v1634 = vld [vmem:[#allocation12 + $0x318] sm:$0xff]
          %v1635 = vld [vmem:[#allocation12 + $0x320] sm:$0xff]
          %v1636 = vld [vmem:[#allocation12 + $0x328] sm:$0xff]
          %v1637 = vld [vmem:[#allocation12 + $0x330] sm:$0xff]
          %v1638 = vld [vmem:[#allocation12 + $0x338] sm:$0xff]
          %v1639 = vld [vmem:[#allocation12 + $0x340] sm:$0xff]
          %v1640 = vld [vmem:[#allocation12 + $0x348] sm:$0xff]
          %v1641 = vld [vmem:[#allocation12 + $0x350] sm:$0xff]
          %v1642 = vld [vmem:[#allocation12 + $0x358] sm:$0xff]
          %v1643 = vld [vmem:[#allocation12 + $0x360] sm:$0xff]
          %v1644 = vld [vmem:[#allocation12 + $0x368] sm:$0xff]
          %v1645 = vld [vmem:[#allocation12 + $0x370] sm:$0xff]
          %v1646 = vld [vmem:[#allocation12 + $0x378] sm:$0xff]
          %v1647 = vld [vmem:[#allocation12 + $0x380] sm:$0xff]
          %v1648 = vld [vmem:[#allocation12 + $0x388] sm:$0xff]
          %v1649 = vld [vmem:[#allocation12 + $0x390] sm:$0xff]
          %v1650 = vld [vmem:[#allocation12 + $0x398] sm:$0xff]
          %v1651 = vld [vmem:[#allocation12 + $0x3a0] sm:$0xff]
          %v1652 = vld [vmem:[#allocation12 + $0x3a8] sm:$0xff]
          %v1653 = vld [vmem:[#allocation12 + $0x3b0] sm:$0xff]
          %v1654 = vld [vmem:[#allocation12 + $0x3b8] sm:$0xff]
          %v1655 = vld [vmem:[#allocation12 + $0x3c0] sm:$0xff]
          %v1656 = vld [vmem:[#allocation12 + $0x3c8] sm:$0xff]
          %v1657 = vld [vmem:[#allocation12 + $0x3d0] sm:$0xff]
          %v1658 = vld [vmem:[#allocation12 + $0x3d8] sm:$0xff]
          %v1659 = vld [vmem:[#allocation12 + $0x3e0] sm:$0xff]
          %v1660 = vld [vmem:[#allocation12 + $0x3e8] sm:$0xff]
          %v1661 = vld [vmem:[#allocation12 + $0x3f0] sm:$0xff]
          %v1662 = vld [vmem:[#allocation12 + $0x3f8] sm:$0xff]
          %v1663 = vld [vmem:[%s12] sm:$0x3]
          %v1665 = vlaneseq
          %v1666 = vshrl.u32 %v1665, 7
          %v1667 = vsub.s32 0, %v1666
          %v1668 = vrot.slane %v1663, %v1667
          %v1669 = vlaneseq
          %v1670 = vshrl.u32 %v1669, 7
          %v1671 = vsub.s32 1, %v1670
          %v1672 = vrot.slane %v1663, %v1671
          %1675 = vmatprep.subr.mxu0 %v1566
          %1676 = vmatpush1.msra.mxu0 %v1565
          %1677 = vmatprep.subr.mxu0 %v1564
          %1678 = vmatpush1.msra.mxu0 %v1563
          %1679 = vmatprep.subr.mxu0 %v1562
          %1680 = vmatpush1.msra.mxu0 %v1561
          %1681 = vmatprep.subr.mxu0 %v1560
          %1682 = vmatpush1.msra.mxu0 %v1559
          %1683 = vmatprep.subr.mxu0 %v1558
          %1684 = vmatpush1.msra.mxu0 %v1557
          %1685 = vmatprep.subr.mxu0 %v1556
          %1686 = vmatpush1.msra.mxu0 %v1555
          %1687 = vmatprep.subr.mxu0 %v1554
          %1688 = vmatpush1.msra.mxu0 %v1553
          %1689 = vmatprep.subr.mxu0 %v1552
          %1690 = vmatpush1.msra.mxu0 %v1551
          %1691 = vmatprep.subr.mxu0 %v1550
          %1692 = vmatpush1.msra.mxu0 %v1549
          %1693 = vmatprep.subr.mxu0 %v1548
          %1694 = vmatpush1.msra.mxu0 %v1547
          %1695 = vmatprep.subr.mxu0 %v1546
          %1696 = vmatpush1.msra.mxu0 %v1545
          %1697 = vmatprep.subr.mxu0 %v1544
          %1698 = vmatpush1.msra.mxu0 %v1543
          %1699 = vmatprep.subr.mxu0 %v1542
          %1700 = vmatpush1.msra.mxu0 %v1541
          %1701 = vmatprep.subr.mxu0 %v1540
          %1702 = vmatpush1.msra.mxu0 %v1539
          %1703 = vmatprep.subr.mxu0 %v1538
          %1704 = vmatpush1.msra.mxu0 %v1537
          %1705 = vmatprep.subr.mxu0 %v1536
          %1706 = vmatpush1.msra.mxu0 %v1535
          %1707 = vmatprep.subr.mxu0 %v1598
          %1708 = vmatpush2.msra.mxu0 %v1597
          %1709 = vmatprep.subr.mxu0 %v1596
          %1710 = vmatpush2.msra.mxu0 %v1595
          %1711 = vmatprep.subr.mxu0 %v1594
          %1712 = vmatpush2.msra.mxu0 %v1593
          %1713 = vmatprep.subr.mxu0 %v1592
          %1714 = vmatpush2.msra.mxu0 %v1591
          %1715 = vmatprep.subr.mxu0 %v1590
          %1716 = vmatpush2.msra.mxu0 %v1589
          %1717 = vmatprep.subr.mxu0 %v1588
          %1718 = vmatpush2.msra.mxu0 %v1587
          %1719 = vmatprep.subr.mxu0 %v1586
          %1720 = vmatpush2.msra.mxu0 %v1585
          %1721 = vmatprep.subr.mxu0 %v1584
          %1722 = vmatpush2.msra.mxu0 %v1583
          %1723 = vmatprep.subr.mxu0 %v1582
          %1724 = vmatpush2.msra.mxu0 %v1581
          %1725 = vmatprep.subr.mxu0 %v1580
          %1726 = vmatpush2.msra.mxu0 %v1579
          %1727 = vmatprep.subr.mxu0 %v1578
          %1728 = vmatpush2.msra.mxu0 %v1577
          %1729 = vmatprep.subr.mxu0 %v1576
          %1730 = vmatpush2.msra.mxu0 %v1575
          %1731 = vmatprep.subr.mxu0 %v1574
          %1732 = vmatpush2.msra.mxu0 %v1573
          %1733 = vmatprep.subr.mxu0 %v1572
          %1734 = vmatpush2.msra.mxu0 %v1571
          %1735 = vmatprep.subr.mxu0 %v1570
          %1736 = vmatpush2.msra.mxu0 %v1569
          %1737 = vmatprep.subr.mxu0 %v1568
          %1738 = vmatpush2.msra.mxu0 %v1567
          %1739 = vmatprep.mubr.f32.mxu0 %v1532
          %1740 = vmatmul.mubr.f32.gmra.mxu0 %v1531
          %v1741 = vpop.f32.mrf.mxu0
          %v1742 = vadd.f32 %v1668, %v1741
          %v1743 = vpop.f32.mrf.mxu0
          %v1744 = vadd.f32 %v1672, %v1743
          %1745 = vdwg.mxu0
          %1746 = vmatprep.subr.mxu0 %v1630
          %1747 = vmatpush1.msra.mxu0 %v1629
          %1748 = vmatprep.subr.mxu0 %v1628
          %1749 = vmatpush1.msra.mxu0 %v1627
          %1750 = vmatprep.subr.mxu0 %v1626
          %1751 = vmatpush1.msra.mxu0 %v1625
          %1752 = vmatprep.subr.mxu0 %v1624
          %1753 = vmatpush1.msra.mxu0 %v1623
          %1754 = vmatprep.subr.mxu0 %v1622
          %1755 = vmatpush1.msra.mxu0 %v1621
          %1756 = vmatprep.subr.mxu0 %v1620
          %1757 = vmatpush1.msra.mxu0 %v1619
          %1758 = vmatprep.subr.mxu0 %v1618
          %1759 = vmatpush1.msra.mxu0 %v1617
          %1760 = vmatprep.subr.mxu0 %v1616
          %1761 = vmatpush1.msra.mxu0 %v1615
          %1762 = vmatprep.subr.mxu0 %v1614
          %1763 = vmatpush1.msra.mxu0 %v1613
          %1764 = vmatprep.subr.mxu0 %v1612
          %1765 = vmatpush1.msra.mxu0 %v1611
          %1766 = vmatprep.subr.mxu0 %v1610
          %1767 = vmatpush1.msra.mxu0 %v1609
          %1768 = vmatprep.subr.mxu0 %v1608
          %1769 = vmatpush1.msra.mxu0 %v1607
          %1770 = vmatprep.subr.mxu0 %v1606
          %1771 = vmatpush1.msra.mxu0 %v1605
          %1772 = vmatprep.subr.mxu0 %v1604
          %1773 = vmatpush1.msra.mxu0 %v1603
          %1774 = vmatprep.subr.mxu0 %v1602
          %1775 = vmatpush1.msra.mxu0 %v1601
          %1776 = vmatprep.subr.mxu0 %v1600
          %1777 = vmatpush1.msra.mxu0 %v1599
          %1778 = vmatprep.subr.mxu0 %v1662
          %1779 = vmatpush2.msra.mxu0 %v1661
          %1780 = vmatprep.subr.mxu0 %v1660
          %1781 = vmatpush2.msra.mxu0 %v1659
          %1782 = vmatprep.subr.mxu0 %v1658
          %1783 = vmatpush2.msra.mxu0 %v1657
          %1784 = vmatprep.subr.mxu0 %v1656
          %1785 = vmatpush2.msra.mxu0 %v1655
          %1786 = vmatprep.subr.mxu0 %v1654
          %1787 = vmatpush2.msra.mxu0 %v1653
          %1788 = vmatprep.subr.mxu0 %v1652
          %1789 = vmatpush2.msra.mxu0 %v1651
          %1790 = vmatprep.subr.mxu0 %v1650
          %1791 = vmatpush2.msra.mxu0 %v1649
          %1792 = vmatprep.subr.mxu0 %v1648
          %1793 = vmatpush2.msra.mxu0 %v1647
          %1794 = vmatprep.subr.mxu0 %v1646
          %1795 = vmatpush2.msra.mxu0 %v1645
          %1796 = vmatprep.subr.mxu0 %v1644
          %1797 = vmatpush2.msra.mxu0 %v1643
          %1798 = vmatprep.subr.mxu0 %v1642
          %1799 = vmatpush2.msra.mxu0 %v1641
          %1800 = vmatprep.subr.mxu0 %v1640
          %1801 = vmatpush2.msra.mxu0 %v1639
          %1802 = vmatprep.subr.mxu0 %v1638
          %1803 = vmatpush2.msra.mxu0 %v1637
          %1804 = vmatprep.subr.mxu0 %v1636
          %1805 = vmatpush2.msra.mxu0 %v1635
          %1806 = vmatprep.subr.mxu0 %v1634
          %1807 = vmatpush2.msra.mxu0 %v1633
          %1808 = vmatprep.subr.mxu0 %v1632
          %1809 = vmatpush2.msra.mxu0 %v1631
          %1810 = vmatprep.mubr.f32.mxu0 %v1534
          %1811 = vmatmul.mubr.f32.gmra.mxu0 %v1533
          %v1812 = vpop.f32.mrf.mxu0
          %v1813 = vadd.f32 %v1742, %v1812
          %v1814 = vpop.f32.mrf.mxu0
          %v1815 = vadd.f32 %v1744, %v1814
          %1816 = vdwg.mxu0
          %v1817 = vmax.f32 %v1813, 0.0
          %v1818 = vmax.f32 %v1815, 0.0
          %v1819 = vld [vmem:[#allocation14] sm:$0xff]
          %v1820 = vld [vmem:[#allocation14 + $0x8] sm:$0xff]
          %v1821 = vld [vmem:[#allocation14 + $0x10] sm:$0xff]
          %v1822 = vld [vmem:[#allocation14 + $0x18] sm:$0xff]
          %v1823 = vld [vmem:[#allocation14 + $0x20] sm:$0xff]
          %v1824 = vld [vmem:[#allocation14 + $0x28] sm:$0xff]
          %v1825 = vld [vmem:[#allocation14 + $0x30] sm:$0xff]
          %v1826 = vld [vmem:[#allocation14 + $0x38] sm:$0xff]
          %v1827 = vld [vmem:[#allocation14 + $0x40] sm:$0xff]
          %v1828 = vld [vmem:[#allocation14 + $0x48] sm:$0xff]
          %v1829 = vld [vmem:[#allocation14 + $0x50] sm:$0xff]
          %v1830 = vld [vmem:[#allocation14 + $0x58] sm:$0xff]
          %v1831 = vld [vmem:[#allocation14 + $0x60] sm:$0xff]
          %v1832 = vld [vmem:[#allocation14 + $0x68] sm:$0xff]
          %v1833 = vld [vmem:[#allocation14 + $0x70] sm:$0xff]
          %v1834 = vld [vmem:[#allocation14 + $0x78] sm:$0xff]
          %v1835 = vld [vmem:[#allocation14 + $0x80] sm:$0xff]
          %v1836 = vld [vmem:[#allocation14 + $0x88] sm:$0xff]
          %v1837 = vld [vmem:[#allocation14 + $0x90] sm:$0xff]
          %v1838 = vld [vmem:[#allocation14 + $0x98] sm:$0xff]
          %v1839 = vld [vmem:[#allocation14 + $0xa0] sm:$0xff]
          %v1840 = vld [vmem:[#allocation14 + $0xa8] sm:$0xff]
          %v1841 = vld [vmem:[#allocation14 + $0xb0] sm:$0xff]
          %v1842 = vld [vmem:[#allocation14 + $0xb8] sm:$0xff]
          %v1843 = vld [vmem:[#allocation14 + $0xc0] sm:$0xff]
          %v1844 = vld [vmem:[#allocation14 + $0xc8] sm:$0xff]
          %v1845 = vld [vmem:[#allocation14 + $0xd0] sm:$0xff]
          %v1846 = vld [vmem:[#allocation14 + $0xd8] sm:$0xff]
          %v1847 = vld [vmem:[#allocation14 + $0xe0] sm:$0xff]
          %v1848 = vld [vmem:[#allocation14 + $0xe8] sm:$0xff]
          %v1849 = vld [vmem:[#allocation14 + $0xf0] sm:$0xff]
          %v1850 = vld [vmem:[#allocation14 + $0xf8] sm:$0xff]
          %v1851 = vld [vmem:[%s14] sm:$0x1]
          %1852 = vmatprep.subr.mxu0 0.0
          %1853 = vmatpush1.msra.mxu0 %v1834
          %1854 = vmatprep.subr.mxu0 0.0
          %1855 = vmatpush1.msra.mxu0 %v1833
          %1856 = vmatprep.subr.mxu0 0.0
          %1857 = vmatpush1.msra.mxu0 %v1832
          %1858 = vmatprep.subr.mxu0 0.0
          %1859 = vmatpush1.msra.mxu0 %v1831
          %1860 = vmatprep.subr.mxu0 0.0
          %1861 = vmatpush1.msra.mxu0 %v1830
          %1862 = vmatprep.subr.mxu0 0.0
          %1863 = vmatpush1.msra.mxu0 %v1829
          %1864 = vmatprep.subr.mxu0 0.0
          %1865 = vmatpush1.msra.mxu0 %v1828
          %1866 = vmatprep.subr.mxu0 0.0
          %1867 = vmatpush1.msra.mxu0 %v1827
          %1868 = vmatprep.subr.mxu0 0.0
          %1869 = vmatpush1.msra.mxu0 %v1826
          %1870 = vmatprep.subr.mxu0 0.0
          %1871 = vmatpush1.msra.mxu0 %v1825
          %1872 = vmatprep.subr.mxu0 0.0
          %1873 = vmatpush1.msra.mxu0 %v1824
          %1874 = vmatprep.subr.mxu0 0.0
          %1875 = vmatpush1.msra.mxu0 %v1823
          %1876 = vmatprep.subr.mxu0 0.0
          %1877 = vmatpush1.msra.mxu0 %v1822
          %1878 = vmatprep.subr.mxu0 0.0
          %1879 = vmatpush1.msra.mxu0 %v1821
          %1880 = vmatprep.subr.mxu0 0.0
          %1881 = vmatpush1.msra.mxu0 %v1820
          %1882 = vmatprep.subr.mxu0 0.0
          %1883 = vmatpush1.msra.mxu0 %v1819
          %1884 = vmatprep.subr.mxu0 0.0
          %1885 = vmatpush2.msra.mxu0 %v1850
          %1886 = vmatprep.subr.mxu0 0.0
          %1887 = vmatpush2.msra.mxu0 %v1849
          %1888 = vmatprep.subr.mxu0 0.0
          %1889 = vmatpush2.msra.mxu0 %v1848
          %1890 = vmatprep.subr.mxu0 0.0
          %1891 = vmatpush2.msra.mxu0 %v1847
          %1892 = vmatprep.subr.mxu0 0.0
          %1893 = vmatpush2.msra.mxu0 %v1846
          %1894 = vmatprep.subr.mxu0 0.0
          %1895 = vmatpush2.msra.mxu0 %v1845
          %1896 = vmatprep.subr.mxu0 0.0
          %1897 = vmatpush2.msra.mxu0 %v1844
          %1898 = vmatprep.subr.mxu0 0.0
          %1899 = vmatpush2.msra.mxu0 %v1843
          %1900 = vmatprep.subr.mxu0 0.0
          %1901 = vmatpush2.msra.mxu0 %v1842
          %1902 = vmatprep.subr.mxu0 0.0
          %1903 = vmatpush2.msra.mxu0 %v1841
          %1904 = vmatprep.subr.mxu0 0.0
          %1905 = vmatpush2.msra.mxu0 %v1840
          %1906 = vmatprep.subr.mxu0 0.0
          %1907 = vmatpush2.msra.mxu0 %v1839
          %1908 = vmatprep.subr.mxu0 0.0
          %1909 = vmatpush2.msra.mxu0 %v1838
          %1910 = vmatprep.subr.mxu0 0.0
          %1911 = vmatpush2.msra.mxu0 %v1837
          %1912 = vmatprep.subr.mxu0 0.0
          %1913 = vmatpush2.msra.mxu0 %v1836
          %1914 = vmatprep.subr.mxu0 0.0
          %1915 = vmatpush2.msra.mxu0 %v1835
          %1916 = vmatprep.mubr.f32.mxu0 %v1818
          %1917 = vmatmul.mubr.f32.gmra.mxu0 %v1817
          %v1918 = vpop.f32.mrf.mxu0
          %v1919 = vadd.f32 %v1851, %v1918
          %v1920 = vpop.f32.mrf.mxu0
          %1921 = vdwg.mxu0
          %1922 = vst [vmem:[%s600] sm:$0x1] %v1919
        $region116: #{tpu_custom_call.1} parent=79 // pred_fallthru
          _
        %s1923 = sand.u32 %s375, 1
        %s1924 = scalar_lea.sflag [#allocation5], %s1923
        %s1925 = sand.u32 %s375, 1
        %s1926 = scalar_lea.vmem [#allocation15], %s1925
        // Predicated region
        $region117: #{tpu_custom_call.1} parent=79 // pred_check
          %p1927 = pneg %p385
        $region118: #{tpu_custom_call.1} parent=79 // pred_check_branch
          %1929 = sbr.rel (%p1927) target = $region120
        $region119: #{tpu_custom_call.1} parent=79 // pred_region
          %s1931 = ssub.s32 16, 16
          %1932 = vsyncadd %s1924, %s1931
          %s1933 = smul.addr %s37, 16
          %s1934 = scalar_lea.hbm %s15, %s1933
          %s1936 = sshll.u32 %s1926, 4
          %s1937 = int_to_ptr.vmem [resolvable:$true] %s1936
          %1939 = dma.vmem_to_hbm [thread:$0]  %s1937, 16, %s1934, %s1924
        $region120: #{tpu_custom_call.1} parent=79 // pred_fallthru
          _
      $region80: #{tpu_custom_call.1} parent=5 // pred_fallthru
        _
      %p1940 = scmp.le.s32.totalorder 2, %s28
      // Predicated region
      $region121: #{tpu_custom_call.1} parent=5 // pred_check
        %p1941 = pneg %p1940
      $region122: #{tpu_custom_call.1} parent=5 // pred_check_branch
        %1943 = sbr.rel (%p1941) target = $region124
      $region123: #{tpu_custom_call.1} parent=5 // pred_region
        %s1944 = ssub.s32 %s28, 2
        // Predicated region
        $region125: #{tpu_custom_call.1} parent=123 // pred_check
          %p1945 = pneg %p391
        $region126: #{tpu_custom_call.1} parent=123 // pred_check_branch
          %1947 = sbr.rel (%p1945) target = $region128
        $region127: #{tpu_custom_call.1} parent=123 // pred_region
          %s1948 = sand.u32 %s376, 1
          %s1949 = scalar_lea.sflag [#allocation5], %s1948
          %s1950 = sand.u32 %s376, 1
          %s1951 = scalar_lea.vmem [#allocation15], %s1950
          %1952 = dma.done %s1949, 16
        $region128: #{tpu_custom_call.1} parent=123 // pred_fallthru
          _
      $region124: #{tpu_custom_call.1} parent=5 // pred_fallthru
        _
    $region6: #{tpu_custom_call.1} parent=1 // loop_footer
      %s32 = sadd.s32 1, %s28
    $region7: #{tpu_custom_call.1} parent=1 // loop_footer_branch
      %27 = sbr.rel target = $region3
    $region8: #{tpu_custom_call.1} parent=1 // loop_exit
      _
    %1953 = vsyncpa [#allocation4], 1
    %s1954 = scalar_lea.sflag [#allocation4], 1
    %1955 = vsyncpa %s1954, 1
    %1956 = vsyncpa [#allocation7], 1
    %1957 = vsyncpa [#allocation10], 1
    %1958 = vsyncpa [#allocation13], 1
    %1959 = vsyncpa [#allocation5], 1
    %s1960 = scalar_lea.sflag [#allocation5], 1
    %1961 = vsyncpa %s1960, 1

</llo_original>
